<compile_context>
chip_gen: v5e
topology: v5e:2x2
jax: 0.10.0
libtpu: 0.0.40
codegen_flags: <defaults>
</compile_context>

<pallas_src>
import numpy as np
import jax
import jax.numpy as jnp
from jax.experimental import pallas as pl
from jax.experimental.pallas import tpu as pltpu

# ---- STFT / Denoiser configuration (scaled-down, same structure as defaults) ----
FILT = 512                     # filter_length  (1024 in the real module)
N_OVERLAP = 4                  # n_overlap
HOP = FILT // N_OVERLAP        # hop_length = 128  (lane-dense)
WIN = FILT                     # win_length == filter_length
CUTOFF = FILT // 2 + 1         # number of rfft bins (257)
CPAD = ((CUTOFF + 127) // 128) * 128   # lane-padded spectral width (384)
RATIO = FILT // HOP            # frames overlapping one output hop block (4)
STRENGTH = 0.1
TINY = float(np.finfo(np.float32).tiny)  # smallest normal f32

B = 2                          # batch
NSAMP = 1024                   # audio samples (multiple of HOP)
NF = NSAMP // HOP + 1          # frames after reflect padding by FILT//2 each side (9)
NFP = ((NF + 7) // 8) * 8      # sublane-padded frames per batch element (16)
OUTLEN = (NF - 1) * HOP + FILT # conv_transpose1d output length = NSAMP + FILT (1536)
NB = OUTLEN // HOP             # hop-sized blocks in the (untrimmed) output (12)


# ------------------------------ parameter setup ------------------------------
def make_basis():
    """STFT module's forward/inverse bases (windowed Fourier / pinv), fused + padded."""
    fourier = np.fft.fft(np.eye(FILT))
    fb = np.vstack([np.real(fourier[:CUTOFF]), np.imag(fourier[:CUTOFF])])  # (2*CUTOFF, FILT)
    scale = FILT / HOP
    inv = np.linalg.pinv(scale * fb).T                                      # (2*CUTOFF, FILT)
    n = np.arange(FILT)
    window = 0.5 - 0.5 * np.cos(2.0 * np.pi * n / WIN)   # hann, fftbins=True, win==filt
    fwd = fb * window[None, :]
    inv = inv * window[None, :]

    # unfused f32 pieces (pure-JAX reference / bias construction)
    rT = jnp.asarray(fwd[:CUTOFF].T, jnp.float32)        # (FILT, CUTOFF)
    iT = jnp.asarray(fwd[CUTOFF:].T, jnp.float32)        # (FILT, CUTOFF)
    invr = jnp.asarray(inv[:CUTOFF], jnp.float32)        # (CUTOFF, FILT)
    invi = jnp.asarray(inv[CUTOFF:], jnp.float32)        # (CUTOFF, FILT)

    # fused, lane-padded, bf16 bases for the kernel (zero padding is inert)
    fwd_fused = np.zeros((FILT, 2 * CPAD), np.float32)
    fwd_fused[:, :CUTOFF] = fwd[:CUTOFF].T
    fwd_fused[:, CPAD:CPAD + CUTOFF] = fwd[CUTOFF:].T
    inv_fused = np.zeros((2 * CPAD, FILT), np.float32)
    inv_fused[:CUTOFF, :] = inv[:CUTOFF]
    inv_fused[CPAD:CPAD + CUTOFF, :] = inv[CUTOFF:]
    return (rT, iT, invr, invi,
            jnp.asarray(fwd_fused, jnp.bfloat16),
            jnp.asarray(inv_fused, jnp.bfloat16))


def make_corr(n_frames):
    """window_sumsquare correction: /window_sum where > tiny, then * FILT/HOP."""
    n = FILT + HOP * (n_frames - 1)
    win = (0.5 - 0.5 * np.cos(2.0 * np.pi * np.arange(WIN) / WIN)).astype(np.float32)
    win_sq = win ** 2                                    # pad_center is a no-op (WIN == FILT)
    wsum = np.zeros(n, dtype=np.float32)
    for i in range(n_frames):
        s = i * HOP
        wsum[s:min(n, s + FILT)] += win_sq[:max(0, min(FILT, n - s))]
    tiny = np.finfo(np.float32).tiny
    corr = np.where(wsum > tiny, (FILT / HOP) / wsum, FILT / HOP).astype(np.float32)
    return jnp.asarray(corr)                             # (OUTLEN,)


def make_ola():
    """Banded 0/1 overlap-add matrices: out_block[n] += frame[t] chunk j iff n == t + j."""
    ola = np.zeros((RATIO, NB, NFP), np.float32)
    for j in range(RATIO):
        for t in range(NF):                              # padded frames t >= NF excluded
            ola[j, t + j, t] = 1.0
    return jnp.asarray(ola)


def frame_audio(audio, n_frames):
    """Reflect-pad by FILT//2 and extract hop-strided windows (XLA glue)."""
    padded = jnp.pad(audio, ((0, 0), (FILT // 2, FILT // 2)), mode="reflect")
    idx = np.arange(n_frames)[:, None] * HOP + np.arange(FILT)[None, :]
    return padded[:, idx]                                # (B, n_frames, FILT)


def stft_magnitude(audio, rT, iT):
    """Plain-JAX STFT.transform magnitude (used only to build bias_spec)."""
    n_frames = audio.shape[1] // HOP + 1
    frames = frame_audio(audio, n_frames)
    hi = jax.lax.Precision.HIGHEST
    real = jnp.einsum("btf,fc->btc", frames, rT, precision=hi)
    imag = jnp.einsum("btf,fc->btc", frames, iT, precision=hi)
    return jnp.sqrt(real * real + imag * imag)           # (B, n_frames, CUTOFF)


# --------------------------------- the kernel ---------------------------------
def denoiser_kernel(frames_ref, fwd_ref, inv_ref, bias_ref, corr_ref, ola_ref,
                    out_ref, recon_ref):
    frames = frames_ref[0]                               # (NFP, FILT) bf16

    # fused forward STFT: one bf16 matmul gives [real | imag] on lane-padded halves
    spec = jnp.dot(frames, fwd_ref[...],
                   preferred_element_type=jnp.float32)   # (NFP, 2*CPAD) f32
    real = spec[:, :CPAD]
    imag = spec[:, CPAD:]

    # magnitude / phase via a single rsqrt (EUP); +tiny avoids cmp/select and FTZ NaNs.
    sq = real * real + imag * imag
    inv_mag = jax.lax.rsqrt(sq + TINY)
    mag = sq * inv_mag                                   # == sqrt(sq) (exactly 0 when sq==0)

    # denoise: subtract bias*strength (pre-scaled, zero in padded lanes), clamp at 0
    mag_d = jnp.maximum(mag - bias_ref[...], 0.0)

    # recombine magnitude with the original phase: spec * (mag_d / mag) per lane-half.
    # Two lane-aligned half writes into a bf16 scratch (no lane-axis concatenate),
    # keeping the single fused inverse matmul.
    scale = mag_d * inv_mag                              # (NFP, CPAD)
    recon_ref[:, :CPAD] = (real * scale).astype(jnp.bfloat16)
    recon_ref[:, CPAD:] = (imag * scale).astype(jnp.bfloat16)

    # fused inverse STFT (conv_transpose weights): one bf16 matmul, f32 accumulation
    out_frames = jnp.dot(recon_ref[...], inv_ref[...],
                         preferred_element_type=jnp.float32)   # (NFP, FILT) f32

    # overlap-add (stride = HOP) as RATIO tiny banded matmuls (MXU slack, no sublane
    # shifts); chunk slices are lane-tile aligned (multiples of 128).
    acc = jnp.zeros((NB, HOP), jnp.float32)
    for j in range(RATIO):
        chunk = out_frames[:, j * HOP:(j + 1) * HOP]     # (NFP, HOP)
        acc = acc + jnp.dot(ola_ref[j], chunk, preferred_element_type=jnp.float32)

    # single lane-dense store with the window-sum correction fused in
    out_ref[0] = acc * corr_ref[...]


def denoiser_forward(audio, fwd_fused, inv_fused, bias_scaled, corr2d, ola):
    frames = frame_audio(audio, NF)                                  # (B, NF, FILT) f32
    frames = jnp.pad(frames, ((0, 0), (0, NFP - NF), (0, 0)))        # sublane-align rows
    frames = frames.astype(jnp.bfloat16)                             # halve frame DMA too

    out_blocks = pl.pallas_call(
        denoiser_kernel,
        out_shape=jax.ShapeDtypeStruct((B, NB, HOP), jnp.float32),
        grid=(B,),                                                   # batch-parallel (2 TCs on v7x)
        in_specs=[
            pl.BlockSpec((1, NFP, FILT), lambda b: (b, 0, 0)),       # per-batch frames
            pl.BlockSpec((FILT, 2 * CPAD), lambda b: (0, 0)),        # invariant (fetched once)
            pl.BlockSpec((2 * CPAD, FILT), lambda b: (0, 0)),        # invariant
            pl.BlockSpec((1, CPAD), lambda b: (0, 0)),               # invariant
            pl.BlockSpec((NB, HOP), lambda b: (0, 0)),               # invariant
            pl.BlockSpec((RATIO, NB, NFP), lambda b: (0, 0, 0)),     # invariant OLA matrices
        ],
        out_specs=pl.BlockSpec((1, NB, HOP), lambda b: (b, 0, 0)),
        scratch_shapes=[pltpu.VMEM((NFP, 2 * CPAD), jnp.bfloat16)],  # recon staging
        compiler_params=pltpu.CompilerParams(
            dimension_semantics=("parallel",),
            vmem_limit_bytes=32 * 1024 * 1024,
        ),
    )(frames, fwd_fused, inv_fused, bias_scaled, corr2d, ola)

    flat = out_blocks.reshape(B, OUTLEN)
    trimmed = flat[:, FILT // 2: -(FILT // 2)]           # remove STFT padding
    return trimmed[:, None, :]                           # (B, 1, NSAMP) — matches torch NCW


# ------------------------------ pure-JAX reference ------------------------------
def ref_denoiser(audio, rT, iT, invr, invi, bias, corr_flat):
    frames = frame_audio(audio, NF)
    hi = jax.lax.Precision.HIGHEST
    real = jnp.einsum("btf,fc->btc", frames, rT, precision=hi)
    imag = jnp.einsum("btf,fc->btc", frames, iT, precision=hi)
    mag = jnp.sqrt(real * real + imag * imag)
    safe = mag > 0.0
    inv_mag = jnp.where(safe, 1.0 / jnp.where(safe, mag, 1.0), 0.0)
    cos_p = jnp.where(safe, real * inv_mag, 1.0)
    sin_p = imag * inv_mag
    mag_d = jnp.maximum(mag - bias[None, None, :] * STRENGTH, 0.0)
    rr = mag_d * cos_p
    ii = mag_d * sin_p
    out_frames = (jnp.einsum("btc,cf->btf", rr, invr, precision=hi)
                  + jnp.einsum("btc,cf->btf", ii, invi, precision=hi))  # (B, NF, FILT)
    out = jnp.zeros((B, OUTLEN), jnp.float32)
    for t in range(NF):
        out = out.at[:, t * HOP:t * HOP + FILT].add(out_frames[:, t, :])
    out = out * corr_flat[None, :]
    return out[:, FILT // 2: -(FILT // 2)][:, None, :]


# ----------------------------------- main -----------------------------------
if __name__ == "__main__":
    key = jax.random.PRNGKey(0)
    k_bias, k_audio = jax.random.split(key)

    rT, iT, invr, invi, fwd_fused, inv_fused = make_basis()
    corr_flat = make_corr(NF)
    corr2d = corr_flat.reshape(NB, HOP)
    ola = make_ola()

    # bias_spec: first STFT frame of a deterministic "bias audio" (stands in for hifigan(zeros))
    bias_audio = 0.01 * jax.random.normal(k_bias, (1, 4 * HOP), dtype=jnp.float32)
    bias_spec = stft_magnitude(bias_audio, rT, iT)[0, 0, :]          # (CUTOFF,)
    bias_scaled = jnp.zeros((1, CPAD), jnp.float32).at[0, :CUTOFF].set(bias_spec * STRENGTH)

    # input audio (what forward() receives)
    audio = jax.random.normal(k_audio, (B, NSAMP), dtype=jnp.float32)

    out = denoiser_forward(audio, fwd_fused, inv_fused, bias_scaled, corr2d, ola)
    out = jax.block_until_ready(out)

    ref = jax.block_until_ready(ref_denoiser(audio, rT, iT, invr, invi, bias_spec, corr_flat))

    assert out.shape == (B, 1, NSAMP), out.shape
    assert bool(jnp.all(jnp.isfinite(out)))
    max_err = float(jnp.max(jnp.abs(out - ref)))
    assert bool(jnp.allclose(out, ref, rtol=1e-2, atol=2e-2)), max_err

    print("KERNEL_OK")
</pallas_src>

<mosaic_0001>
module attributes {stable_mosaic.version = 11 : i64} {
  func.func @denoiser_kernel(%arg0: i32, %arg1: memref<1x16x512xbf16, #tpu.memory_space<vmem>>, %arg2: memref<512x768xbf16, #tpu.memory_space<vmem>>, %arg3: memref<768x512xbf16, #tpu.memory_space<vmem>>, %arg4: memref<1x384xf32, #tpu.memory_space<vmem>>, %arg5: memref<12x128xf32, #tpu.memory_space<vmem>>, %arg6: memref<4x12x16xf32, #tpu.memory_space<vmem>>, %arg7: memref<1x12x128xf32, #tpu.memory_space<vmem>>, %arg8: memref<16x768xbf16, #tpu.memory_space<vmem>>) attributes {dimension_semantics = [#tpu.dimension_semantics<parallel>], iteration_bounds = array<i64: 2>, scalar_prefetch = 0 : i64, scratch_operands = 1 : i64, tpu.core_type = #tpu.core_type<tc>, window_params = [{transform_indices = @transform_0, window_bounds = array<i64: 1, 16, 512>}, {pipeline_mode = #tpu.pipeline_mode<synchronous>, transform_indices = @transform_1, window_bounds = array<i64: 512, 768>}, {pipeline_mode = #tpu.pipeline_mode<synchronous>, transform_indices = @transform_2, window_bounds = array<i64: 768, 512>}, {pipeline_mode = #tpu.pipeline_mode<synchronous>, transform_indices = @transform_3, window_bounds = array<i64: 1, 384>}, {pipeline_mode = #tpu.pipeline_mode<synchronous>, transform_indices = @transform_4, window_bounds = array<i64: 12, 128>}, {pipeline_mode = #tpu.pipeline_mode<synchronous>, transform_indices = @transform_5, window_bounds = array<i64: 4, 12, 16>}, {transform_indices = @transform_6, window_bounds = array<i64: 1, 12, 128>}]} {
    %c0 = arith.constant 0 : index
    %c0_0 = arith.constant 0 : index
    %c0_1 = arith.constant 0 : index
    %0 = vector.load %arg1[%c0, %c0_0, %c0_1] : memref<1x16x512xbf16, #tpu.memory_space<vmem>>, vector<1x16x512xbf16>
    %1 = vector.shape_cast %0 : vector<1x16x512xbf16> to vector<16x512xbf16>
    %c0_2 = arith.constant 0 : index
    %c0_3 = arith.constant 0 : index
    %2 = vector.load %arg2[%c0_2, %c0_3] : memref<512x768xbf16, #tpu.memory_space<vmem>>, vector<512x768xbf16>
    %cst = arith.constant dense<0.000000e+00> : vector<16x768xf32>
    %3 = tpu.matmul %1, %2, %cst {dimension_numbers = #tpu.dot_dimension_numbers<[1], [0], [0], [1], [0, 0, 1, 1], [], []>} : vector<16x512xbf16>, vector<512x768xbf16>, vector<16x768xf32> -> vector<16x768xf32>
    %4 = vector.extract_strided_slice %3 {offsets = [0, 0], sizes = [16, 384], strides = [1, 1]} : vector<16x768xf32> to vector<16x384xf32>
    %5 = vector.extract_strided_slice %3 {offsets = [0, 384], sizes = [16, 384], strides = [1, 1]} : vector<16x768xf32> to vector<16x384xf32>
    %6 = arith.mulf %4, %4 : vector<16x384xf32>
    %7 = arith.mulf %5, %5 : vector<16x384xf32>
    %8 = arith.addf %6, %7 : vector<16x384xf32>
    %cst_4 = arith.constant 1.17549435E-38 : f32
    %9 = vector.broadcast %cst_4 : f32 to vector<16x384xf32>
    %10 = arith.addf %8, %9 : vector<16x384xf32>
    %11 = math.rsqrt %10 : vector<16x384xf32>
    %12 = arith.mulf %8, %11 : vector<16x384xf32>
    %c0_5 = arith.constant 0 : index
    %c0_6 = arith.constant 0 : index
    %13 = vector.load %arg4[%c0_5, %c0_6] : memref<1x384xf32, #tpu.memory_space<vmem>>, vector<1x384xf32>
    %14 = vector.broadcast %13 : vector<1x384xf32> to vector<16x384xf32>
    %15 = arith.subf %12, %14 : vector<16x384xf32>
    %cst_7 = arith.constant 0.000000e+00 : f32
    %16 = vector.broadcast %cst_7 : f32 to vector<16x384xf32>
    %17 = arith.maximumf %15, %16 : vector<16x384xf32>
    %18 = arith.mulf %17, %11 : vector<16x384xf32>
    %19 = arith.mulf %4, %18 : vector<16x384xf32>
    %20 = arith.truncf %19 : vector<16x384xf32> to vector<16x384xbf16>
    %c0_8 = arith.constant 0 : index
    %c0_9 = arith.constant 0 : index
    %21 = vector.load %arg8[%c0_8, %c0_9] : memref<16x768xbf16, #tpu.memory_space<vmem>>, vector<16x384xbf16>
    tpu.vector_store %arg8[%c0_8, %c0_9], %20 {strides = array<i32>} : memref<16x768xbf16, #tpu.memory_space<vmem>>, vector<16x384xbf16>,
    %22 = arith.mulf %5, %18 : vector<16x384xf32>
    %23 = arith.truncf %22 : vector<16x384xf32> to vector<16x384xbf16>
    %c0_10 = arith.constant 0 : index
    %c384 = arith.constant 384 : index
    %24 = vector.load %arg8[%c0_10, %c384] : memref<16x768xbf16, #tpu.memory_space<vmem>>, vector<16x384xbf16>
    tpu.vector_store %arg8[%c0_10, %c384], %23 {strides = array<i32>} : memref<16x768xbf16, #tpu.memory_space<vmem>>, vector<16x384xbf16>,
    %c0_11 = arith.constant 0 : index
    %c0_12 = arith.constant 0 : index
    %25 = vector.load %arg8[%c0_11, %c0_12] : memref<16x768xbf16, #tpu.memory_space<vmem>>, vector<16x768xbf16>
    %c0_13 = arith.constant 0 : index
    %c0_14 = arith.constant 0 : index
    %26 = vector.load %arg3[%c0_13, %c0_14] : memref<768x512xbf16, #tpu.memory_space<vmem>>, vector<768x512xbf16>
    %cst_15 = arith.constant dense<0.000000e+00> : vector<16x512xf32>
    %27 = tpu.matmul %25, %26, %cst_15 {dimension_numbers = #tpu.dot_dimension_numbers<[1], [0], [0], [1], [0, 0, 1, 1], [], []>} : vector<16x768xbf16>, vector<768x512xbf16>, vector<16x512xf32> -> vector<16x512xf32>
    %cst_16 = arith.constant 0.000000e+00 : f32
    %28 = vector.broadcast %cst_16 : f32 to vector<12x128xf32>
    %29 = vector.extract_strided_slice %27 {offsets = [0, 0], sizes = [16, 128], strides = [1, 1]} : vector<16x512xf32> to vector<16x128xf32>
    %c0_17 = arith.constant 0 : index
    %c0_18 = arith.constant 0 : index
    %c0_19 = arith.constant 0 : index
    %30 = vector.load %arg6[%c0_17, %c0_18, %c0_19] : memref<4x12x16xf32, #tpu.memory_space<vmem>>, vector<1x12x16xf32>
    %31 = vector.shape_cast %30 : vector<1x12x16xf32> to vector<12x16xf32>
    %cst_20 = arith.constant dense<0.000000e+00> : vector<12x128xf32>
    %32 = tpu.matmul %31, %29, %cst_20 {dimension_numbers = #tpu.dot_dimension_numbers<[1], [0], [0], [1], [0, 0, 1, 1], [], []>} : vector<12x16xf32>, vector<16x128xf32>, vector<12x128xf32> -> vector<12x128xf32>
    %33 = arith.addf %28, %32 : vector<12x128xf32>
    %34 = vector.extract_strided_slice %27 {offsets = [0, 128], sizes = [16, 128], strides = [1, 1]} : vector<16x512xf32> to vector<16x128xf32>
    %c1 = arith.constant 1 : index
    %c0_21 = arith.constant 0 : index
    %c0_22 = arith.constant 0 : index
    %35 = vector.load %arg6[%c1, %c0_21, %c0_22] : memref<4x12x16xf32, #tpu.memory_space<vmem>>, vector<1x12x16xf32>
    %36 = vector.shape_cast %35 : vector<1x12x16xf32> to vector<12x16xf32>
    %cst_23 = arith.constant dense<0.000000e+00> : vector<12x128xf32>
    %37 = tpu.matmul %36, %34, %cst_23 {dimension_numbers = #tpu.dot_dimension_numbers<[1], [0], [0], [1], [0, 0, 1, 1], [], []>} : vector<12x16xf32>, vector<16x128xf32>, vector<12x128xf32> -> vector<12x128xf32>
    %38 = arith.addf %33, %37 : vector<12x128xf32>
    %39 = vector.extract_strided_slice %27 {offsets = [0, 256], sizes = [16, 128], strides = [1, 1]} : vector<16x512xf32> to vector<16x128xf32>
    %c2 = arith.constant 2 : index
    %c0_24 = arith.constant 0 : index
    %c0_25 = arith.constant 0 : index
    %40 = vector.load %arg6[%c2, %c0_24, %c0_25] : memref<4x12x16xf32, #tpu.memory_space<vmem>>, vector<1x12x16xf32>
    %41 = vector.shape_cast %40 : vector<1x12x16xf32> to vector<12x16xf32>
    %cst_26 = arith.constant dense<0.000000e+00> : vector<12x128xf32>
    %42 = tpu.matmul %41, %39, %cst_26 {dimension_numbers = #tpu.dot_dimension_numbers<[1], [0], [0], [1], [0, 0, 1, 1], [], []>} : vector<12x16xf32>, vector<16x128xf32>, vector<12x128xf32> -> vector<12x128xf32>
    %43 = arith.addf %38, %42 : vector<12x128xf32>
    %44 = vector.extract_strided_slice %27 {offsets = [0, 384], sizes = [16, 128], strides = [1, 1]} : vector<16x512xf32> to vector<16x128xf32>
    %c3 = arith.constant 3 : index
    %c0_27 = arith.constant 0 : index
    %c0_28 = arith.constant 0 : index
    %45 = vector.load %arg6[%c3, %c0_27, %c0_28] : memref<4x12x16xf32, #tpu.memory_space<vmem>>, vector<1x12x16xf32>
    %46 = vector.shape_cast %45 : vector<1x12x16xf32> to vector<12x16xf32>
    %cst_29 = arith.constant dense<0.000000e+00> : vector<12x128xf32>
    %47 = tpu.matmul %46, %44, %cst_29 {dimension_numbers = #tpu.dot_dimension_numbers<[1], [0], [0], [1], [0, 0, 1, 1], [], []>} : vector<12x16xf32>, vector<16x128xf32>, vector<12x128xf32> -> vector<12x128xf32>
    %48 = arith.addf %43, %47 : vector<12x128xf32>
    %c0_30 = arith.constant 0 : index
    %c0_31 = arith.constant 0 : index
    %49 = vector.load %arg5[%c0_30, %c0_31] : memref<12x128xf32, #tpu.memory_space<vmem>>, vector<12x128xf32>
    %50 = arith.mulf %48, %49 : vector<12x128xf32>
    %c0_32 = arith.constant 0 : index
    %c0_33 = arith.constant 0 : index
    %c0_34 = arith.constant 0 : index
    %51 = vector.load %arg7[%c0_32, %c0_33, %c0_34] : memref<1x12x128xf32, #tpu.memory_space<vmem>>, vector<1x12x128xf32>
    %52 = vector.shape_cast %51 : vector<1x12x128xf32> to vector<12x128xf32>
    %53 = vector.shape_cast %50 : vector<12x128xf32> to vector<1x12x128xf32>
    tpu.vector_store %arg7[%c0_32, %c0_33, %c0_34], %53 {strides = array<i32>} : memref<1x12x128xf32, #tpu.memory_space<vmem>>, vector<1x12x128xf32>,
    return
  }
  func.func @transform_0(%arg0: i32) -> (i32, i32, i32) {
    %c0_i32 = arith.constant 0 : i32
    %c0_i32_0 = arith.constant 0 : i32
    %c0_i32_1 = arith.constant 0 : i32
    return %arg0, %c0_i32, %c0_i32_0 : i32, i32, i32
  }
  func.func @transform_1(%arg0: i32) -> (i32, i32) {
    %c0_i32 = arith.constant 0 : i32
    %c0_i32_0 = arith.constant 0 : i32
    %c0_i32_1 = arith.constant 0 : i32
    return %c0_i32, %c0_i32_0 : i32, i32
  }
  func.func @transform_2(%arg0: i32) -> (i32, i32) {
    %c0_i32 = arith.constant 0 : i32
    %c0_i32_0 = arith.constant 0 : i32
    %c0_i32_1 = arith.constant 0 : i32
    return %c0_i32, %c0_i32_0 : i32, i32
  }
  func.func @transform_3(%arg0: i32) -> (i32, i32) {
    %c0_i32 = arith.constant 0 : i32
    %c0_i32_0 = arith.constant 0 : i32
    %c0_i32_1 = arith.constant 0 : i32
    return %c0_i32, %c0_i32_0 : i32, i32
  }
  func.func @transform_4(%arg0: i32) -> (i32, i32) {
    %c0_i32 = arith.constant 0 : i32
    %c0_i32_0 = arith.constant 0 : i32
    %c0_i32_1 = arith.constant 0 : i32
    return %c0_i32, %c0_i32_0 : i32, i32
  }
  func.func @transform_5(%arg0: i32) -> (i32, i32, i32) {
    %c0_i32 = arith.constant 0 : i32
    %c0_i32_0 = arith.constant 0 : i32
    %c0_i32_1 = arith.constant 0 : i32
    %c0_i32_2 = arith.constant 0 : i32
    return %c0_i32, %c0_i32_0, %c0_i32_1 : i32, i32, i32
  }
  func.func @transform_6(%arg0: i32) -> (i32, i32, i32) {
    %c0_i32 = arith.constant 0 : i32
    %c0_i32_0 = arith.constant 0 : i32
    %c0_i32_1 = arith.constant 0 : i32
    return %arg0, %c0_i32, %c0_i32_0 : i32, i32, i32
  }
}

</mosaic_0001>

<llo_original>
// kernel: tpu_custom_call.1
$region0: #{tpu_custom_call.1}
  #allocation0 [shape = 'u32[]', space=smem, size = 0x4, offset = 0x4, fixed_abs, tag = 'smem constant byte address 0x4 - core index']
  #allocation1 [shape = 'u32[72,128]{1,0:T(1,128)}', space=vmem, size = 0x9000, scoped, tag = 'internal scratch']
  #allocation2 [shape = 'bf16[16,768]{1,0:T(8,128)(2,1)}', space=vmem, size = 0x6000, scoped, tag = 'scratch operand']
  %s0 = inlined_call_operand.vmem [shape: bf16[2,16,512], index: 0, kind: input, shape index: {}]
  %s1 = inlined_call_operand.hbm [shape: bf16[512,768], index: 1, kind: input, shape index: {}]
  %s2 = inlined_call_operand.hbm [shape: bf16[768,512], index: 2, kind: input, shape index: {}]
  %s3 = inlined_call_operand.vmem [shape: f32[1,384], index: 3, kind: input, shape index: {}]
  %s4 = inlined_call_operand.vmem [shape: f32[12,128], index: 4, kind: input, shape index: {}]
  %s5 = inlined_call_operand.vmem [shape: f32[4,12,16], index: 5, kind: input, shape index: {}]
  %s6 = inlined_call_operand.vmem [shape: f32[2,12,128], index: 6, kind: output, shape index: {}]
  %s7 = sld [smem:[#allocation0]]
  $region65: #{tpu_custom_call.1} parent=0
    _
  %s9 = ssub.s32 1, %s7
  %s10 = scalar_select 0, %s9, %s7
  $region1: #{tpu_custom_call.1} parent=0
    #allocation3 [shape = 'u8[786432]{0}', space=vmem, size = 0xc0000, scoped, tag = 'input window, operand 1, single buffered']
    #allocation4 [shape = 's32[2]{0}', space=sflag, size = 0x8, scoped, tag = 'scoped memory for tpu_custom_call.1']
    #allocation5 [shape = 'u8[786432]{0}', space=vmem, size = 0xc0000, scoped, tag = 'input window, operand 2, single buffered']
    #allocation6 [shape = 's32[1]{0}', space=sflag, size = 0x4, scoped, tag = 'scoped memory for tpu_custom_call.1']
    %11 = vsyncpa [#allocation4], 0
    %12 = vsyncpa [#allocation6], 0
    loop: start=0, step=1, limit=4
    $region2: #{tpu_custom_call.1} parent=1 // loop_pre_header
      _
    $region3: #{tpu_custom_call.1} parent=1 // loop_header
      %s14 = sphi 0, %s18
      %p15 = scmp.ge.s32.totalorder %s14, 4
      %s24 = sphi 0, %s26
      %s27 = sphi 0, %s24
      %s28 = sphi 0, %s27
      %s44 = sphi 0, %s28
      %s48 = sphi 0, %s48
      %s50 = sphi 0, %s48
      %s51 = sphi 0, %s50
      %s65 = sphi 0, %s51
      %s69 = sphi 0, %s69
      %s71 = sphi 0, %s69
      %s72 = sphi 0, %s71
      %s86 = sphi 0, %s72
      %s90 = sphi 0, %s90
      %s92 = sphi 0, %s90
      %s93 = sphi 0, %s92
      %s107 = sphi 0, %s93
      %s111 = sphi 0, %s111
      %s113 = sphi 0, %s111
      %s114 = sphi 0, %s113
      %s128 = sphi 0, %s114
      %s132 = sphi 0, %s132
      %s134 = sphi 0, %s132
      %s135 = sphi 0, %s134
      %s149 = sphi 0, %s135
      %s155 = sphi 0, %s157
      %s158 = sphi 0, %s155
      %s159 = sphi 0, %s158
      %s175 = sphi 0, %s159
    $region4: #{tpu_custom_call.1} parent=1 // loop_header_branch
      %17 = sbr.rel (%p15) target = $region8
    $region5: #{tpu_custom_call.1} parent=1 // loop_body
      %s19 = ssub.s32 %s14, 1
      %s20 = ssub.s32 %s14, 2
      %s21 = sadd.s32 %s14, 1
      %s22 = ssub.s32 %s14, %s21
      %p23 = scmp.eq.s32.totalorder %s22, 0
      %s25 = sadd.s32 %s24, 1
      %s26 = scalar_select %p23, %s24, %s25
      %p29 = pneg %p23
      %p30 = scmp.eq.s32.totalorder %s14, 1
      %p31 = por %p29, %p30
      %p32 = scmp.ne.s32.totalorder %s24, %s27
      %p33 = scmp.eq.s32.totalorder %s14, 0
      %p34 = por %p32, %p33
      %p35 = scmp.ne.s32.totalorder %s24, %s27
      %p36 = scmp.eq.s32.totalorder %s19, 1
      %p37 = por %p35, %p36
      %p38 = scmp.ne.s32.totalorder %s27, %s28
      %p39 = scmp.eq.s32.totalorder %s19, 0
      %p40 = por %p38, %p39
      %p41 = scmp.ne.s32.totalorder %s27, %s28
      %p42 = scmp.eq.s32.totalorder %s20, 1
      %p43 = por %p41, %p42
      %p45 = scmp.ne.s32.totalorder %s28, %s44
      %p46 = scmp.eq.s32.totalorder %s20, 0
      %p47 = por %p45, %p46
      %s49 = sadd.s32 %s48, 1
      %p52 = scmp.eq.s32.totalorder %s14, 1
      %p53 = scmp.ne.s32.totalorder %s48, %s50
      %p54 = scmp.eq.s32.totalorder %s14, 0
      %p55 = por %p53, %p54
      %p56 = scmp.ne.s32.totalorder %s48, %s50
      %p57 = scmp.eq.s32.totalorder %s19, 1
      %p58 = por %p56, %p57
      %p59 = scmp.ne.s32.totalorder %s50, %s51
      %p60 = scmp.eq.s32.totalorder %s19, 0
      %p61 = por %p59, %p60
      %p62 = scmp.ne.s32.totalorder %s50, %s51
      %p63 = scmp.eq.s32.totalorder %s20, 1
      %p64 = por %p62, %p63
      %p66 = scmp.ne.s32.totalorder %s51, %s65
      %p67 = scmp.eq.s32.totalorder %s20, 0
      %p68 = por %p66, %p67
      %s70 = sadd.s32 %s69, 1
      %p73 = scmp.eq.s32.totalorder %s14, 1
      %p74 = scmp.ne.s32.totalorder %s69, %s71
      %p75 = scmp.eq.s32.totalorder %s14, 0
      %p76 = por %p74, %p75
      %p77 = scmp.ne.s32.totalorder %s69, %s71
      %p78 = scmp.eq.s32.totalorder %s19, 1
      %p79 = por %p77, %p78
      %p80 = scmp.ne.s32.totalorder %s71, %s72
      %p81 = scmp.eq.s32.totalorder %s19, 0
      %p82 = por %p80, %p81
      %p83 = scmp.ne.s32.totalorder %s71, %s72
      %p84 = scmp.eq.s32.totalorder %s20, 1
      %p85 = por %p83, %p84
      %p87 = scmp.ne.s32.totalorder %s72, %s86
      %p88 = scmp.eq.s32.totalorder %s20, 0
      %p89 = por %p87, %p88
      %s91 = sadd.s32 %s90, 1
      %p94 = scmp.eq.s32.totalorder %s14, 1
      %p95 = scmp.ne.s32.totalorder %s90, %s92
      %p96 = scmp.eq.s32.totalorder %s14, 0
      %p97 = por %p95, %p96
      %p98 = scmp.ne.s32.totalorder %s90, %s92
      %p99 = scmp.eq.s32.totalorder %s19, 1
      %p100 = por %p98, %p99
      %p101 = scmp.ne.s32.totalorder %s92, %s93
      %p102 = scmp.eq.s32.totalorder %s19, 0
      %p103 = por %p101, %p102
      %p104 = scmp.ne.s32.totalorder %s92, %s93
      %p105 = scmp.eq.s32.totalorder %s20, 1
      %p106 = por %p104, %p105
      %p108 = scmp.ne.s32.totalorder %s93, %s107
      %p109 = scmp.eq.s32.totalorder %s20, 0
      %p110 = por %p108, %p109
      %s112 = sadd.s32 %s111, 1
      %p115 = scmp.eq.s32.totalorder %s14, 1
      %p116 = scmp.ne.s32.totalorder %s111, %s113
      %p117 = scmp.eq.s32.totalorder %s14, 0
      %p118 = por %p116, %p117
      %p119 = scmp.ne.s32.totalorder %s111, %s113
      %p120 = scmp.eq.s32.totalorder %s19, 1
      %p121 = por %p119, %p120
      %p122 = scmp.ne.s32.totalorder %s113, %s114
      %p123 = scmp.eq.s32.totalorder %s19, 0
      %p124 = por %p122, %p123
      %p125 = scmp.ne.s32.totalorder %s113, %s114
      %p126 = scmp.eq.s32.totalorder %s20, 1
      %p127 = por %p125, %p126
      %p129 = scmp.ne.s32.totalorder %s114, %s128
      %p130 = scmp.eq.s32.totalorder %s20, 0
      %p131 = por %p129, %p130
      %s133 = sadd.s32 %s132, 1
      %p136 = scmp.eq.s32.totalorder %s14, 1
      %p137 = scmp.ne.s32.totalorder %s132, %s134
      %p138 = scmp.eq.s32.totalorder %s14, 0
      %p139 = por %p137, %p138
      %p140 = scmp.ne.s32.totalorder %s132, %s134
      %p141 = scmp.eq.s32.totalorder %s19, 1
      %p142 = por %p140, %p141
      %p143 = scmp.ne.s32.totalorder %s134, %s135
      %p144 = scmp.eq.s32.totalorder %s19, 0
      %p145 = por %p143, %p144
      %p146 = scmp.ne.s32.totalorder %s134, %s135
      %p147 = scmp.eq.s32.totalorder %s20, 1
      %p148 = por %p146, %p147
      %p150 = scmp.ne.s32.totalorder %s135, %s149
      %p151 = scmp.eq.s32.totalorder %s20, 0
      %p152 = por %p150, %p151
      %s153 = ssub.s32 %s14, %s21
      %p154 = scmp.eq.s32.totalorder %s153, 0
      %s156 = sadd.s32 %s155, 1
      %s157 = scalar_select %p154, %s155, %s156
      %p160 = pneg %p154
      %p161 = scmp.eq.s32.totalorder %s14, 1
      %p162 = por %p160, %p161
      %p163 = scmp.ne.s32.totalorder %s155, %s158
      %p164 = scmp.eq.s32.totalorder %s14, 0
      %p165 = por %p163, %p164
      %p166 = scmp.ne.s32.totalorder %s155, %s158
      %p167 = scmp.eq.s32.totalorder %s19, 1
      %p168 = por %p166, %p167
      %p169 = scmp.ne.s32.totalorder %s158, %s159
      %p170 = scmp.eq.s32.totalorder %s19, 0
      %p171 = por %p169, %p170
      %p172 = scmp.ne.s32.totalorder %s158, %s159
      %p173 = scmp.eq.s32.totalorder %s20, 1
      %p174 = por %p172, %p173
      %p176 = scmp.ne.s32.totalorder %s159, %s175
      %p177 = scmp.eq.s32.totalorder %s20, 0
      %p178 = por %p176, %p177
      %p179 = scmp.le.s32.totalorder 1, %s14
      %p180 = scmp.lt.s32.totalorder %s14, 3
      %p181 = pnand %p179, %p180
      %p182 = pneg %p181
      // Predicated region
      $region9: #{tpu_custom_call.1} parent=5 // pred_check
        _
      $region10: #{tpu_custom_call.1} parent=5 // pred_check_branch
        %184 = sbr.rel (%p181) target = $region12
      $region11: #{tpu_custom_call.1} parent=5 // pred_region
        %s185 = ssub.s32 %s14, 1
        // Predicated region
        $region13: #{tpu_custom_call.1} parent=11 // pred_check
          %p186 = pneg %p61
        $region14: #{tpu_custom_call.1} parent=11 // pred_check_branch
          %188 = sbr.rel (%p186) target = $region16
        $region15: #{tpu_custom_call.1} parent=11 // pred_region
          %190 = vsyncadd [#allocation4], 0
          %s191 = sshll.u32 %s1, 4
          %s192 = int_to_ptr.hbm [resolvable:$true] %s191
          %s193 = sshll.u32 [#allocation3], 4
          %s194 = int_to_ptr.vmem [resolvable:$true] %s193
          %199 = dma.hbm_to_vmem [thread:$0]  %s192, 24576, %s194, [#allocation4], 384, 384, 24
        $region16: #{tpu_custom_call.1} parent=11 // pred_fallthru
          _
        // Predicated region
        $region17: #{tpu_custom_call.1} parent=11 // pred_check
          %p200 = pneg %p82
        $region18: #{tpu_custom_call.1} parent=11 // pred_check_branch
          %202 = sbr.rel (%p200) target = $region20
        $region19: #{tpu_custom_call.1} parent=11 // pred_region
          %204 = vsyncadd [#allocation6], 0
          %s205 = sshll.u32 %s2, 4
          %s206 = int_to_ptr.hbm [resolvable:$true] %s205
          %s207 = sshll.u32 [#allocation5], 4
          %s208 = int_to_ptr.vmem [resolvable:$true] %s207
          %213 = dma.hbm_to_vmem [thread:$0]  %s206, 24576, %s208, [#allocation6], 256, 256, 16
        $region20: #{tpu_custom_call.1} parent=11 // pred_fallthru
          _
        // Predicated region
        $region21: #{tpu_custom_call.1} parent=11 // pred_check
          %p214 = pneg %p103
        $region22: #{tpu_custom_call.1} parent=11 // pred_check_branch
          %216 = sbr.rel (%p214) target = $region24
        $region23: #{tpu_custom_call.1} parent=11 // pred_region
          _
        $region24: #{tpu_custom_call.1} parent=11 // pred_fallthru
          _
        // Predicated region
        $region25: #{tpu_custom_call.1} parent=11 // pred_check
          %p217 = pneg %p124
        $region26: #{tpu_custom_call.1} parent=11 // pred_check_branch
          %219 = sbr.rel (%p217) target = $region28
        $region27: #{tpu_custom_call.1} parent=11 // pred_region
          _
        $region28: #{tpu_custom_call.1} parent=11 // pred_fallthru
          _
        // Predicated region
        $region29: #{tpu_custom_call.1} parent=11 // pred_check
          %p220 = pneg %p145
        $region30: #{tpu_custom_call.1} parent=11 // pred_check_branch
          %222 = sbr.rel (%p220) target = $region32
        $region31: #{tpu_custom_call.1} parent=11 // pred_region
          _
        $region32: #{tpu_custom_call.1} parent=11 // pred_fallthru
          _
      $region12: #{tpu_custom_call.1} parent=5 // pred_fallthru
        _
      %p223 = scmp.lt.s32.totalorder %s14, 2
      // Predicated region
      $region33: #{tpu_custom_call.1} parent=5 // pred_check
        %p224 = pneg %p223
      $region34: #{tpu_custom_call.1} parent=5 // pred_check_branch
        %226 = sbr.rel (%p224) target = $region36
      $region35: #{tpu_custom_call.1} parent=5 // pred_region
        // Predicated region
        $region37: #{tpu_custom_call.1} parent=35 // pred_check
          %p227 = pneg %p34
        $region38: #{tpu_custom_call.1} parent=35 // pred_check_branch
          %229 = sbr.rel (%p227) target = $region40
        $region39: #{tpu_custom_call.1} parent=35 // pred_region
          %p230 = scmp.lt.s32.totalorder %s14, 1
          %s231 = scalar_select %p230, %s14, 1
          %s232 = smul.addr %s231, 8
          %s233 = smul.addr %s232, 4
          %s234 = scalar_lea.vmem %s0, %s233
        $region40: #{tpu_custom_call.1} parent=35 // pred_fallthru
          _
      $region36: #{tpu_custom_call.1} parent=5 // pred_fallthru
        _
      %p235 = scmp.le.s32.totalorder 1, %s14
      %p236 = scmp.lt.s32.totalorder %s14, 3
      %p237 = pnand %p235, %p236
      %p238 = pneg %p237
      // Predicated region
      $region41: #{tpu_custom_call.1} parent=5 // pred_check
        _
      $region42: #{tpu_custom_call.1} parent=5 // pred_check_branch
        %240 = sbr.rel (%p237) target = $region44
      $region43: #{tpu_custom_call.1} parent=5 // pred_region
        %s241 = ssub.s32 %s14, 1
        // Predicated region
        $region45: #{tpu_custom_call.1} parent=43 // pred_check
          %p242 = pneg %p61
        $region46: #{tpu_custom_call.1} parent=43 // pred_check_branch
          %244 = sbr.rel (%p242) target = $region48
        $region47: #{tpu_custom_call.1} parent=43 // pred_region
          %246 = dma.done [#allocation4], 24576
        $region48: #{tpu_custom_call.1} parent=43 // pred_fallthru
          _
        // Predicated region
        $region49: #{tpu_custom_call.1} parent=43 // pred_check
          %p247 = pneg %p82
        $region50: #{tpu_custom_call.1} parent=43 // pred_check_branch
          %249 = sbr.rel (%p247) target = $region52
        $region51: #{tpu_custom_call.1} parent=43 // pred_region
          %251 = dma.done [#allocation6], 24576
        $region52: #{tpu_custom_call.1} parent=43 // pred_fallthru
          _
        %p252 = scmp.lt.s32.totalorder %s19, 1
        %s253 = scalar_select %p252, %s19, 1
        %s254 = smul.addr %s253, 8
        %s255 = smul.addr %s254, 4
        %s256 = scalar_lea.vmem %s0, %s255
        %p257 = pneg %p40
        %p258 = pneg %p37
        %p259 = pneg %p61
        %p260 = pneg %p58
        %p261 = pneg %p82
        %p262 = pneg %p79
        %p263 = pneg %p103
        %p264 = pneg %p100
        %p265 = pneg %p124
        %p266 = pneg %p121
        %p267 = pneg %p145
        %p268 = pneg %p142
        %p269 = pneg %p171
        %p270 = pneg %p168
        %p271 = scmp.lt.s32.totalorder %s19, 1
        %s272 = scalar_select %p271, %s19, 1
        %s273 = smul.addr %s272, 2
        %s274 = smul.addr %s273, 8
        %s275 = scalar_lea.vmem %s6, %s274
        %p276 = scmp.lt.s32.totalorder %s19, 1
        %s277 = scalar_select %p276, %s19, 1
        %s278 = smul.addr %s277, 8
        %s279 = smul.addr %s278, 4
        %s280 = scalar_lea.vmem %s0, %s279
        %p281 = scmp.lt.s32.totalorder %s19, 1
        %s282 = scalar_select %p281, %s19, 1
        %s283 = smul.addr %s282, 2
        %s284 = smul.addr %s283, 8
        %s285 = scalar_lea.vmem %s6, %s284
        %v286 = vld [vmem:[%s280] sm:$0xff]
        %v287 = vld [vmem:[%s280 + $0x8] sm:$0xff]
        %v288 = vld [vmem:[%s280 + $0x10] sm:$0xff]
        %v289 = vld [vmem:[%s280 + $0x18] sm:$0xff]
        %v290 = vld [vmem:[#allocation3] sm:$0xff]
        %v291 = vld [vmem:[#allocation3 + $0x8] sm:$0xff]
        %v292 = vld [vmem:[#allocation3 + $0x10] sm:$0xff]
        %v293 = vld [vmem:[#allocation3 + $0x18] sm:$0xff]
        %v294 = vld [vmem:[#allocation3 + $0x20] sm:$0xff]
        %v295 = vld [vmem:[#allocation3 + $0x28] sm:$0xff]
        %v296 = vld [vmem:[#allocation3 + $0x30] sm:$0xff]
        %v297 = vld [vmem:[#allocation3 + $0x38] sm:$0xff]
        %v298 = vld [vmem:[#allocation3 + $0x40] sm:$0xff]
        %v299 = vld [vmem:[#allocation3 + $0x48] sm:$0xff]
        %v300 = vld [vmem:[#allocation3 + $0x50] sm:$0xff]
        %v301 = vld [vmem:[#allocation3 + $0x58] sm:$0xff]
        %v302 = vld [vmem:[#allocation3 + $0x60] sm:$0xff]
        %v303 = vld [vmem:[#allocation3 + $0x68] sm:$0xff]
        %v304 = vld [vmem:[#allocation3 + $0x70] sm:$0xff]
        %v305 = vld [vmem:[#allocation3 + $0x78] sm:$0xff]
        %v306 = vld [vmem:[#allocation3 + $0x80] sm:$0xff]
        %v307 = vld [vmem:[#allocation3 + $0x88] sm:$0xff]
        %v308 = vld [vmem:[#allocation3 + $0x90] sm:$0xff]
        %v309 = vld [vmem:[#allocation3 + $0x98] sm:$0xff]
        %v310 = vld [vmem:[#allocation3 + $0xa0] sm:$0xff]
        %v311 = vld [vmem:[#allocation3 + $0xa8] sm:$0xff]
        %v312 = vld [vmem:[#allocation3 + $0xb0] sm:$0xff]
        %v313 = vld [vmem:[#allocation3 + $0xb8] sm:$0xff]
        %v314 = vld [vmem:[#allocation3 + $0xc0] sm:$0xff]
        %v315 = vld [vmem:[#allocation3 + $0xc8] sm:$0xff]
        %v316 = vld [vmem:[#allocation3 + $0xd0] sm:$0xff]
        %v317 = vld [vmem:[#allocation3 + $0xd8] sm:$0xff]
        %v318 = vld [vmem:[#allocation3 + $0xe0] sm:$0xff]
        %v319 = vld [vmem:[#allocation3 + $0xe8] sm:$0xff]
        %v320 = vld [vmem:[#allocation3 + $0xf0] sm:$0xff]
        %v321 = vld [vmem:[#allocation3 + $0xf8] sm:$0xff]
        %v322 = vld [vmem:[#allocation3 + $0x100] sm:$0xff]
        %v323 = vld [vmem:[#allocation3 + $0x108] sm:$0xff]
        %v324 = vld [vmem:[#allocation3 + $0x110] sm:$0xff]
        %v325 = vld [vmem:[#allocation3 + $0x118] sm:$0xff]
        %v326 = vld [vmem:[#allocation3 + $0x120] sm:$0xff]
        %v327 = vld [vmem:[#allocation3 + $0x128] sm:$0xff]
        %v328 = vld [vmem:[#allocation3 + $0x130] sm:$0xff]
        %v329 = vld [vmem:[#allocation3 + $0x138] sm:$0xff]
        %v330 = vld [vmem:[#allocation3 + $0x140] sm:$0xff]
        %v331 = vld [vmem:[#allocation3 + $0x148] sm:$0xff]
        %v332 = vld [vmem:[#allocation3 + $0x150] sm:$0xff]
        %v333 = vld [vmem:[#allocation3 + $0x158] sm:$0xff]
        %v334 = vld [vmem:[#allocation3 + $0x160] sm:$0xff]
        %v335 = vld [vmem:[#allocation3 + $0x168] sm:$0xff]
        %v336 = vld [vmem:[#allocation3 + $0x170] sm:$0xff]
        %v337 = vld [vmem:[#allocation3 + $0x178] sm:$0xff]
        %v338 = vld [vmem:[#allocation3 + $0x180] sm:$0xff]
        %v339 = vld [vmem:[#allocation3 + $0x188] sm:$0xff]
        %v340 = vld [vmem:[#allocation3 + $0x190] sm:$0xff]
        %v341 = vld [vmem:[#allocation3 + $0x198] sm:$0xff]
        %v342 = vld [vmem:[#allocation3 + $0x1a0] sm:$0xff]
        %v343 = vld [vmem:[#allocation3 + $0x1a8] sm:$0xff]
        %v344 = vld [vmem:[#allocation3 + $0x1b0] sm:$0xff]
        %v345 = vld [vmem:[#allocation3 + $0x1b8] sm:$0xff]
        %v346 = vld [vmem:[#allocation3 + $0x1c0] sm:$0xff]
        %v347 = vld [vmem:[#allocation3 + $0x1c8] sm:$0xff]
        %v348 = vld [vmem:[#allocation3 + $0x1d0] sm:$0xff]
        %v349 = vld [vmem:[#allocation3 + $0x1d8] sm:$0xff]
        %v350 = vld [vmem:[#allocation3 + $0x1e0] sm:$0xff]
        %v351 = vld [vmem:[#allocation3 + $0x1e8] sm:$0xff]
        %v352 = vld [vmem:[#allocation3 + $0x1f0] sm:$0xff]
        %v353 = vld [vmem:[#allocation3 + $0x1f8] sm:$0xff]
        %v354 = vld [vmem:[#allocation3 + $0x200] sm:$0xff]
        %v355 = vld [vmem:[#allocation3 + $0x208] sm:$0xff]
        %v356 = vld [vmem:[#allocation3 + $0x210] sm:$0xff]
        %v357 = vld [vmem:[#allocation3 + $0x218] sm:$0xff]
        %v358 = vld [vmem:[#allocation3 + $0x220] sm:$0xff]
        %v359 = vld [vmem:[#allocation3 + $0x228] sm:$0xff]
        %v360 = vld [vmem:[#allocation3 + $0x230] sm:$0xff]
        %v361 = vld [vmem:[#allocation3 + $0x238] sm:$0xff]
        %v362 = vld [vmem:[#allocation3 + $0x240] sm:$0xff]
        %v363 = vld [vmem:[#allocation3 + $0x248] sm:$0xff]
        %v364 = vld [vmem:[#allocation3 + $0x250] sm:$0xff]
        %v365 = vld [vmem:[#allocation3 + $0x258] sm:$0xff]
        %v366 = vld [vmem:[#allocation3 + $0x260] sm:$0xff]
        %v367 = vld [vmem:[#allocation3 + $0x268] sm:$0xff]
        %v368 = vld [vmem:[#allocation3 + $0x270] sm:$0xff]
        %v369 = vld [vmem:[#allocation3 + $0x278] sm:$0xff]
        %v370 = vld [vmem:[#allocation3 + $0x280] sm:$0xff]
        %v371 = vld [vmem:[#allocation3 + $0x288] sm:$0xff]
        %v372 = vld [vmem:[#allocation3 + $0x290] sm:$0xff]
        %v373 = vld [vmem:[#allocation3 + $0x298] sm:$0xff]
        %v374 = vld [vmem:[#allocation3 + $0x2a0] sm:$0xff]
        %v375 = vld [vmem:[#allocation3 + $0x2a8] sm:$0xff]
        %v376 = vld [vmem:[#allocation3 + $0x2b0] sm:$0xff]
        %v377 = vld [vmem:[#allocation3 + $0x2b8] sm:$0xff]
        %v378 = vld [vmem:[#allocation3 + $0x2c0] sm:$0xff]
        %v379 = vld [vmem:[#allocation3 + $0x2c8] sm:$0xff]
        %v380 = vld [vmem:[#allocation3 + $0x2d0] sm:$0xff]
        %v381 = vld [vmem:[#allocation3 + $0x2d8] sm:$0xff]
        %v382 = vld [vmem:[#allocation3 + $0x2e0] sm:$0xff]
        %v383 = vld [vmem:[#allocation3 + $0x2e8] sm:$0xff]
        %v384 = vld [vmem:[#allocation3 + $0x2f0] sm:$0xff]
        %v385 = vld [vmem:[#allocation3 + $0x2f8] sm:$0xff]
        %v386 = vld [vmem:[#allocation3 + $0x300] sm:$0xff]
        %v387 = vld [vmem:[#allocation3 + $0x308] sm:$0xff]
        %v388 = vld [vmem:[#allocation3 + $0x310] sm:$0xff]
        %v389 = vld [vmem:[#allocation3 + $0x318] sm:$0xff]
        %v390 = vld [vmem:[#allocation3 + $0x320] sm:$0xff]
        %v391 = vld [vmem:[#allocation3 + $0x328] sm:$0xff]
        %v392 = vld [vmem:[#allocation3 + $0x330] sm:$0xff]
        %v393 = vld [vmem:[#allocation3 + $0x338] sm:$0xff]
        %v394 = vld [vmem:[#allocation3 + $0x340] sm:$0xff]
        %v395 = vld [vmem:[#allocation3 + $0x348] sm:$0xff]
        %v396 = vld [vmem:[#allocation3 + $0x350] sm:$0xff]
        %v397 = vld [vmem:[#allocation3 + $0x358] sm:$0xff]
        %v398 = vld [vmem:[#allocation3 + $0x360] sm:$0xff]
        %v399 = vld [vmem:[#allocation3 + $0x368] sm:$0xff]
        %v400 = vld [vmem:[#allocation3 + $0x370] sm:$0xff]
        %v401 = vld [vmem:[#allocation3 + $0x378] sm:$0xff]
        %v402 = vld [vmem:[#allocation3 + $0x380] sm:$0xff]
        %v403 = vld [vmem:[#allocation3 + $0x388] sm:$0xff]
        %v404 = vld [vmem:[#allocation3 + $0x390] sm:$0xff]
        %v405 = vld [vmem:[#allocation3 + $0x398] sm:$0xff]
        %v406 = vld [vmem:[#allocation3 + $0x3a0] sm:$0xff]
        %v407 = vld [vmem:[#allocation3 + $0x3a8] sm:$0xff]
        %v408 = vld [vmem:[#allocation3 + $0x3b0] sm:$0xff]
        %v409 = vld [vmem:[#allocation3 + $0x3b8] sm:$0xff]
        %v410 = vld [vmem:[#allocation3 + $0x3c0] sm:$0xff]
        %v411 = vld [vmem:[#allocation3 + $0x3c8] sm:$0xff]
        %v412 = vld [vmem:[#allocation3 + $0x3d0] sm:$0xff]
        %v413 = vld [vmem:[#allocation3 + $0x3d8] sm:$0xff]
        %v414 = vld [vmem:[#allocation3 + $0x3e0] sm:$0xff]
        %v415 = vld [vmem:[#allocation3 + $0x3e8] sm:$0xff]
        %v416 = vld [vmem:[#allocation3 + $0x3f0] sm:$0xff]
        %v417 = vld [vmem:[#allocation3 + $0x3f8] sm:$0xff]
        %v418 = vld [vmem:[#allocation3 + $0x400] sm:$0xff]
        %v419 = vld [vmem:[#allocation3 + $0x408] sm:$0xff]
        %v420 = vld [vmem:[#allocation3 + $0x410] sm:$0xff]
        %v421 = vld [vmem:[#allocation3 + $0x418] sm:$0xff]
        %v422 = vld [vmem:[#allocation3 + $0x420] sm:$0xff]
        %v423 = vld [vmem:[#allocation3 + $0x428] sm:$0xff]
        %v424 = vld [vmem:[#allocation3 + $0x430] sm:$0xff]
        %v425 = vld [vmem:[#allocation3 + $0x438] sm:$0xff]
        %v426 = vld [vmem:[#allocation3 + $0x440] sm:$0xff]
        %v427 = vld [vmem:[#allocation3 + $0x448] sm:$0xff]
        %v428 = vld [vmem:[#allocation3 + $0x450] sm:$0xff]
        %v429 = vld [vmem:[#allocation3 + $0x458] sm:$0xff]
        %v430 = vld [vmem:[#allocation3 + $0x460] sm:$0xff]
        %v431 = vld [vmem:[#allocation3 + $0x468] sm:$0xff]
        %v432 = vld [vmem:[#allocation3 + $0x470] sm:$0xff]
        %v433 = vld [vmem:[#allocation3 + $0x478] sm:$0xff]
        %v434 = vld [vmem:[#allocation3 + $0x480] sm:$0xff]
        %v435 = vld [vmem:[#allocation3 + $0x488] sm:$0xff]
        %v436 = vld [vmem:[#allocation3 + $0x490] sm:$0xff]
        %v437 = vld [vmem:[#allocation3 + $0x498] sm:$0xff]
        %v438 = vld [vmem:[#allocation3 + $0x4a0] sm:$0xff]
        %v439 = vld [vmem:[#allocation3 + $0x4a8] sm:$0xff]
        %v440 = vld [vmem:[#allocation3 + $0x4b0] sm:$0xff]
        %v441 = vld [vmem:[#allocation3 + $0x4b8] sm:$0xff]
        %v442 = vld [vmem:[#allocation3 + $0x4c0] sm:$0xff]
        %v443 = vld [vmem:[#allocation3 + $0x4c8] sm:$0xff]
        %v444 = vld [vmem:[#allocation3 + $0x4d0] sm:$0xff]
        %v445 = vld [vmem:[#allocation3 + $0x4d8] sm:$0xff]
        %v446 = vld [vmem:[#allocation3 + $0x4e0] sm:$0xff]
        %v447 = vld [vmem:[#allocation3 + $0x4e8] sm:$0xff]
        %v448 = vld [vmem:[#allocation3 + $0x4f0] sm:$0xff]
        %v449 = vld [vmem:[#allocation3 + $0x4f8] sm:$0xff]
        %v450 = vld [vmem:[#allocation3 + $0x500] sm:$0xff]
        %v451 = vld [vmem:[#allocation3 + $0x508] sm:$0xff]
        %v452 = vld [vmem:[#allocation3 + $0x510] sm:$0xff]
        %v453 = vld [vmem:[#allocation3 + $0x518] sm:$0xff]
        %v454 = vld [vmem:[#allocation3 + $0x520] sm:$0xff]
        %v455 = vld [vmem:[#allocation3 + $0x528] sm:$0xff]
        %v456 = vld [vmem:[#allocation3 + $0x530] sm:$0xff]
        %v457 = vld [vmem:[#allocation3 + $0x538] sm:$0xff]
        %v458 = vld [vmem:[#allocation3 + $0x540] sm:$0xff]
        %v459 = vld [vmem:[#allocation3 + $0x548] sm:$0xff]
        %v460 = vld [vmem:[#allocation3 + $0x550] sm:$0xff]
        %v461 = vld [vmem:[#allocation3 + $0x558] sm:$0xff]
        %v462 = vld [vmem:[#allocation3 + $0x560] sm:$0xff]
        %v463 = vld [vmem:[#allocation3 + $0x568] sm:$0xff]
        %v464 = vld [vmem:[#allocation3 + $0x570] sm:$0xff]
        %v465 = vld [vmem:[#allocation3 + $0x578] sm:$0xff]
        %v466 = vld [vmem:[#allocation3 + $0x580] sm:$0xff]
        %v467 = vld [vmem:[#allocation3 + $0x588] sm:$0xff]
        %v468 = vld [vmem:[#allocation3 + $0x590] sm:$0xff]
        %v469 = vld [vmem:[#allocation3 + $0x598] sm:$0xff]
        %v470 = vld [vmem:[#allocation3 + $0x5a0] sm:$0xff]
        %v471 = vld [vmem:[#allocation3 + $0x5a8] sm:$0xff]
        %v472 = vld [vmem:[#allocation3 + $0x5b0] sm:$0xff]
        %v473 = vld [vmem:[#allocation3 + $0x5b8] sm:$0xff]
        %v474 = vld [vmem:[#allocation3 + $0x5c0] sm:$0xff]
        %v475 = vld [vmem:[#allocation3 + $0x5c8] sm:$0xff]
        %v476 = vld [vmem:[#allocation3 + $0x5d0] sm:$0xff]
        %v477 = vld [vmem:[#allocation3 + $0x5d8] sm:$0xff]
        %v478 = vld [vmem:[#allocation3 + $0x5e0] sm:$0xff]
        %v479 = vld [vmem:[#allocation3 + $0x5e8] sm:$0xff]
        %v480 = vld [vmem:[#allocation3 + $0x5f0] sm:$0xff]
        %v481 = vld [vmem:[#allocation3 + $0x5f8] sm:$0xff]
        %v486 = vunpack.c.l.b16 %v286
        %v487 = vunpack.c.h.b16 %v286
        %v488 = vunpack.c.l.b16 %v287
        %v489 = vunpack.c.h.b16 %v287
        %v490 = vunpack.c.l.b16 %v288
        %v491 = vunpack.c.h.b16 %v288
        %v492 = vunpack.c.l.b16 %v289
        %v493 = vunpack.c.h.b16 %v289
        %v494 = vpack.c.b16 %v490, %v486
        %v495 = vpack.c.b16 %v491, %v487
        %v496 = vpack.c.b16 %v492, %v488
        %v497 = vpack.c.b16 %v493, %v489
        %v694 = vunpack.c.l.b16 %v290
        %v695 = vunpack.c.h.b16 %v290
        %v696 = vunpack.c.l.b16 %v291
        %v697 = vunpack.c.h.b16 %v291
        %v698 = vunpack.c.l.b16 %v292
        %v699 = vunpack.c.h.b16 %v292
        %v700 = vunpack.c.l.b16 %v293
        %v701 = vunpack.c.h.b16 %v293
        %v702 = vunpack.c.l.b16 %v294
        %v703 = vunpack.c.h.b16 %v294
        %v704 = vunpack.c.l.b16 %v295
        %v705 = vunpack.c.h.b16 %v295
        %v706 = vunpack.c.l.b16 %v296
        %v707 = vunpack.c.h.b16 %v296
        %v708 = vunpack.c.l.b16 %v297
        %v709 = vunpack.c.h.b16 %v297
        %v710 = vunpack.c.l.b16 %v298
        %v711 = vunpack.c.h.b16 %v298
        %v712 = vunpack.c.l.b16 %v299
        %v713 = vunpack.c.h.b16 %v299
        %v714 = vunpack.c.l.b16 %v300
        %v715 = vunpack.c.h.b16 %v300
        %v716 = vunpack.c.l.b16 %v301
        %v717 = vunpack.c.h.b16 %v301
        %v718 = vunpack.c.l.b16 %v302
        %v719 = vunpack.c.h.b16 %v302
        %v720 = vunpack.c.l.b16 %v303
        %v721 = vunpack.c.h.b16 %v303
        %v722 = vunpack.c.l.b16 %v304
        %v723 = vunpack.c.h.b16 %v304
        %v724 = vunpack.c.l.b16 %v305
        %v725 = vunpack.c.h.b16 %v305
        %v726 = vunpack.c.l.b16 %v306
        %v727 = vunpack.c.h.b16 %v306
        %v728 = vunpack.c.l.b16 %v307
        %v729 = vunpack.c.h.b16 %v307
        %v730 = vunpack.c.l.b16 %v308
        %v731 = vunpack.c.h.b16 %v308
        %v732 = vunpack.c.l.b16 %v309
        %v733 = vunpack.c.h.b16 %v309
        %v734 = vunpack.c.l.b16 %v310
        %v735 = vunpack.c.h.b16 %v310
        %v736 = vunpack.c.l.b16 %v311
        %v737 = vunpack.c.h.b16 %v311
        %v738 = vunpack.c.l.b16 %v312
        %v739 = vunpack.c.h.b16 %v312
        %v740 = vunpack.c.l.b16 %v313
        %v741 = vunpack.c.h.b16 %v313
        %v742 = vunpack.c.l.b16 %v314
        %v743 = vunpack.c.h.b16 %v314
        %v744 = vunpack.c.l.b16 %v315
        %v745 = vunpack.c.h.b16 %v315
        %v746 = vunpack.c.l.b16 %v316
        %v747 = vunpack.c.h.b16 %v316
        %v748 = vunpack.c.l.b16 %v317
        %v749 = vunpack.c.h.b16 %v317
        %v750 = vunpack.c.l.b16 %v318
        %v751 = vunpack.c.h.b16 %v318
        %v752 = vunpack.c.l.b16 %v319
        %v753 = vunpack.c.h.b16 %v319
        %v754 = vunpack.c.l.b16 %v320
        %v755 = vunpack.c.h.b16 %v320
        %v756 = vunpack.c.l.b16 %v321
        %v757 = vunpack.c.h.b16 %v321
        %v758 = vunpack.c.l.b16 %v322
        %v759 = vunpack.c.h.b16 %v322
        %v760 = vunpack.c.l.b16 %v323
        %v761 = vunpack.c.h.b16 %v323
        %v762 = vunpack.c.l.b16 %v324
        %v763 = vunpack.c.h.b16 %v324
        %v764 = vunpack.c.l.b16 %v325
        %v765 = vunpack.c.h.b16 %v325
        %v766 = vunpack.c.l.b16 %v326
        %v767 = vunpack.c.h.b16 %v326
        %v768 = vunpack.c.l.b16 %v327
        %v769 = vunpack.c.h.b16 %v327
        %v770 = vunpack.c.l.b16 %v328
        %v771 = vunpack.c.h.b16 %v328
        %v772 = vunpack.c.l.b16 %v329
        %v773 = vunpack.c.h.b16 %v329
        %v774 = vunpack.c.l.b16 %v330
        %v775 = vunpack.c.h.b16 %v330
        %v776 = vunpack.c.l.b16 %v331
        %v777 = vunpack.c.h.b16 %v331
        %v778 = vunpack.c.l.b16 %v332
        %v779 = vunpack.c.h.b16 %v332
        %v780 = vunpack.c.l.b16 %v333
        %v781 = vunpack.c.h.b16 %v333
        %v782 = vunpack.c.l.b16 %v334
        %v783 = vunpack.c.h.b16 %v334
        %v784 = vunpack.c.l.b16 %v335
        %v785 = vunpack.c.h.b16 %v335
        %v786 = vunpack.c.l.b16 %v336
        %v787 = vunpack.c.h.b16 %v336
        %v788 = vunpack.c.l.b16 %v337
        %v789 = vunpack.c.h.b16 %v337
        %v790 = vunpack.c.l.b16 %v338
        %v791 = vunpack.c.h.b16 %v338
        %v792 = vunpack.c.l.b16 %v339
        %v793 = vunpack.c.h.b16 %v339
        %v794 = vunpack.c.l.b16 %v340
        %v795 = vunpack.c.h.b16 %v340
        %v796 = vunpack.c.l.b16 %v341
        %v797 = vunpack.c.h.b16 %v341
        %v798 = vunpack.c.l.b16 %v342
        %v799 = vunpack.c.h.b16 %v342
        %v800 = vunpack.c.l.b16 %v343
        %v801 = vunpack.c.h.b16 %v343
        %v802 = vunpack.c.l.b16 %v344
        %v803 = vunpack.c.h.b16 %v344
        %v804 = vunpack.c.l.b16 %v345
        %v805 = vunpack.c.h.b16 %v345
        %v806 = vunpack.c.l.b16 %v346
        %v807 = vunpack.c.h.b16 %v346
        %v808 = vunpack.c.l.b16 %v347
        %v809 = vunpack.c.h.b16 %v347
        %v810 = vunpack.c.l.b16 %v348
        %v811 = vunpack.c.h.b16 %v348
        %v812 = vunpack.c.l.b16 %v349
        %v813 = vunpack.c.h.b16 %v349
        %v814 = vunpack.c.l.b16 %v350
        %v815 = vunpack.c.h.b16 %v350
        %v816 = vunpack.c.l.b16 %v351
        %v817 = vunpack.c.h.b16 %v351
        %v818 = vunpack.c.l.b16 %v352
        %v819 = vunpack.c.h.b16 %v352
        %v820 = vunpack.c.l.b16 %v353
        %v821 = vunpack.c.h.b16 %v353
        %v822 = vunpack.c.l.b16 %v354
        %v823 = vunpack.c.h.b16 %v354
        %v824 = vunpack.c.l.b16 %v355
        %v825 = vunpack.c.h.b16 %v355
        %v826 = vunpack.c.l.b16 %v356
        %v827 = vunpack.c.h.b16 %v356
        %v828 = vunpack.c.l.b16 %v357
        %v829 = vunpack.c.h.b16 %v357
        %v830 = vunpack.c.l.b16 %v358
        %v831 = vunpack.c.h.b16 %v358
        %v832 = vunpack.c.l.b16 %v359
        %v833 = vunpack.c.h.b16 %v359
        %v834 = vunpack.c.l.b16 %v360
        %v835 = vunpack.c.h.b16 %v360
        %v836 = vunpack.c.l.b16 %v361
        %v837 = vunpack.c.h.b16 %v361
        %v838 = vunpack.c.l.b16 %v362
        %v839 = vunpack.c.h.b16 %v362
        %v840 = vunpack.c.l.b16 %v363
        %v841 = vunpack.c.h.b16 %v363
        %v842 = vunpack.c.l.b16 %v364
        %v843 = vunpack.c.h.b16 %v364
        %v844 = vunpack.c.l.b16 %v365
        %v845 = vunpack.c.h.b16 %v365
        %v846 = vunpack.c.l.b16 %v366
        %v847 = vunpack.c.h.b16 %v366
        %v848 = vunpack.c.l.b16 %v367
        %v849 = vunpack.c.h.b16 %v367
        %v850 = vunpack.c.l.b16 %v368
        %v851 = vunpack.c.h.b16 %v368
        %v852 = vunpack.c.l.b16 %v369
        %v853 = vunpack.c.h.b16 %v369
        %v854 = vunpack.c.l.b16 %v370
        %v855 = vunpack.c.h.b16 %v370
        %v856 = vunpack.c.l.b16 %v371
        %v857 = vunpack.c.h.b16 %v371
        %v858 = vunpack.c.l.b16 %v372
        %v859 = vunpack.c.h.b16 %v372
        %v860 = vunpack.c.l.b16 %v373
        %v861 = vunpack.c.h.b16 %v373
        %v862 = vunpack.c.l.b16 %v374
        %v863 = vunpack.c.h.b16 %v374
        %v864 = vunpack.c.l.b16 %v375
        %v865 = vunpack.c.h.b16 %v375
        %v866 = vunpack.c.l.b16 %v376
        %v867 = vunpack.c.h.b16 %v376
        %v868 = vunpack.c.l.b16 %v377
        %v869 = vunpack.c.h.b16 %v377
        %v870 = vunpack.c.l.b16 %v378
        %v871 = vunpack.c.h.b16 %v378
        %v872 = vunpack.c.l.b16 %v379
        %v873 = vunpack.c.h.b16 %v379
        %v874 = vunpack.c.l.b16 %v380
        %v875 = vunpack.c.h.b16 %v380
        %v876 = vunpack.c.l.b16 %v381
        %v877 = vunpack.c.h.b16 %v381
        %v878 = vunpack.c.l.b16 %v382
        %v879 = vunpack.c.h.b16 %v382
        %v880 = vunpack.c.l.b16 %v383
        %v881 = vunpack.c.h.b16 %v383
        %v882 = vunpack.c.l.b16 %v384
        %v883 = vunpack.c.h.b16 %v384
        %v884 = vunpack.c.l.b16 %v385
        %v885 = vunpack.c.h.b16 %v385
        %v886 = vunpack.c.l.b16 %v386
        %v887 = vunpack.c.h.b16 %v386
        %v888 = vunpack.c.l.b16 %v387
        %v889 = vunpack.c.h.b16 %v387
        %v890 = vunpack.c.l.b16 %v388
        %v891 = vunpack.c.h.b16 %v388
        %v892 = vunpack.c.l.b16 %v389
        %v893 = vunpack.c.h.b16 %v389
        %v894 = vunpack.c.l.b16 %v390
        %v895 = vunpack.c.h.b16 %v390
        %v896 = vunpack.c.l.b16 %v391
        %v897 = vunpack.c.h.b16 %v391
        %v898 = vunpack.c.l.b16 %v392
        %v899 = vunpack.c.h.b16 %v392
        %v900 = vunpack.c.l.b16 %v393
        %v901 = vunpack.c.h.b16 %v393
        %v902 = vunpack.c.l.b16 %v394
        %v903 = vunpack.c.h.b16 %v394
        %v904 = vunpack.c.l.b16 %v395
        %v905 = vunpack.c.h.b16 %v395
        %v906 = vunpack.c.l.b16 %v396
        %v907 = vunpack.c.h.b16 %v396
        %v908 = vunpack.c.l.b16 %v397
        %v909 = vunpack.c.h.b16 %v397
        %v910 = vunpack.c.l.b16 %v398
        %v911 = vunpack.c.h.b16 %v398
        %v912 = vunpack.c.l.b16 %v399
        %v913 = vunpack.c.h.b16 %v399
        %v914 = vunpack.c.l.b16 %v400
        %v915 = vunpack.c.h.b16 %v400
        %v916 = vunpack.c.l.b16 %v401
        %v917 = vunpack.c.h.b16 %v401
        %v918 = vunpack.c.l.b16 %v402
        %v919 = vunpack.c.h.b16 %v402
        %v920 = vunpack.c.l.b16 %v403
        %v921 = vunpack.c.h.b16 %v403
        %v922 = vunpack.c.l.b16 %v404
        %v923 = vunpack.c.h.b16 %v404
        %v924 = vunpack.c.l.b16 %v405
        %v925 = vunpack.c.h.b16 %v405
        %v926 = vunpack.c.l.b16 %v406
        %v927 = vunpack.c.h.b16 %v406
        %v928 = vunpack.c.l.b16 %v407
        %v929 = vunpack.c.h.b16 %v407
        %v930 = vunpack.c.l.b16 %v408
        %v931 = vunpack.c.h.b16 %v408
        %v932 = vunpack.c.l.b16 %v409
        %v933 = vunpack.c.h.b16 %v409
        %v934 = vunpack.c.l.b16 %v410
        %v935 = vunpack.c.h.b16 %v410
        %v936 = vunpack.c.l.b16 %v411
        %v937 = vunpack.c.h.b16 %v411
        %v938 = vunpack.c.l.b16 %v412
        %v939 = vunpack.c.h.b16 %v412
        %v940 = vunpack.c.l.b16 %v413
        %v941 = vunpack.c.h.b16 %v413
        %v942 = vunpack.c.l.b16 %v414
        %v943 = vunpack.c.h.b16 %v414
        %v944 = vunpack.c.l.b16 %v415
        %v945 = vunpack.c.h.b16 %v415
        %v946 = vunpack.c.l.b16 %v416
        %v947 = vunpack.c.h.b16 %v416
        %v948 = vunpack.c.l.b16 %v417
        %v949 = vunpack.c.h.b16 %v417
        %v950 = vunpack.c.l.b16 %v418
        %v951 = vunpack.c.h.b16 %v418
        %v952 = vunpack.c.l.b16 %v419
        %v953 = vunpack.c.h.b16 %v419
        %v954 = vunpack.c.l.b16 %v420
        %v955 = vunpack.c.h.b16 %v420
        %v956 = vunpack.c.l.b16 %v421
        %v957 = vunpack.c.h.b16 %v421
        %v958 = vunpack.c.l.b16 %v422
        %v959 = vunpack.c.h.b16 %v422
        %v960 = vunpack.c.l.b16 %v423
        %v961 = vunpack.c.h.b16 %v423
        %v962 = vunpack.c.l.b16 %v424
        %v963 = vunpack.c.h.b16 %v424
        %v964 = vunpack.c.l.b16 %v425
        %v965 = vunpack.c.h.b16 %v425
        %v966 = vunpack.c.l.b16 %v426
        %v967 = vunpack.c.h.b16 %v426
        %v968 = vunpack.c.l.b16 %v427
        %v969 = vunpack.c.h.b16 %v427
        %v970 = vunpack.c.l.b16 %v428
        %v971 = vunpack.c.h.b16 %v428
        %v972 = vunpack.c.l.b16 %v429
        %v973 = vunpack.c.h.b16 %v429
        %v974 = vunpack.c.l.b16 %v430
        %v975 = vunpack.c.h.b16 %v430
        %v976 = vunpack.c.l.b16 %v431
        %v977 = vunpack.c.h.b16 %v431
        %v978 = vunpack.c.l.b16 %v432
        %v979 = vunpack.c.h.b16 %v432
        %v980 = vunpack.c.l.b16 %v433
        %v981 = vunpack.c.h.b16 %v433
        %v982 = vunpack.c.l.b16 %v434
        %v983 = vunpack.c.h.b16 %v434
        %v984 = vunpack.c.l.b16 %v435
        %v985 = vunpack.c.h.b16 %v435
        %v986 = vunpack.c.l.b16 %v436
        %v987 = vunpack.c.h.b16 %v436
        %v988 = vunpack.c.l.b16 %v437
        %v989 = vunpack.c.h.b16 %v437
        %v990 = vunpack.c.l.b16 %v438
        %v991 = vunpack.c.h.b16 %v438
        %v992 = vunpack.c.l.b16 %v439
        %v993 = vunpack.c.h.b16 %v439
        %v994 = vunpack.c.l.b16 %v440
        %v995 = vunpack.c.h.b16 %v440
        %v996 = vunpack.c.l.b16 %v441
        %v997 = vunpack.c.h.b16 %v441
        %v998 = vunpack.c.l.b16 %v442
        %v999 = vunpack.c.h.b16 %v442
        %v1000 = vunpack.c.l.b16 %v443
        %v1001 = vunpack.c.h.b16 %v443
        %v1002 = vunpack.c.l.b16 %v444
        %v1003 = vunpack.c.h.b16 %v444
        %v1004 = vunpack.c.l.b16 %v445
        %v1005 = vunpack.c.h.b16 %v445
        %v1006 = vunpack.c.l.b16 %v446
        %v1007 = vunpack.c.h.b16 %v446
        %v1008 = vunpack.c.l.b16 %v447
        %v1009 = vunpack.c.h.b16 %v447
        %v1010 = vunpack.c.l.b16 %v448
        %v1011 = vunpack.c.h.b16 %v448
        %v1012 = vunpack.c.l.b16 %v449
        %v1013 = vunpack.c.h.b16 %v449
        %v1014 = vunpack.c.l.b16 %v450
        %v1015 = vunpack.c.h.b16 %v450
        %v1016 = vunpack.c.l.b16 %v451
        %v1017 = vunpack.c.h.b16 %v451
        %v1018 = vunpack.c.l.b16 %v452
        %v1019 = vunpack.c.h.b16 %v452
        %v1020 = vunpack.c.l.b16 %v453
        %v1021 = vunpack.c.h.b16 %v453
        %v1022 = vunpack.c.l.b16 %v454
        %v1023 = vunpack.c.h.b16 %v454
        %v1024 = vunpack.c.l.b16 %v455
        %v1025 = vunpack.c.h.b16 %v455
        %v1026 = vunpack.c.l.b16 %v456
        %v1027 = vunpack.c.h.b16 %v456
        %v1028 = vunpack.c.l.b16 %v457
        %v1029 = vunpack.c.h.b16 %v457
        %v1030 = vunpack.c.l.b16 %v458
        %v1031 = vunpack.c.h.b16 %v458
        %v1032 = vunpack.c.l.b16 %v459
        %v1033 = vunpack.c.h.b16 %v459
        %v1034 = vunpack.c.l.b16 %v460
        %v1035 = vunpack.c.h.b16 %v460
        %v1036 = vunpack.c.l.b16 %v461
        %v1037 = vunpack.c.h.b16 %v461
        %v1038 = vunpack.c.l.b16 %v462
        %v1039 = vunpack.c.h.b16 %v462
        %v1040 = vunpack.c.l.b16 %v463
        %v1041 = vunpack.c.h.b16 %v463
        %v1042 = vunpack.c.l.b16 %v464
        %v1043 = vunpack.c.h.b16 %v464
        %v1044 = vunpack.c.l.b16 %v465
        %v1045 = vunpack.c.h.b16 %v465
        %v1046 = vunpack.c.l.b16 %v466
        %v1047 = vunpack.c.h.b16 %v466
        %v1048 = vunpack.c.l.b16 %v467
        %v1049 = vunpack.c.h.b16 %v467
        %v1050 = vunpack.c.l.b16 %v468
        %v1051 = vunpack.c.h.b16 %v468
        %v1052 = vunpack.c.l.b16 %v469
        %v1053 = vunpack.c.h.b16 %v469
        %v1054 = vunpack.c.l.b16 %v470
        %v1055 = vunpack.c.h.b16 %v470
        %v1056 = vunpack.c.l.b16 %v471
        %v1057 = vunpack.c.h.b16 %v471
        %v1058 = vunpack.c.l.b16 %v472
        %v1059 = vunpack.c.h.b16 %v472
        %v1060 = vunpack.c.l.b16 %v473
        %v1061 = vunpack.c.h.b16 %v473
        %v1062 = vunpack.c.l.b16 %v474
        %v1063 = vunpack.c.h.b16 %v474
        %v1064 = vunpack.c.l.b16 %v475
        %v1065 = vunpack.c.h.b16 %v475
        %v1066 = vunpack.c.l.b16 %v476
        %v1067 = vunpack.c.h.b16 %v476
        %v1068 = vunpack.c.l.b16 %v477
        %v1069 = vunpack.c.h.b16 %v477
        %v1070 = vunpack.c.l.b16 %v478
        %v1071 = vunpack.c.h.b16 %v478
        %v1072 = vunpack.c.l.b16 %v479
        %v1073 = vunpack.c.h.b16 %v479
        %v1074 = vunpack.c.l.b16 %v480
        %v1075 = vunpack.c.h.b16 %v480
        %v1076 = vunpack.c.l.b16 %v481
        %v1077 = vunpack.c.h.b16 %v481
        %v1078 = vpack.c.b16 %v700, %v694
        %v1079 = vpack.c.b16 %v701, %v695
        %v1080 = vpack.c.b16 %v702, %v696
        %v1081 = vpack.c.b16 %v703, %v697
        %v1082 = vpack.c.b16 %v704, %v698
        %v1083 = vpack.c.b16 %v705, %v699
        %v1084 = vpack.c.b16 %v712, %v706
        %v1085 = vpack.c.b16 %v713, %v707
        %v1086 = vpack.c.b16 %v714, %v708
        %v1087 = vpack.c.b16 %v715, %v709
        %v1088 = vpack.c.b16 %v716, %v710
        %v1089 = vpack.c.b16 %v717, %v711
        %v1090 = vpack.c.b16 %v724, %v718
        %v1091 = vpack.c.b16 %v725, %v719
        %v1092 = vpack.c.b16 %v726, %v720
        %v1093 = vpack.c.b16 %v727, %v721
        %v1094 = vpack.c.b16 %v728, %v722
        %v1095 = vpack.c.b16 %v729, %v723
        %v1096 = vpack.c.b16 %v736, %v730
        %v1097 = vpack.c.b16 %v737, %v731
        %v1098 = vpack.c.b16 %v738, %v732
        %v1099 = vpack.c.b16 %v739, %v733
        %v1100 = vpack.c.b16 %v740, %v734
        %v1101 = vpack.c.b16 %v741, %v735
        %v1102 = vpack.c.b16 %v748, %v742
        %v1103 = vpack.c.b16 %v749, %v743
        %v1104 = vpack.c.b16 %v750, %v744
        %v1105 = vpack.c.b16 %v751, %v745
        %v1106 = vpack.c.b16 %v752, %v746
        %v1107 = vpack.c.b16 %v753, %v747
        %v1108 = vpack.c.b16 %v760, %v754
        %v1109 = vpack.c.b16 %v761, %v755
        %v1110 = vpack.c.b16 %v762, %v756
        %v1111 = vpack.c.b16 %v763, %v757
        %v1112 = vpack.c.b16 %v764, %v758
        %v1113 = vpack.c.b16 %v765, %v759
        %v1114 = vpack.c.b16 %v772, %v766
        %v1115 = vpack.c.b16 %v773, %v767
        %v1116 = vpack.c.b16 %v774, %v768
        %v1117 = vpack.c.b16 %v775, %v769
        %v1118 = vpack.c.b16 %v776, %v770
        %v1119 = vpack.c.b16 %v777, %v771
        %v1120 = vpack.c.b16 %v784, %v778
        %v1121 = vpack.c.b16 %v785, %v779
        %v1122 = vpack.c.b16 %v786, %v780
        %v1123 = vpack.c.b16 %v787, %v781
        %v1124 = vpack.c.b16 %v788, %v782
        %v1125 = vpack.c.b16 %v789, %v783
        %v1126 = vpack.c.b16 %v796, %v790
        %v1127 = vpack.c.b16 %v797, %v791
        %v1128 = vpack.c.b16 %v798, %v792
        %v1129 = vpack.c.b16 %v799, %v793
        %v1130 = vpack.c.b16 %v800, %v794
        %v1131 = vpack.c.b16 %v801, %v795
        %v1132 = vpack.c.b16 %v808, %v802
        %v1133 = vpack.c.b16 %v809, %v803
        %v1134 = vpack.c.b16 %v810, %v804
        %v1135 = vpack.c.b16 %v811, %v805
        %v1136 = vpack.c.b16 %v812, %v806
        %v1137 = vpack.c.b16 %v813, %v807
        %v1138 = vpack.c.b16 %v820, %v814
        %v1139 = vpack.c.b16 %v821, %v815
        %v1140 = vpack.c.b16 %v822, %v816
        %v1141 = vpack.c.b16 %v823, %v817
        %v1142 = vpack.c.b16 %v824, %v818
        %v1143 = vpack.c.b16 %v825, %v819
        %v1144 = vpack.c.b16 %v832, %v826
        %v1145 = vpack.c.b16 %v833, %v827
        %v1146 = vpack.c.b16 %v834, %v828
        %v1147 = vpack.c.b16 %v835, %v829
        %v1148 = vpack.c.b16 %v836, %v830
        %v1149 = vpack.c.b16 %v837, %v831
        %v1150 = vpack.c.b16 %v844, %v838
        %v1151 = vpack.c.b16 %v845, %v839
        %v1152 = vpack.c.b16 %v846, %v840
        %v1153 = vpack.c.b16 %v847, %v841
        %v1154 = vpack.c.b16 %v848, %v842
        %v1155 = vpack.c.b16 %v849, %v843
        %v1156 = vpack.c.b16 %v856, %v850
        %v1157 = vpack.c.b16 %v857, %v851
        %v1158 = vpack.c.b16 %v858, %v852
        %v1159 = vpack.c.b16 %v859, %v853
        %v1160 = vpack.c.b16 %v860, %v854
        %v1161 = vpack.c.b16 %v861, %v855
        %v1162 = vpack.c.b16 %v868, %v862
        %v1163 = vpack.c.b16 %v869, %v863
        %v1164 = vpack.c.b16 %v870, %v864
        %v1165 = vpack.c.b16 %v871, %v865
        %v1166 = vpack.c.b16 %v872, %v866
        %v1167 = vpack.c.b16 %v873, %v867
        %v1168 = vpack.c.b16 %v880, %v874
        %v1169 = vpack.c.b16 %v881, %v875
        %v1170 = vpack.c.b16 %v882, %v876
        %v1171 = vpack.c.b16 %v883, %v877
        %v1172 = vpack.c.b16 %v884, %v878
        %v1173 = vpack.c.b16 %v885, %v879
        %v1174 = vpack.c.b16 %v892, %v886
        %v1175 = vpack.c.b16 %v893, %v887
        %v1176 = vpack.c.b16 %v894, %v888
        %v1177 = vpack.c.b16 %v895, %v889
        %v1178 = vpack.c.b16 %v896, %v890
        %v1179 = vpack.c.b16 %v897, %v891
        %v1180 = vpack.c.b16 %v904, %v898
        %v1181 = vpack.c.b16 %v905, %v899
        %v1182 = vpack.c.b16 %v906, %v900
        %v1183 = vpack.c.b16 %v907, %v901
        %v1184 = vpack.c.b16 %v908, %v902
        %v1185 = vpack.c.b16 %v909, %v903
        %v1186 = vpack.c.b16 %v916, %v910
        %v1187 = vpack.c.b16 %v917, %v911
        %v1188 = vpack.c.b16 %v918, %v912
        %v1189 = vpack.c.b16 %v919, %v913
        %v1190 = vpack.c.b16 %v920, %v914
        %v1191 = vpack.c.b16 %v921, %v915
        %v1192 = vpack.c.b16 %v928, %v922
        %v1193 = vpack.c.b16 %v929, %v923
        %v1194 = vpack.c.b16 %v930, %v924
        %v1195 = vpack.c.b16 %v931, %v925
        %v1196 = vpack.c.b16 %v932, %v926
        %v1197 = vpack.c.b16 %v933, %v927
        %v1198 = vpack.c.b16 %v940, %v934
        %v1199 = vpack.c.b16 %v941, %v935
        %v1200 = vpack.c.b16 %v942, %v936
        %v1201 = vpack.c.b16 %v943, %v937
        %v1202 = vpack.c.b16 %v944, %v938
        %v1203 = vpack.c.b16 %v945, %v939
        %v1204 = vpack.c.b16 %v952, %v946
        %v1205 = vpack.c.b16 %v953, %v947
        %v1206 = vpack.c.b16 %v954, %v948
        %v1207 = vpack.c.b16 %v955, %v949
        %v1208 = vpack.c.b16 %v956, %v950
        %v1209 = vpack.c.b16 %v957, %v951
        %v1210 = vpack.c.b16 %v964, %v958
        %v1211 = vpack.c.b16 %v965, %v959
        %v1212 = vpack.c.b16 %v966, %v960
        %v1213 = vpack.c.b16 %v967, %v961
        %v1214 = vpack.c.b16 %v968, %v962
        %v1215 = vpack.c.b16 %v969, %v963
        %v1216 = vpack.c.b16 %v976, %v970
        %v1217 = vpack.c.b16 %v977, %v971
        %v1218 = vpack.c.b16 %v978, %v972
        %v1219 = vpack.c.b16 %v979, %v973
        %v1220 = vpack.c.b16 %v980, %v974
        %v1221 = vpack.c.b16 %v981, %v975
        %v1222 = vpack.c.b16 %v988, %v982
        %v1223 = vpack.c.b16 %v989, %v983
        %v1224 = vpack.c.b16 %v990, %v984
        %v1225 = vpack.c.b16 %v991, %v985
        %v1226 = vpack.c.b16 %v992, %v986
        %v1227 = vpack.c.b16 %v993, %v987
        %v1228 = vpack.c.b16 %v1000, %v994
        %v1229 = vpack.c.b16 %v1001, %v995
        %v1230 = vpack.c.b16 %v1002, %v996
        %v1231 = vpack.c.b16 %v1003, %v997
        %v1232 = vpack.c.b16 %v1004, %v998
        %v1233 = vpack.c.b16 %v1005, %v999
        %v1234 = vpack.c.b16 %v1012, %v1006
        %v1235 = vpack.c.b16 %v1013, %v1007
        %v1236 = vpack.c.b16 %v1014, %v1008
        %v1237 = vpack.c.b16 %v1015, %v1009
        %v1238 = vpack.c.b16 %v1016, %v1010
        %v1239 = vpack.c.b16 %v1017, %v1011
        %v1240 = vpack.c.b16 %v1024, %v1018
        %v1241 = vpack.c.b16 %v1025, %v1019
        %v1242 = vpack.c.b16 %v1026, %v1020
        %v1243 = vpack.c.b16 %v1027, %v1021
        %v1244 = vpack.c.b16 %v1028, %v1022
        %v1245 = vpack.c.b16 %v1029, %v1023
        %v1246 = vpack.c.b16 %v1036, %v1030
        %v1247 = vpack.c.b16 %v1037, %v1031
        %v1248 = vpack.c.b16 %v1038, %v1032
        %v1249 = vpack.c.b16 %v1039, %v1033
        %v1250 = vpack.c.b16 %v1040, %v1034
        %v1251 = vpack.c.b16 %v1041, %v1035
        %v1252 = vpack.c.b16 %v1048, %v1042
        %v1253 = vpack.c.b16 %v1049, %v1043
        %v1254 = vpack.c.b16 %v1050, %v1044
        %v1255 = vpack.c.b16 %v1051, %v1045
        %v1256 = vpack.c.b16 %v1052, %v1046
        %v1257 = vpack.c.b16 %v1053, %v1047
        %v1258 = vpack.c.b16 %v1060, %v1054
        %v1259 = vpack.c.b16 %v1061, %v1055
        %v1260 = vpack.c.b16 %v1062, %v1056
        %v1261 = vpack.c.b16 %v1063, %v1057
        %v1262 = vpack.c.b16 %v1064, %v1058
        %v1263 = vpack.c.b16 %v1065, %v1059
        %v1264 = vpack.c.b16 %v1072, %v1066
        %v1265 = vpack.c.b16 %v1073, %v1067
        %v1266 = vpack.c.b16 %v1074, %v1068
        %v1267 = vpack.c.b16 %v1075, %v1069
        %v1268 = vpack.c.b16 %v1076, %v1070
        %v1269 = vpack.c.b16 %v1077, %v1071
        %1462 = vmatpush.bf16.msra.mxu0 %v1120
        %1463 = vmatpush.bf16.msra.mxu0 %v1114
        %1464 = vmatpush.bf16.msra.mxu0 %v1108
        %1465 = vmatpush.bf16.msra.mxu0 %v1102
        %1466 = vmatpush.bf16.msra.mxu0 %v1096
        %1467 = vmatpush.bf16.msra.mxu0 %v1090
        %1468 = vmatpush.bf16.msra.mxu0 %v1084
        %1469 = vmatpush.bf16.msra.mxu0 %v1078
        %1470 = vmatmul.bf16.gmra.mxu0 %v494
        %v1471 = vpop.f32.mrf.mxu0
        %v1472 = vadd.f32 0.0, %v1471
        %v1473 = vpop.f32.mrf.mxu0
        %v1474 = vadd.f32 0.0, %v1473
        %1475 = vdwg.mxu0
        %1476 = vmatpush.bf16.msra.mxu0 %v1168
        %1477 = vmatpush.bf16.msra.mxu0 %v1162
        %1478 = vmatpush.bf16.msra.mxu0 %v1156
        %1479 = vmatpush.bf16.msra.mxu0 %v1150
        %1480 = vmatpush.bf16.msra.mxu0 %v1144
        %1481 = vmatpush.bf16.msra.mxu0 %v1138
        %1482 = vmatpush.bf16.msra.mxu0 %v1132
        %1483 = vmatpush.bf16.msra.mxu0 %v1126
        %1484 = vmatmul.bf16.gmra.mxu0 %v495
        %v1485 = vpop.f32.mrf.mxu0
        %v1486 = vadd.f32 %v1472, %v1485
        %v1487 = vpop.f32.mrf.mxu0
        %v1488 = vadd.f32 %v1474, %v1487
        %1489 = vdwg.mxu0
        %1490 = vmatpush.bf16.msra.mxu0 %v1216
        %1491 = vmatpush.bf16.msra.mxu0 %v1210
        %1492 = vmatpush.bf16.msra.mxu0 %v1204
        %1493 = vmatpush.bf16.msra.mxu0 %v1198
        %1494 = vmatpush.bf16.msra.mxu0 %v1192
        %1495 = vmatpush.bf16.msra.mxu0 %v1186
        %1496 = vmatpush.bf16.msra.mxu0 %v1180
        %1497 = vmatpush.bf16.msra.mxu0 %v1174
        %1498 = vmatmul.bf16.gmra.mxu0 %v496
        %v1499 = vpop.f32.mrf.mxu0
        %v1500 = vadd.f32 %v1486, %v1499
        %v1501 = vpop.f32.mrf.mxu0
        %v1502 = vadd.f32 %v1488, %v1501
        %1503 = vdwg.mxu0
        %1504 = vmatpush.bf16.msra.mxu0 %v1264
        %1505 = vmatpush.bf16.msra.mxu0 %v1258
        %1506 = vmatpush.bf16.msra.mxu0 %v1252
        %1507 = vmatpush.bf16.msra.mxu0 %v1246
        %1508 = vmatpush.bf16.msra.mxu0 %v1240
        %1509 = vmatpush.bf16.msra.mxu0 %v1234
        %1510 = vmatpush.bf16.msra.mxu0 %v1228
        %1511 = vmatpush.bf16.msra.mxu0 %v1222
        %1512 = vmatmul.bf16.gmra.mxu0 %v497
        %v1513 = vpop.f32.mrf.mxu0
        %v1514 = vadd.f32 %v1500, %v1513
        %v1515 = vpop.f32.mrf.mxu0
        %v1516 = vadd.f32 %v1502, %v1515
        %1517 = vdwg.mxu0
        %1518 = vmatpush.bf16.msra.mxu0 %v1121
        %1519 = vmatpush.bf16.msra.mxu0 %v1115
        %1520 = vmatpush.bf16.msra.mxu0 %v1109
        %1521 = vmatpush.bf16.msra.mxu0 %v1103
        %1522 = vmatpush.bf16.msra.mxu0 %v1097
        %1523 = vmatpush.bf16.msra.mxu0 %v1091
        %1524 = vmatpush.bf16.msra.mxu0 %v1085
        %1525 = vmatpush.bf16.msra.mxu0 %v1079
        %1526 = vmatmul.bf16.gmra.mxu0 %v494
        %v1527 = vpop.f32.mrf.mxu0
        %v1528 = vadd.f32 0.0, %v1527
        %v1529 = vpop.f32.mrf.mxu0
        %v1530 = vadd.f32 0.0, %v1529
        %1531 = vdwg.mxu0
        %1532 = vmatpush.bf16.msra.mxu0 %v1169
        %1533 = vmatpush.bf16.msra.mxu0 %v1163
        %1534 = vmatpush.bf16.msra.mxu0 %v1157
        %1535 = vmatpush.bf16.msra.mxu0 %v1151
        %1536 = vmatpush.bf16.msra.mxu0 %v1145
        %1537 = vmatpush.bf16.msra.mxu0 %v1139
        %1538 = vmatpush.bf16.msra.mxu0 %v1133
        %1539 = vmatpush.bf16.msra.mxu0 %v1127
        %1540 = vmatmul.bf16.gmra.mxu0 %v495
        %v1541 = vpop.f32.mrf.mxu0
        %v1542 = vadd.f32 %v1528, %v1541
        %v1543 = vpop.f32.mrf.mxu0
        %v1544 = vadd.f32 %v1530, %v1543
        %1545 = vdwg.mxu0
        %1546 = vmatpush.bf16.msra.mxu0 %v1217
        %1547 = vmatpush.bf16.msra.mxu0 %v1211
        %1548 = vmatpush.bf16.msra.mxu0 %v1205
        %1549 = vmatpush.bf16.msra.mxu0 %v1199
        %1550 = vmatpush.bf16.msra.mxu0 %v1193
        %1551 = vmatpush.bf16.msra.mxu0 %v1187
        %1552 = vmatpush.bf16.msra.mxu0 %v1181
        %1553 = vmatpush.bf16.msra.mxu0 %v1175
        %1554 = vmatmul.bf16.gmra.mxu0 %v496
        %v1555 = vpop.f32.mrf.mxu0
        %v1556 = vadd.f32 %v1542, %v1555
        %v1557 = vpop.f32.mrf.mxu0
        %v1558 = vadd.f32 %v1544, %v1557
        %1559 = vdwg.mxu0
        %1560 = vmatpush.bf16.msra.mxu0 %v1265
        %1561 = vmatpush.bf16.msra.mxu0 %v1259
        %1562 = vmatpush.bf16.msra.mxu0 %v1253
        %1563 = vmatpush.bf16.msra.mxu0 %v1247
        %1564 = vmatpush.bf16.msra.mxu0 %v1241
        %1565 = vmatpush.bf16.msra.mxu0 %v1235
        %1566 = vmatpush.bf16.msra.mxu0 %v1229
        %1567 = vmatpush.bf16.msra.mxu0 %v1223
        %1568 = vmatmul.bf16.gmra.mxu0 %v497
        %v1569 = vpop.f32.mrf.mxu0
        %v1570 = vadd.f32 %v1556, %v1569
        %v1571 = vpop.f32.mrf.mxu0
        %v1572 = vadd.f32 %v1558, %v1571
        %1573 = vdwg.mxu0
        %1574 = vmatpush.bf16.msra.mxu0 %v1122
        %1575 = vmatpush.bf16.msra.mxu0 %v1116
        %1576 = vmatpush.bf16.msra.mxu0 %v1110
        %1577 = vmatpush.bf16.msra.mxu0 %v1104
        %1578 = vmatpush.bf16.msra.mxu0 %v1098
        %1579 = vmatpush.bf16.msra.mxu0 %v1092
        %1580 = vmatpush.bf16.msra.mxu0 %v1086
        %1581 = vmatpush.bf16.msra.mxu0 %v1080
        %1582 = vmatmul.bf16.gmra.mxu0 %v494
        %v1583 = vpop.f32.mrf.mxu0
        %v1584 = vadd.f32 0.0, %v1583
        %v1585 = vpop.f32.mrf.mxu0
        %v1586 = vadd.f32 0.0, %v1585
        %1587 = vdwg.mxu0
        %1588 = vmatpush.bf16.msra.mxu0 %v1170
        %1589 = vmatpush.bf16.msra.mxu0 %v1164
        %1590 = vmatpush.bf16.msra.mxu0 %v1158
        %1591 = vmatpush.bf16.msra.mxu0 %v1152
        %1592 = vmatpush.bf16.msra.mxu0 %v1146
        %1593 = vmatpush.bf16.msra.mxu0 %v1140
        %1594 = vmatpush.bf16.msra.mxu0 %v1134
        %1595 = vmatpush.bf16.msra.mxu0 %v1128
        %1596 = vmatmul.bf16.gmra.mxu0 %v495
        %v1597 = vpop.f32.mrf.mxu0
        %v1598 = vadd.f32 %v1584, %v1597
        %v1599 = vpop.f32.mrf.mxu0
        %v1600 = vadd.f32 %v1586, %v1599
        %1601 = vdwg.mxu0
        %1602 = vmatpush.bf16.msra.mxu0 %v1218
        %1603 = vmatpush.bf16.msra.mxu0 %v1212
        %1604 = vmatpush.bf16.msra.mxu0 %v1206
        %1605 = vmatpush.bf16.msra.mxu0 %v1200
        %1606 = vmatpush.bf16.msra.mxu0 %v1194
        %1607 = vmatpush.bf16.msra.mxu0 %v1188
        %1608 = vmatpush.bf16.msra.mxu0 %v1182
        %1609 = vmatpush.bf16.msra.mxu0 %v1176
        %1610 = vmatmul.bf16.gmra.mxu0 %v496
        %v1611 = vpop.f32.mrf.mxu0
        %v1612 = vadd.f32 %v1598, %v1611
        %v1613 = vpop.f32.mrf.mxu0
        %v1614 = vadd.f32 %v1600, %v1613
        %1615 = vdwg.mxu0
        %1616 = vmatpush.bf16.msra.mxu0 %v1266
        %1617 = vmatpush.bf16.msra.mxu0 %v1260
        %1618 = vmatpush.bf16.msra.mxu0 %v1254
        %1619 = vmatpush.bf16.msra.mxu0 %v1248
        %1620 = vmatpush.bf16.msra.mxu0 %v1242
        %1621 = vmatpush.bf16.msra.mxu0 %v1236
        %1622 = vmatpush.bf16.msra.mxu0 %v1230
        %1623 = vmatpush.bf16.msra.mxu0 %v1224
        %1624 = vmatmul.bf16.gmra.mxu0 %v497
        %v1625 = vpop.f32.mrf.mxu0
        %v1626 = vadd.f32 %v1612, %v1625
        %v1627 = vpop.f32.mrf.mxu0
        %v1628 = vadd.f32 %v1614, %v1627
        %1629 = vdwg.mxu0
        %1630 = vmatpush.bf16.msra.mxu0 %v1123
        %1631 = vmatpush.bf16.msra.mxu0 %v1117
        %1632 = vmatpush.bf16.msra.mxu0 %v1111
        %1633 = vmatpush.bf16.msra.mxu0 %v1105
        %1634 = vmatpush.bf16.msra.mxu0 %v1099
        %1635 = vmatpush.bf16.msra.mxu0 %v1093
        %1636 = vmatpush.bf16.msra.mxu0 %v1087
        %1637 = vmatpush.bf16.msra.mxu0 %v1081
        %1638 = vmatmul.bf16.gmra.mxu0 %v494
        %v1639 = vpop.f32.mrf.mxu0
        %v1640 = vadd.f32 0.0, %v1639
        %v1641 = vpop.f32.mrf.mxu0
        %v1642 = vadd.f32 0.0, %v1641
        %1643 = vdwg.mxu0
        %1644 = vmatpush.bf16.msra.mxu0 %v1171
        %1645 = vmatpush.bf16.msra.mxu0 %v1165
        %1646 = vmatpush.bf16.msra.mxu0 %v1159
        %1647 = vmatpush.bf16.msra.mxu0 %v1153
        %1648 = vmatpush.bf16.msra.mxu0 %v1147
        %1649 = vmatpush.bf16.msra.mxu0 %v1141
        %1650 = vmatpush.bf16.msra.mxu0 %v1135
        %1651 = vmatpush.bf16.msra.mxu0 %v1129
        %1652 = vmatmul.bf16.gmra.mxu0 %v495
        %v1653 = vpop.f32.mrf.mxu0
        %v1654 = vadd.f32 %v1640, %v1653
        %v1655 = vpop.f32.mrf.mxu0
        %v1656 = vadd.f32 %v1642, %v1655
        %1657 = vdwg.mxu0
        %1658 = vmatpush.bf16.msra.mxu0 %v1219
        %1659 = vmatpush.bf16.msra.mxu0 %v1213
        %1660 = vmatpush.bf16.msra.mxu0 %v1207
        %1661 = vmatpush.bf16.msra.mxu0 %v1201
        %1662 = vmatpush.bf16.msra.mxu0 %v1195
        %1663 = vmatpush.bf16.msra.mxu0 %v1189
        %1664 = vmatpush.bf16.msra.mxu0 %v1183
        %1665 = vmatpush.bf16.msra.mxu0 %v1177
        %1666 = vmatmul.bf16.gmra.mxu0 %v496
        %v1667 = vpop.f32.mrf.mxu0
        %v1668 = vadd.f32 %v1654, %v1667
        %v1669 = vpop.f32.mrf.mxu0
        %v1670 = vadd.f32 %v1656, %v1669
        %1671 = vdwg.mxu0
        %1672 = vmatpush.bf16.msra.mxu0 %v1267
        %1673 = vmatpush.bf16.msra.mxu0 %v1261
        %1674 = vmatpush.bf16.msra.mxu0 %v1255
        %1675 = vmatpush.bf16.msra.mxu0 %v1249
        %1676 = vmatpush.bf16.msra.mxu0 %v1243
        %1677 = vmatpush.bf16.msra.mxu0 %v1237
        %1678 = vmatpush.bf16.msra.mxu0 %v1231
        %1679 = vmatpush.bf16.msra.mxu0 %v1225
        %1680 = vmatmul.bf16.gmra.mxu0 %v497
        %v1681 = vpop.f32.mrf.mxu0
        %v1682 = vadd.f32 %v1668, %v1681
        %v1683 = vpop.f32.mrf.mxu0
        %v1684 = vadd.f32 %v1670, %v1683
        %1685 = vdwg.mxu0
        %1686 = vmatpush.bf16.msra.mxu0 %v1124
        %1687 = vmatpush.bf16.msra.mxu0 %v1118
        %1688 = vmatpush.bf16.msra.mxu0 %v1112
        %1689 = vmatpush.bf16.msra.mxu0 %v1106
        %1690 = vmatpush.bf16.msra.mxu0 %v1100
        %1691 = vmatpush.bf16.msra.mxu0 %v1094
        %1692 = vmatpush.bf16.msra.mxu0 %v1088
        %1693 = vmatpush.bf16.msra.mxu0 %v1082
        %1694 = vmatmul.bf16.gmra.mxu0 %v494
        %v1695 = vpop.f32.mrf.mxu0
        %v1696 = vadd.f32 0.0, %v1695
        %v1697 = vpop.f32.mrf.mxu0
        %v1698 = vadd.f32 0.0, %v1697
        %1699 = vdwg.mxu0
        %1700 = vmatpush.bf16.msra.mxu0 %v1172
        %1701 = vmatpush.bf16.msra.mxu0 %v1166
        %1702 = vmatpush.bf16.msra.mxu0 %v1160
        %1703 = vmatpush.bf16.msra.mxu0 %v1154
        %1704 = vmatpush.bf16.msra.mxu0 %v1148
        %1705 = vmatpush.bf16.msra.mxu0 %v1142
        %1706 = vmatpush.bf16.msra.mxu0 %v1136
        %1707 = vmatpush.bf16.msra.mxu0 %v1130
        %1708 = vmatmul.bf16.gmra.mxu0 %v495
        %v1709 = vpop.f32.mrf.mxu0
        %v1710 = vadd.f32 %v1696, %v1709
        %v1711 = vpop.f32.mrf.mxu0
        %v1712 = vadd.f32 %v1698, %v1711
        %1713 = vdwg.mxu0
        %1714 = vmatpush.bf16.msra.mxu0 %v1220
        %1715 = vmatpush.bf16.msra.mxu0 %v1214
        %1716 = vmatpush.bf16.msra.mxu0 %v1208
        %1717 = vmatpush.bf16.msra.mxu0 %v1202
        %1718 = vmatpush.bf16.msra.mxu0 %v1196
        %1719 = vmatpush.bf16.msra.mxu0 %v1190
        %1720 = vmatpush.bf16.msra.mxu0 %v1184
        %1721 = vmatpush.bf16.msra.mxu0 %v1178
        %1722 = vmatmul.bf16.gmra.mxu0 %v496
        %v1723 = vpop.f32.mrf.mxu0
        %v1724 = vadd.f32 %v1710, %v1723
        %v1725 = vpop.f32.mrf.mxu0
        %v1726 = vadd.f32 %v1712, %v1725
        %1727 = vdwg.mxu0
        %1728 = vmatpush.bf16.msra.mxu0 %v1268
        %1729 = vmatpush.bf16.msra.mxu0 %v1262
        %1730 = vmatpush.bf16.msra.mxu0 %v1256
        %1731 = vmatpush.bf16.msra.mxu0 %v1250
        %1732 = vmatpush.bf16.msra.mxu0 %v1244
        %1733 = vmatpush.bf16.msra.mxu0 %v1238
        %1734 = vmatpush.bf16.msra.mxu0 %v1232
        %1735 = vmatpush.bf16.msra.mxu0 %v1226
        %1736 = vmatmul.bf16.gmra.mxu0 %v497
        %v1737 = vpop.f32.mrf.mxu0
        %v1738 = vadd.f32 %v1724, %v1737
        %v1739 = vpop.f32.mrf.mxu0
        %v1740 = vadd.f32 %v1726, %v1739
        %1741 = vdwg.mxu0
        %1742 = vmatpush.bf16.msra.mxu0 %v1125
        %1743 = vmatpush.bf16.msra.mxu0 %v1119
        %1744 = vmatpush.bf16.msra.mxu0 %v1113
        %1745 = vmatpush.bf16.msra.mxu0 %v1107
        %1746 = vmatpush.bf16.msra.mxu0 %v1101
        %1747 = vmatpush.bf16.msra.mxu0 %v1095
        %1748 = vmatpush.bf16.msra.mxu0 %v1089
        %1749 = vmatpush.bf16.msra.mxu0 %v1083
        %1750 = vmatmul.bf16.gmra.mxu0 %v494
        %v1751 = vpop.f32.mrf.mxu0
        %v1752 = vadd.f32 0.0, %v1751
        %v1753 = vpop.f32.mrf.mxu0
        %v1754 = vadd.f32 0.0, %v1753
        %1755 = vdwg.mxu0
        %1756 = vmatpush.bf16.msra.mxu0 %v1173
        %1757 = vmatpush.bf16.msra.mxu0 %v1167
        %1758 = vmatpush.bf16.msra.mxu0 %v1161
        %1759 = vmatpush.bf16.msra.mxu0 %v1155
        %1760 = vmatpush.bf16.msra.mxu0 %v1149
        %1761 = vmatpush.bf16.msra.mxu0 %v1143
        %1762 = vmatpush.bf16.msra.mxu0 %v1137
        %1763 = vmatpush.bf16.msra.mxu0 %v1131
        %1764 = vmatmul.bf16.gmra.mxu0 %v495
        %v1765 = vpop.f32.mrf.mxu0
        %v1766 = vadd.f32 %v1752, %v1765
        %v1767 = vpop.f32.mrf.mxu0
        %v1768 = vadd.f32 %v1754, %v1767
        %1769 = vdwg.mxu0
        %1770 = vmatpush.bf16.msra.mxu0 %v1221
        %1771 = vmatpush.bf16.msra.mxu0 %v1215
        %1772 = vmatpush.bf16.msra.mxu0 %v1209
        %1773 = vmatpush.bf16.msra.mxu0 %v1203
        %1774 = vmatpush.bf16.msra.mxu0 %v1197
        %1775 = vmatpush.bf16.msra.mxu0 %v1191
        %1776 = vmatpush.bf16.msra.mxu0 %v1185
        %1777 = vmatpush.bf16.msra.mxu0 %v1179
        %1778 = vmatmul.bf16.gmra.mxu0 %v496
        %v1779 = vpop.f32.mrf.mxu0
        %v1780 = vadd.f32 %v1766, %v1779
        %v1781 = vpop.f32.mrf.mxu0
        %v1782 = vadd.f32 %v1768, %v1781
        %1783 = vdwg.mxu0
        %1784 = vmatpush.bf16.msra.mxu0 %v1269
        %1785 = vmatpush.bf16.msra.mxu0 %v1263
        %1786 = vmatpush.bf16.msra.mxu0 %v1257
        %1787 = vmatpush.bf16.msra.mxu0 %v1251
        %1788 = vmatpush.bf16.msra.mxu0 %v1245
        %1789 = vmatpush.bf16.msra.mxu0 %v1239
        %1790 = vmatpush.bf16.msra.mxu0 %v1233
        %1791 = vmatpush.bf16.msra.mxu0 %v1227
        %1792 = vmatmul.bf16.gmra.mxu0 %v497
        %v1793 = vpop.f32.mrf.mxu0
        %v1794 = vadd.f32 %v1780, %v1793
        %v1795 = vpop.f32.mrf.mxu0
        %v1796 = vadd.f32 %v1782, %v1795
        %1797 = vdwg.mxu0
        %v1798 = vmul.f32 %v1514, %v1514
        %v1799 = vmul.f32 %v1570, %v1570
        %v1800 = vmul.f32 %v1626, %v1626
        %v1801 = vmul.f32 %v1516, %v1516
        %v1802 = vmul.f32 %v1572, %v1572
        %v1803 = vmul.f32 %v1628, %v1628
        %v1804 = vmul.f32 %v1682, %v1682
        %v1805 = vmul.f32 %v1738, %v1738
        %v1806 = vmul.f32 %v1794, %v1794
        %v1807 = vmul.f32 %v1684, %v1684
        %v1808 = vmul.f32 %v1740, %v1740
        %v1809 = vmul.f32 %v1796, %v1796
        %v1810 = vadd.f32 %v1798, %v1804
        %v1811 = vadd.f32 %v1799, %v1805
        %v1812 = vadd.f32 %v1800, %v1806
        %v1813 = vadd.f32 %v1801, %v1807
        %v1814 = vadd.f32 %v1802, %v1808
        %v1815 = vadd.f32 %v1803, %v1809
        %v1816 = vadd.f32 %v1810, 1.1754944e-38
        %v1817 = vadd.f32 %v1811, 1.1754944e-38
        %v1818 = vadd.f32 %v1812, 1.1754944e-38
        %v1819 = vadd.f32 %v1813, 1.1754944e-38
        %v1820 = vadd.f32 %v1814, 1.1754944e-38
        %v1821 = vadd.f32 %v1815, 1.1754944e-38
        %v1822 = vrsqrt.pop %v1816
        %v1823 = vmul.f32 %v1822, %v1816
        %v1824 = vmul.f32 %v1823, %v1822
        %v1825 = vmul.f32 0.5, %v1824
        %v1826 = vsub.f32 1.5, %v1825
        %v1827 = vmul.f32 %v1822, %v1826
        %vm1828 = vweird.f32 %v1816
        %vm1829 = vweird.f32 %v1822
        %vm1830 = vmor %vm1828, %vm1829
        %v1831 = vsel %vm1830, %v1822, %v1827
        %v1832 = vrsqrt.pop %v1817
        %v1833 = vmul.f32 %v1832, %v1817
        %v1834 = vmul.f32 %v1833, %v1832
        %v1835 = vmul.f32 0.5, %v1834
        %v1836 = vsub.f32 1.5, %v1835
        %v1837 = vmul.f32 %v1832, %v1836
        %vm1838 = vweird.f32 %v1817
        %vm1839 = vweird.f32 %v1832
        %vm1840 = vmor %vm1838, %vm1839
        %v1841 = vsel %vm1840, %v1832, %v1837
        %v1842 = vrsqrt.pop %v1818
        %v1843 = vmul.f32 %v1842, %v1818
        %v1844 = vmul.f32 %v1843, %v1842
        %v1845 = vmul.f32 0.5, %v1844
        %v1846 = vsub.f32 1.5, %v1845
        %v1847 = vmul.f32 %v1842, %v1846
        %vm1848 = vweird.f32 %v1818
        %vm1849 = vweird.f32 %v1842
        %vm1850 = vmor %vm1848, %vm1849
        %v1851 = vsel %vm1850, %v1842, %v1847
        %v1852 = vrsqrt.pop %v1819
        %v1853 = vmul.f32 %v1852, %v1819
        %v1854 = vmul.f32 %v1853, %v1852
        %v1855 = vmul.f32 0.5, %v1854
        %v1856 = vsub.f32 1.5, %v1855
        %v1857 = vmul.f32 %v1852, %v1856
        %vm1858 = vweird.f32 %v1819
        %vm1859 = vweird.f32 %v1852
        %vm1860 = vmor %vm1858, %vm1859
        %v1861 = vsel %vm1860, %v1852, %v1857
        %v1862 = vrsqrt.pop %v1820
        %v1863 = vmul.f32 %v1862, %v1820
        %v1864 = vmul.f32 %v1863, %v1862
        %v1865 = vmul.f32 0.5, %v1864
        %v1866 = vsub.f32 1.5, %v1865
        %v1867 = vmul.f32 %v1862, %v1866
        %vm1868 = vweird.f32 %v1820
        %vm1869 = vweird.f32 %v1862
        %vm1870 = vmor %vm1868, %vm1869
        %v1871 = vsel %vm1870, %v1862, %v1867
        %v1872 = vrsqrt.pop %v1821
        %v1873 = vmul.f32 %v1872, %v1821
        %v1874 = vmul.f32 %v1873, %v1872
        %v1875 = vmul.f32 0.5, %v1874
        %v1876 = vsub.f32 1.5, %v1875
        %v1877 = vmul.f32 %v1872, %v1876
        %vm1878 = vweird.f32 %v1821
        %vm1879 = vweird.f32 %v1872
        %vm1880 = vmor %vm1878, %vm1879
        %v1881 = vsel %vm1880, %v1872, %v1877
        %v1882 = vmul.f32 %v1810, %v1831
        %v1883 = vmul.f32 %v1811, %v1841
        %v1884 = vmul.f32 %v1812, %v1851
        %v1885 = vmul.f32 %v1813, %v1861
        %v1886 = vmul.f32 %v1814, %v1871
        %v1887 = vmul.f32 %v1815, %v1881
        %v1888 = vld [vmem:[%s3] sm:$0x7]
        %v1890 = vperm.slane %v1888, 0
        %v1891 = vperm.slane %v1888, 1
        %v1892 = vperm.slane %v1888, 2
        %v1896 = vsub.f32 %v1882, %v1890
        %v1897 = vsub.f32 %v1883, %v1891
        %v1898 = vsub.f32 %v1884, %v1892
        %v1899 = vsub.f32 %v1885, %v1890
        %v1900 = vsub.f32 %v1886, %v1891
        %v1901 = vsub.f32 %v1887, %v1892
        %v1902 = vmax.f32 %v1896, 0.0
        %v1903 = vmax.f32 %v1897, 0.0
        %v1904 = vmax.f32 %v1898, 0.0
        %v1905 = vmax.f32 %v1899, 0.0
        %v1906 = vmax.f32 %v1900, 0.0
        %v1907 = vmax.f32 %v1901, 0.0
        %v1908 = vmul.f32 %v1902, %v1831
        %v1909 = vmul.f32 %v1903, %v1841
        %v1910 = vmul.f32 %v1904, %v1851
        %v1911 = vmul.f32 %v1905, %v1861
        %v1912 = vmul.f32 %v1906, %v1871
        %v1913 = vmul.f32 %v1907, %v1881
        %v1914 = vmul.f32 %v1514, %v1908
        %v1915 = vmul.f32 %v1570, %v1909
        %v1916 = vmul.f32 %v1626, %v1910
        %v1917 = vmul.f32 %v1516, %v1911
        %v1918 = vmul.f32 %v1572, %v1912
        %v1919 = vmul.f32 %v1628, %v1913
        %v1920 = vpack.c.bf16 %v1915, %v1914
        %v1921 = vpack.c.bf16 %v1916, %v1916
        %v1922 = vpack.c.bf16 %v1918, %v1917
        %v1923 = vpack.c.bf16 %v1919, %v1919
        %1924 = vst [vmem:[#allocation2] sm:$0xff] %v1920
        %1925 = vst [vmem:[#allocation2 + $0x8] sm:$0xf] %v1921
        %1926 = vst [vmem:[#allocation2 + $0x18] sm:$0xff] %v1922
        %1927 = vst [vmem:[#allocation2 + $0x20] sm:$0xf] %v1923
        %v1928 = vmul.f32 %v1682, %v1908
        %v1929 = vmul.f32 %v1738, %v1909
        %v1930 = vmul.f32 %v1794, %v1910
        %v1931 = vmul.f32 %v1684, %v1911
        %v1932 = vmul.f32 %v1740, %v1912
        %v1933 = vmul.f32 %v1796, %v1913
        %v1934 = vpack.c.bf16 %v1929, %v1928
        %v1935 = vpack.c.bf16 %v1930, %v1930
        %v1936 = vpack.c.bf16 %v1932, %v1931
        %v1937 = vpack.c.bf16 %v1933, %v1933
        %1938 = vst [vmem:[#allocation2 + $0xc] sm:$0xff] %v1934
        %1939 = vst [vmem:[#allocation2 + $0x14] sm:$0xf] %v1935
        %1940 = vst [vmem:[#allocation2 + $0x24] sm:$0xff] %v1936
        %1941 = vst [vmem:[#allocation2 + $0x2c] sm:$0xf] %v1937
        %v1942 = vld [vmem:[#allocation2] sm:$0xff]
        %v1943 = vld [vmem:[#allocation2 + $0x8] sm:$0xff]
        %v1944 = vld [vmem:[#allocation2 + $0x10] sm:$0xff]
        %v1945 = vld [vmem:[#allocation2 + $0x18] sm:$0xff]
        %v1946 = vld [vmem:[#allocation2 + $0x20] sm:$0xff]
        %v1947 = vld [vmem:[#allocation2 + $0x28] sm:$0xff]
        %v1948 = vld [vmem:[#allocation5] sm:$0xff]
        %v1949 = vld [vmem:[#allocation5 + $0x8] sm:$0xff]
        %v1950 = vld [vmem:[#allocation5 + $0x10] sm:$0xff]
        %v1951 = vld [vmem:[#allocation5 + $0x18] sm:$0xff]
        %v1952 = vld [vmem:[#allocation5 + $0x20] sm:$0xff]
        %v1953 = vld [vmem:[#allocation5 + $0x28] sm:$0xff]
        %v1954 = vld [vmem:[#allocation5 + $0x30] sm:$0xff]
        %v1955 = vld [vmem:[#allocation5 + $0x38] sm:$0xff]
        %v1956 = vld [vmem:[#allocation5 + $0x40] sm:$0xff]
        %v1957 = vld [vmem:[#allocation5 + $0x48] sm:$0xff]
        %v1958 = vld [vmem:[#allocation5 + $0x50] sm:$0xff]
        %v1959 = vld [vmem:[#allocation5 + $0x58] sm:$0xff]
        %v1960 = vld [vmem:[#allocation5 + $0x60] sm:$0xff]
        %v1961 = vld [vmem:[#allocation5 + $0x68] sm:$0xff]
        %v1962 = vld [vmem:[#allocation5 + $0x70] sm:$0xff]
        %v1963 = vld [vmem:[#allocation5 + $0x78] sm:$0xff]
        %v1964 = vld [vmem:[#allocation5 + $0x80] sm:$0xff]
        %v1965 = vld [vmem:[#allocation5 + $0x88] sm:$0xff]
        %v1966 = vld [vmem:[#allocation5 + $0x90] sm:$0xff]
        %v1967 = vld [vmem:[#allocation5 + $0x98] sm:$0xff]
        %v1968 = vld [vmem:[#allocation5 + $0xa0] sm:$0xff]
        %v1969 = vld [vmem:[#allocation5 + $0xa8] sm:$0xff]
        %v1970 = vld [vmem:[#allocation5 + $0xb0] sm:$0xff]
        %v1971 = vld [vmem:[#allocation5 + $0xb8] sm:$0xff]
        %v1972 = vld [vmem:[#allocation5 + $0xc0] sm:$0xff]
        %v1973 = vld [vmem:[#allocation5 + $0xc8] sm:$0xff]
        %v1974 = vld [vmem:[#allocation5 + $0xd0] sm:$0xff]
        %v1975 = vld [vmem:[#allocation5 + $0xd8] sm:$0xff]
        %v1976 = vld [vmem:[#allocation5 + $0xe0] sm:$0xff]
        %v1977 = vld [vmem:[#allocation5 + $0xe8] sm:$0xff]
        %v1978 = vld [vmem:[#allocation5 + $0xf0] sm:$0xff]
        %v1979 = vld [vmem:[#allocation5 + $0xf8] sm:$0xff]
        %v1980 = vld [vmem:[#allocation5 + $0x100] sm:$0xff]
        %v1981 = vld [vmem:[#allocation5 + $0x108] sm:$0xff]
        %v1982 = vld [vmem:[#allocation5 + $0x110] sm:$0xff]
        %v1983 = vld [vmem:[#allocation5 + $0x118] sm:$0xff]
        %v1984 = vld [vmem:[#allocation5 + $0x120] sm:$0xff]
        %v1985 = vld [vmem:[#allocation5 + $0x128] sm:$0xff]
        %v1986 = vld [vmem:[#allocation5 + $0x130] sm:$0xff]
        %v1987 = vld [vmem:[#allocation5 + $0x138] sm:$0xff]
        %v1988 = vld [vmem:[#allocation5 + $0x140] sm:$0xff]
        %v1989 = vld [vmem:[#allocation5 + $0x148] sm:$0xff]
        %v1990 = vld [vmem:[#allocation5 + $0x150] sm:$0xff]
        %v1991 = vld [vmem:[#allocation5 + $0x158] sm:$0xff]
        %v1992 = vld [vmem:[#allocation5 + $0x160] sm:$0xff]
        %v1993 = vld [vmem:[#allocation5 + $0x168] sm:$0xff]
        %v1994 = vld [vmem:[#allocation5 + $0x170] sm:$0xff]
        %v1995 = vld [vmem:[#allocation5 + $0x178] sm:$0xff]
        %v1996 = vld [vmem:[#allocation5 + $0x180] sm:$0xff]
        %v1997 = vld [vmem:[#allocation5 + $0x188] sm:$0xff]
        %v1998 = vld [vmem:[#allocation5 + $0x190] sm:$0xff]
        %v1999 = vld [vmem:[#allocation5 + $0x198] sm:$0xff]
        %v2000 = vld [vmem:[#allocation5 + $0x1a0] sm:$0xff]
        %v2001 = vld [vmem:[#allocation5 + $0x1a8] sm:$0xff]
        %v2002 = vld [vmem:[#allocation5 + $0x1b0] sm:$0xff]
        %v2003 = vld [vmem:[#allocation5 + $0x1b8] sm:$0xff]
        %v2004 = vld [vmem:[#allocation5 + $0x1c0] sm:$0xff]
        %v2005 = vld [vmem:[#allocation5 + $0x1c8] sm:$0xff]
        %v2006 = vld [vmem:[#allocation5 + $0x1d0] sm:$0xff]
        %v2007 = vld [vmem:[#allocation5 + $0x1d8] sm:$0xff]
        %v2008 = vld [vmem:[#allocation5 + $0x1e0] sm:$0xff]
        %v2009 = vld [vmem:[#allocation5 + $0x1e8] sm:$0xff]
        %v2010 = vld [vmem:[#allocation5 + $0x1f0] sm:$0xff]
        %v2011 = vld [vmem:[#allocation5 + $0x1f8] sm:$0xff]
        %v2012 = vld [vmem:[#allocation5 + $0x200] sm:$0xff]
        %v2013 = vld [vmem:[#allocation5 + $0x208] sm:$0xff]
        %v2014 = vld [vmem:[#allocation5 + $0x210] sm:$0xff]
        %v2015 = vld [vmem:[#allocation5 + $0x218] sm:$0xff]
        %v2016 = vld [vmem:[#allocation5 + $0x220] sm:$0xff]
        %v2017 = vld [vmem:[#allocation5 + $0x228] sm:$0xff]
        %v2018 = vld [vmem:[#allocation5 + $0x230] sm:$0xff]
        %v2019 = vld [vmem:[#allocation5 + $0x238] sm:$0xff]
        %v2020 = vld [vmem:[#allocation5 + $0x240] sm:$0xff]
        %v2021 = vld [vmem:[#allocation5 + $0x248] sm:$0xff]
        %v2022 = vld [vmem:[#allocation5 + $0x250] sm:$0xff]
        %v2023 = vld [vmem:[#allocation5 + $0x258] sm:$0xff]
        %v2024 = vld [vmem:[#allocation5 + $0x260] sm:$0xff]
        %v2025 = vld [vmem:[#allocation5 + $0x268] sm:$0xff]
        %v2026 = vld [vmem:[#allocation5 + $0x270] sm:$0xff]
        %v2027 = vld [vmem:[#allocation5 + $0x278] sm:$0xff]
        %v2028 = vld [vmem:[#allocation5 + $0x280] sm:$0xff]
        %v2029 = vld [vmem:[#allocation5 + $0x288] sm:$0xff]
        %v2030 = vld [vmem:[#allocation5 + $0x290] sm:$0xff]
        %v2031 = vld [vmem:[#allocation5 + $0x298] sm:$0xff]
        %v2032 = vld [vmem:[#allocation5 + $0x2a0] sm:$0xff]
        %v2033 = vld [vmem:[#allocation5 + $0x2a8] sm:$0xff]
        %v2034 = vld [vmem:[#allocation5 + $0x2b0] sm:$0xff]
        %v2035 = vld [vmem:[#allocation5 + $0x2b8] sm:$0xff]
        %v2036 = vld [vmem:[#allocation5 + $0x2c0] sm:$0xff]
        %v2037 = vld [vmem:[#allocation5 + $0x2c8] sm:$0xff]
        %v2038 = vld [vmem:[#allocation5 + $0x2d0] sm:$0xff]
        %v2039 = vld [vmem:[#allocation5 + $0x2d8] sm:$0xff]
        %v2040 = vld [vmem:[#allocation5 + $0x2e0] sm:$0xff]
        %v2041 = vld [vmem:[#allocation5 + $0x2e8] sm:$0xff]
        %v2042 = vld [vmem:[#allocation5 + $0x2f0] sm:$0xff]
        %v2043 = vld [vmem:[#allocation5 + $0x2f8] sm:$0xff]
        %v2044 = vld [vmem:[#allocation5 + $0x300] sm:$0xff]
        %v2045 = vld [vmem:[#allocation5 + $0x308] sm:$0xff]
        %v2046 = vld [vmem:[#allocation5 + $0x310] sm:$0xff]
        %v2047 = vld [vmem:[#allocation5 + $0x318] sm:$0xff]
        %v2048 = vld [vmem:[#allocation5 + $0x320] sm:$0xff]
        %v2049 = vld [vmem:[#allocation5 + $0x328] sm:$0xff]
        %v2050 = vld [vmem:[#allocation5 + $0x330] sm:$0xff]
        %v2051 = vld [vmem:[#allocation5 + $0x338] sm:$0xff]
        %v2052 = vld [vmem:[#allocation5 + $0x340] sm:$0xff]
        %v2053 = vld [vmem:[#allocation5 + $0x348] sm:$0xff]
        %v2054 = vld [vmem:[#allocation5 + $0x350] sm:$0xff]
        %v2055 = vld [vmem:[#allocation5 + $0x358] sm:$0xff]
        %v2056 = vld [vmem:[#allocation5 + $0x360] sm:$0xff]
        %v2057 = vld [vmem:[#allocation5 + $0x368] sm:$0xff]
        %v2058 = vld [vmem:[#allocation5 + $0x370] sm:$0xff]
        %v2059 = vld [vmem:[#allocation5 + $0x378] sm:$0xff]
        %v2060 = vld [vmem:[#allocation5 + $0x380] sm:$0xff]
        %v2061 = vld [vmem:[#allocation5 + $0x388] sm:$0xff]
        %v2062 = vld [vmem:[#allocation5 + $0x390] sm:$0xff]
        %v2063 = vld [vmem:[#allocation5 + $0x398] sm:$0xff]
        %v2064 = vld [vmem:[#allocation5 + $0x3a0] sm:$0xff]
        %v2065 = vld [vmem:[#allocation5 + $0x3a8] sm:$0xff]
        %v2066 = vld [vmem:[#allocation5 + $0x3b0] sm:$0xff]
        %v2067 = vld [vmem:[#allocation5 + $0x3b8] sm:$0xff]
        %v2068 = vld [vmem:[#allocation5 + $0x3c0] sm:$0xff]
        %v2069 = vld [vmem:[#allocation5 + $0x3c8] sm:$0xff]
        %v2070 = vld [vmem:[#allocation5 + $0x3d0] sm:$0xff]
        %v2071 = vld [vmem:[#allocation5 + $0x3d8] sm:$0xff]
        %v2072 = vld [vmem:[#allocation5 + $0x3e0] sm:$0xff]
        %v2073 = vld [vmem:[#allocation5 + $0x3e8] sm:$0xff]
        %v2074 = vld [vmem:[#allocation5 + $0x3f0] sm:$0xff]
        %v2075 = vld [vmem:[#allocation5 + $0x3f8] sm:$0xff]
        %v2076 = vld [vmem:[#allocation5 + $0x400] sm:$0xff]
        %v2077 = vld [vmem:[#allocation5 + $0x408] sm:$0xff]
        %v2078 = vld [vmem:[#allocation5 + $0x410] sm:$0xff]
        %v2079 = vld [vmem:[#allocation5 + $0x418] sm:$0xff]
        %v2080 = vld [vmem:[#allocation5 + $0x420] sm:$0xff]
        %v2081 = vld [vmem:[#allocation5 + $0x428] sm:$0xff]
        %v2082 = vld [vmem:[#allocation5 + $0x430] sm:$0xff]
        %v2083 = vld [vmem:[#allocation5 + $0x438] sm:$0xff]
        %v2084 = vld [vmem:[#allocation5 + $0x440] sm:$0xff]
        %v2085 = vld [vmem:[#allocation5 + $0x448] sm:$0xff]
        %v2086 = vld [vmem:[#allocation5 + $0x450] sm:$0xff]
        %v2087 = vld [vmem:[#allocation5 + $0x458] sm:$0xff]
        %v2088 = vld [vmem:[#allocation5 + $0x460] sm:$0xff]
        %v2089 = vld [vmem:[#allocation5 + $0x468] sm:$0xff]
        %v2090 = vld [vmem:[#allocation5 + $0x470] sm:$0xff]
        %v2091 = vld [vmem:[#allocation5 + $0x478] sm:$0xff]
        %v2092 = vld [vmem:[#allocation5 + $0x480] sm:$0xff]
        %v2093 = vld [vmem:[#allocation5 + $0x488] sm:$0xff]
        %v2094 = vld [vmem:[#allocation5 + $0x490] sm:$0xff]
        %v2095 = vld [vmem:[#allocation5 + $0x498] sm:$0xff]
        %v2096 = vld [vmem:[#allocation5 + $0x4a0] sm:$0xff]
        %v2097 = vld [vmem:[#allocation5 + $0x4a8] sm:$0xff]
        %v2098 = vld [vmem:[#allocation5 + $0x4b0] sm:$0xff]
        %v2099 = vld [vmem:[#allocation5 + $0x4b8] sm:$0xff]
        %v2100 = vld [vmem:[#allocation5 + $0x4c0] sm:$0xff]
        %v2101 = vld [vmem:[#allocation5 + $0x4c8] sm:$0xff]
        %v2102 = vld [vmem:[#allocation5 + $0x4d0] sm:$0xff]
        %v2103 = vld [vmem:[#allocation5 + $0x4d8] sm:$0xff]
        %v2104 = vld [vmem:[#allocation5 + $0x4e0] sm:$0xff]
        %v2105 = vld [vmem:[#allocation5 + $0x4e8] sm:$0xff]
        %v2106 = vld [vmem:[#allocation5 + $0x4f0] sm:$0xff]
        %v2107 = vld [vmem:[#allocation5 + $0x4f8] sm:$0xff]
        %v2108 = vld [vmem:[#allocation5 + $0x500] sm:$0xff]
        %v2109 = vld [vmem:[#allocation5 + $0x508] sm:$0xff]
        %v2110 = vld [vmem:[#allocation5 + $0x510] sm:$0xff]
        %v2111 = vld [vmem:[#allocation5 + $0x518] sm:$0xff]
        %v2112 = vld [vmem:[#allocation5 + $0x520] sm:$0xff]
        %v2113 = vld [vmem:[#allocation5 + $0x528] sm:$0xff]
        %v2114 = vld [vmem:[#allocation5 + $0x530] sm:$0xff]
        %v2115 = vld [vmem:[#allocation5 + $0x538] sm:$0xff]
        %v2116 = vld [vmem:[#allocation5 + $0x540] sm:$0xff]
        %v2117 = vld [vmem:[#allocation5 + $0x548] sm:$0xff]
        %v2118 = vld [vmem:[#allocation5 + $0x550] sm:$0xff]
        %v2119 = vld [vmem:[#allocation5 + $0x558] sm:$0xff]
        %v2120 = vld [vmem:[#allocation5 + $0x560] sm:$0xff]
        %v2121 = vld [vmem:[#allocation5 + $0x568] sm:$0xff]
        %v2122 = vld [vmem:[#allocation5 + $0x570] sm:$0xff]
        %v2123 = vld [vmem:[#allocation5 + $0x578] sm:$0xff]
        %v2124 = vld [vmem:[#allocation5 + $0x580] sm:$0xff]
        %v2125 = vld [vmem:[#allocation5 + $0x588] sm:$0xff]
        %v2126 = vld [vmem:[#allocation5 + $0x590] sm:$0xff]
        %v2127 = vld [vmem:[#allocation5 + $0x598] sm:$0xff]
        %v2128 = vld [vmem:[#allocation5 + $0x5a0] sm:$0xff]
        %v2129 = vld [vmem:[#allocation5 + $0x5a8] sm:$0xff]
        %v2130 = vld [vmem:[#allocation5 + $0x5b0] sm:$0xff]
        %v2131 = vld [vmem:[#allocation5 + $0x5b8] sm:$0xff]
        %v2132 = vld [vmem:[#allocation5 + $0x5c0] sm:$0xff]
        %v2133 = vld [vmem:[#allocation5 + $0x5c8] sm:$0xff]
        %v2134 = vld [vmem:[#allocation5 + $0x5d0] sm:$0xff]
        %v2135 = vld [vmem:[#allocation5 + $0x5d8] sm:$0xff]
        %v2136 = vld [vmem:[#allocation5 + $0x5e0] sm:$0xff]
        %v2137 = vld [vmem:[#allocation5 + $0x5e8] sm:$0xff]
        %v2138 = vld [vmem:[#allocation5 + $0x5f0] sm:$0xff]
        %v2139 = vld [vmem:[#allocation5 + $0x5f8] sm:$0xff]
        %v2146 = vunpack.c.l.b16 %v1942
        %v2147 = vunpack.c.h.b16 %v1942
        %v2148 = vunpack.c.l.b16 %v1943
        %v2149 = vunpack.c.h.b16 %v1943
        %v2150 = vunpack.c.l.b16 %v1944
        %v2151 = vunpack.c.h.b16 %v1944
        %v2152 = vunpack.c.l.b16 %v1945
        %v2153 = vunpack.c.h.b16 %v1945
        %v2154 = vunpack.c.l.b16 %v1946
        %v2155 = vunpack.c.h.b16 %v1946
        %v2156 = vunpack.c.l.b16 %v1947
        %v2157 = vunpack.c.h.b16 %v1947
        %v2158 = vpack.c.b16 %v2152, %v2146
        %v2159 = vpack.c.b16 %v2153, %v2147
        %v2160 = vpack.c.b16 %v2154, %v2148
        %v2161 = vpack.c.b16 %v2155, %v2149
        %v2162 = vpack.c.b16 %v2156, %v2150
        %v2163 = vpack.c.b16 %v2157, %v2151
        %v2362 = vunpack.c.l.b16 %v1948
        %v2363 = vunpack.c.h.b16 %v1948
        %v2364 = vunpack.c.l.b16 %v1949
        %v2365 = vunpack.c.h.b16 %v1949
        %v2366 = vunpack.c.l.b16 %v1950
        %v2367 = vunpack.c.h.b16 %v1950
        %v2368 = vunpack.c.l.b16 %v1951
        %v2369 = vunpack.c.h.b16 %v1951
        %v2370 = vunpack.c.l.b16 %v1952
        %v2371 = vunpack.c.h.b16 %v1952
        %v2372 = vunpack.c.l.b16 %v1953
        %v2373 = vunpack.c.h.b16 %v1953
        %v2374 = vunpack.c.l.b16 %v1954
        %v2375 = vunpack.c.h.b16 %v1954
        %v2376 = vunpack.c.l.b16 %v1955
        %v2377 = vunpack.c.h.b16 %v1955
        %v2378 = vunpack.c.l.b16 %v1956
        %v2379 = vunpack.c.h.b16 %v1956
        %v2380 = vunpack.c.l.b16 %v1957
        %v2381 = vunpack.c.h.b16 %v1957
        %v2382 = vunpack.c.l.b16 %v1958
        %v2383 = vunpack.c.h.b16 %v1958
        %v2384 = vunpack.c.l.b16 %v1959
        %v2385 = vunpack.c.h.b16 %v1959
        %v2386 = vunpack.c.l.b16 %v1960
        %v2387 = vunpack.c.h.b16 %v1960
        %v2388 = vunpack.c.l.b16 %v1961
        %v2389 = vunpack.c.h.b16 %v1961
        %v2390 = vunpack.c.l.b16 %v1962
        %v2391 = vunpack.c.h.b16 %v1962
        %v2392 = vunpack.c.l.b16 %v1963
        %v2393 = vunpack.c.h.b16 %v1963
        %v2394 = vunpack.c.l.b16 %v1964
        %v2395 = vunpack.c.h.b16 %v1964
        %v2396 = vunpack.c.l.b16 %v1965
        %v2397 = vunpack.c.h.b16 %v1965
        %v2398 = vunpack.c.l.b16 %v1966
        %v2399 = vunpack.c.h.b16 %v1966
        %v2400 = vunpack.c.l.b16 %v1967
        %v2401 = vunpack.c.h.b16 %v1967
        %v2402 = vunpack.c.l.b16 %v1968
        %v2403 = vunpack.c.h.b16 %v1968
        %v2404 = vunpack.c.l.b16 %v1969
        %v2405 = vunpack.c.h.b16 %v1969
        %v2406 = vunpack.c.l.b16 %v1970
        %v2407 = vunpack.c.h.b16 %v1970
        %v2408 = vunpack.c.l.b16 %v1971
        %v2409 = vunpack.c.h.b16 %v1971
        %v2410 = vunpack.c.l.b16 %v1972
        %v2411 = vunpack.c.h.b16 %v1972
        %v2412 = vunpack.c.l.b16 %v1973
        %v2413 = vunpack.c.h.b16 %v1973
        %v2414 = vunpack.c.l.b16 %v1974
        %v2415 = vunpack.c.h.b16 %v1974
        %v2416 = vunpack.c.l.b16 %v1975
        %v2417 = vunpack.c.h.b16 %v1975
        %v2418 = vunpack.c.l.b16 %v1976
        %v2419 = vunpack.c.h.b16 %v1976
        %v2420 = vunpack.c.l.b16 %v1977
        %v2421 = vunpack.c.h.b16 %v1977
        %v2422 = vunpack.c.l.b16 %v1978
        %v2423 = vunpack.c.h.b16 %v1978
        %v2424 = vunpack.c.l.b16 %v1979
        %v2425 = vunpack.c.h.b16 %v1979
        %v2426 = vunpack.c.l.b16 %v1980
        %v2427 = vunpack.c.h.b16 %v1980
        %v2428 = vunpack.c.l.b16 %v1981
        %v2429 = vunpack.c.h.b16 %v1981
        %v2430 = vunpack.c.l.b16 %v1982
        %v2431 = vunpack.c.h.b16 %v1982
        %v2432 = vunpack.c.l.b16 %v1983
        %v2433 = vunpack.c.h.b16 %v1983
        %v2434 = vunpack.c.l.b16 %v1984
        %v2435 = vunpack.c.h.b16 %v1984
        %v2436 = vunpack.c.l.b16 %v1985
        %v2437 = vunpack.c.h.b16 %v1985
        %v2438 = vunpack.c.l.b16 %v1986
        %v2439 = vunpack.c.h.b16 %v1986
        %v2440 = vunpack.c.l.b16 %v1987
        %v2441 = vunpack.c.h.b16 %v1987
        %v2442 = vunpack.c.l.b16 %v1988
        %v2443 = vunpack.c.h.b16 %v1988
        %v2444 = vunpack.c.l.b16 %v1989
        %v2445 = vunpack.c.h.b16 %v1989
        %v2446 = vunpack.c.l.b16 %v1990
        %v2447 = vunpack.c.h.b16 %v1990
        %v2448 = vunpack.c.l.b16 %v1991
        %v2449 = vunpack.c.h.b16 %v1991
        %v2450 = vunpack.c.l.b16 %v1992
        %v2451 = vunpack.c.h.b16 %v1992
        %v2452 = vunpack.c.l.b16 %v1993
        %v2453 = vunpack.c.h.b16 %v1993
        %v2454 = vunpack.c.l.b16 %v1994
        %v2455 = vunpack.c.h.b16 %v1994
        %v2456 = vunpack.c.l.b16 %v1995
        %v2457 = vunpack.c.h.b16 %v1995
        %v2458 = vunpack.c.l.b16 %v1996
        %v2459 = vunpack.c.h.b16 %v1996
        %v2460 = vunpack.c.l.b16 %v1997
        %v2461 = vunpack.c.h.b16 %v1997
        %v2462 = vunpack.c.l.b16 %v1998
        %v2463 = vunpack.c.h.b16 %v1998
        %v2464 = vunpack.c.l.b16 %v1999
        %v2465 = vunpack.c.h.b16 %v1999
        %v2466 = vunpack.c.l.b16 %v2000
        %v2467 = vunpack.c.h.b16 %v2000
        %v2468 = vunpack.c.l.b16 %v2001
        %v2469 = vunpack.c.h.b16 %v2001
        %v2470 = vunpack.c.l.b16 %v2002
        %v2471 = vunpack.c.h.b16 %v2002
        %v2472 = vunpack.c.l.b16 %v2003
        %v2473 = vunpack.c.h.b16 %v2003
        %v2474 = vunpack.c.l.b16 %v2004
        %v2475 = vunpack.c.h.b16 %v2004
        %v2476 = vunpack.c.l.b16 %v2005
        %v2477 = vunpack.c.h.b16 %v2005
        %v2478 = vunpack.c.l.b16 %v2006
        %v2479 = vunpack.c.h.b16 %v2006
        %v2480 = vunpack.c.l.b16 %v2007
        %v2481 = vunpack.c.h.b16 %v2007
        %v2482 = vunpack.c.l.b16 %v2008
        %v2483 = vunpack.c.h.b16 %v2008
        %v2484 = vunpack.c.l.b16 %v2009
        %v2485 = vunpack.c.h.b16 %v2009
        %v2486 = vunpack.c.l.b16 %v2010
        %v2487 = vunpack.c.h.b16 %v2010
        %v2488 = vunpack.c.l.b16 %v2011
        %v2489 = vunpack.c.h.b16 %v2011
        %v2490 = vunpack.c.l.b16 %v2012
        %v2491 = vunpack.c.h.b16 %v2012
        %v2492 = vunpack.c.l.b16 %v2013
        %v2493 = vunpack.c.h.b16 %v2013
        %v2494 = vunpack.c.l.b16 %v2014
        %v2495 = vunpack.c.h.b16 %v2014
        %v2496 = vunpack.c.l.b16 %v2015
        %v2497 = vunpack.c.h.b16 %v2015
        %v2498 = vunpack.c.l.b16 %v2016
        %v2499 = vunpack.c.h.b16 %v2016
        %v2500 = vunpack.c.l.b16 %v2017
        %v2501 = vunpack.c.h.b16 %v2017
        %v2502 = vunpack.c.l.b16 %v2018
        %v2503 = vunpack.c.h.b16 %v2018
        %v2504 = vunpack.c.l.b16 %v2019
        %v2505 = vunpack.c.h.b16 %v2019
        %v2506 = vunpack.c.l.b16 %v2020
        %v2507 = vunpack.c.h.b16 %v2020
        %v2508 = vunpack.c.l.b16 %v2021
        %v2509 = vunpack.c.h.b16 %v2021
        %v2510 = vunpack.c.l.b16 %v2022
        %v2511 = vunpack.c.h.b16 %v2022
        %v2512 = vunpack.c.l.b16 %v2023
        %v2513 = vunpack.c.h.b16 %v2023
        %v2514 = vunpack.c.l.b16 %v2024
        %v2515 = vunpack.c.h.b16 %v2024
        %v2516 = vunpack.c.l.b16 %v2025
        %v2517 = vunpack.c.h.b16 %v2025
        %v2518 = vunpack.c.l.b16 %v2026
        %v2519 = vunpack.c.h.b16 %v2026
        %v2520 = vunpack.c.l.b16 %v2027
        %v2521 = vunpack.c.h.b16 %v2027
        %v2522 = vunpack.c.l.b16 %v2028
        %v2523 = vunpack.c.h.b16 %v2028
        %v2524 = vunpack.c.l.b16 %v2029
        %v2525 = vunpack.c.h.b16 %v2029
        %v2526 = vunpack.c.l.b16 %v2030
        %v2527 = vunpack.c.h.b16 %v2030
        %v2528 = vunpack.c.l.b16 %v2031
        %v2529 = vunpack.c.h.b16 %v2031
        %v2530 = vunpack.c.l.b16 %v2032
        %v2531 = vunpack.c.h.b16 %v2032
        %v2532 = vunpack.c.l.b16 %v2033
        %v2533 = vunpack.c.h.b16 %v2033
        %v2534 = vunpack.c.l.b16 %v2034
        %v2535 = vunpack.c.h.b16 %v2034
        %v2536 = vunpack.c.l.b16 %v2035
        %v2537 = vunpack.c.h.b16 %v2035
        %v2538 = vunpack.c.l.b16 %v2036
        %v2539 = vunpack.c.h.b16 %v2036
        %v2540 = vunpack.c.l.b16 %v2037
        %v2541 = vunpack.c.h.b16 %v2037
        %v2542 = vunpack.c.l.b16 %v2038
        %v2543 = vunpack.c.h.b16 %v2038
        %v2544 = vunpack.c.l.b16 %v2039
        %v2545 = vunpack.c.h.b16 %v2039
        %v2546 = vunpack.c.l.b16 %v2040
        %v2547 = vunpack.c.h.b16 %v2040
        %v2548 = vunpack.c.l.b16 %v2041
        %v2549 = vunpack.c.h.b16 %v2041
        %v2550 = vunpack.c.l.b16 %v2042
        %v2551 = vunpack.c.h.b16 %v2042
        %v2552 = vunpack.c.l.b16 %v2043
        %v2553 = vunpack.c.h.b16 %v2043
        %v2554 = vunpack.c.l.b16 %v2044
        %v2555 = vunpack.c.h.b16 %v2044
        %v2556 = vunpack.c.l.b16 %v2045
        %v2557 = vunpack.c.h.b16 %v2045
        %v2558 = vunpack.c.l.b16 %v2046
        %v2559 = vunpack.c.h.b16 %v2046
        %v2560 = vunpack.c.l.b16 %v2047
        %v2561 = vunpack.c.h.b16 %v2047
        %v2562 = vunpack.c.l.b16 %v2048
        %v2563 = vunpack.c.h.b16 %v2048
        %v2564 = vunpack.c.l.b16 %v2049
        %v2565 = vunpack.c.h.b16 %v2049
        %v2566 = vunpack.c.l.b16 %v2050
        %v2567 = vunpack.c.h.b16 %v2050
        %v2568 = vunpack.c.l.b16 %v2051
        %v2569 = vunpack.c.h.b16 %v2051
        %v2570 = vunpack.c.l.b16 %v2052
        %v2571 = vunpack.c.h.b16 %v2052
        %v2572 = vunpack.c.l.b16 %v2053
        %v2573 = vunpack.c.h.b16 %v2053
        %v2574 = vunpack.c.l.b16 %v2054
        %v2575 = vunpack.c.h.b16 %v2054
        %v2576 = vunpack.c.l.b16 %v2055
        %v2577 = vunpack.c.h.b16 %v2055
        %v2578 = vunpack.c.l.b16 %v2056
        %v2579 = vunpack.c.h.b16 %v2056
        %v2580 = vunpack.c.l.b16 %v2057
        %v2581 = vunpack.c.h.b16 %v2057
        %v2582 = vunpack.c.l.b16 %v2058
        %v2583 = vunpack.c.h.b16 %v2058
        %v2584 = vunpack.c.l.b16 %v2059
        %v2585 = vunpack.c.h.b16 %v2059
        %v2586 = vunpack.c.l.b16 %v2060
        %v2587 = vunpack.c.h.b16 %v2060
        %v2588 = vunpack.c.l.b16 %v2061
        %v2589 = vunpack.c.h.b16 %v2061
        %v2590 = vunpack.c.l.b16 %v2062
        %v2591 = vunpack.c.h.b16 %v2062
        %v2592 = vunpack.c.l.b16 %v2063
        %v2593 = vunpack.c.h.b16 %v2063
        %v2594 = vunpack.c.l.b16 %v2064
        %v2595 = vunpack.c.h.b16 %v2064
        %v2596 = vunpack.c.l.b16 %v2065
        %v2597 = vunpack.c.h.b16 %v2065
        %v2598 = vunpack.c.l.b16 %v2066
        %v2599 = vunpack.c.h.b16 %v2066
        %v2600 = vunpack.c.l.b16 %v2067
        %v2601 = vunpack.c.h.b16 %v2067
        %v2602 = vunpack.c.l.b16 %v2068
        %v2603 = vunpack.c.h.b16 %v2068
        %v2604 = vunpack.c.l.b16 %v2069
        %v2605 = vunpack.c.h.b16 %v2069
        %v2606 = vunpack.c.l.b16 %v2070
        %v2607 = vunpack.c.h.b16 %v2070
        %v2608 = vunpack.c.l.b16 %v2071
        %v2609 = vunpack.c.h.b16 %v2071
        %v2610 = vunpack.c.l.b16 %v2072
        %v2611 = vunpack.c.h.b16 %v2072
        %v2612 = vunpack.c.l.b16 %v2073
        %v2613 = vunpack.c.h.b16 %v2073
        %v2614 = vunpack.c.l.b16 %v2074
        %v2615 = vunpack.c.h.b16 %v2074
        %v2616 = vunpack.c.l.b16 %v2075
        %v2617 = vunpack.c.h.b16 %v2075
        %v2618 = vunpack.c.l.b16 %v2076
        %v2619 = vunpack.c.h.b16 %v2076
        %v2620 = vunpack.c.l.b16 %v2077
        %v2621 = vunpack.c.h.b16 %v2077
        %v2622 = vunpack.c.l.b16 %v2078
        %v2623 = vunpack.c.h.b16 %v2078
        %v2624 = vunpack.c.l.b16 %v2079
        %v2625 = vunpack.c.h.b16 %v2079
        %v2626 = vunpack.c.l.b16 %v2080
        %v2627 = vunpack.c.h.b16 %v2080
        %v2628 = vunpack.c.l.b16 %v2081
        %v2629 = vunpack.c.h.b16 %v2081
        %v2630 = vunpack.c.l.b16 %v2082
        %v2631 = vunpack.c.h.b16 %v2082
        %v2632 = vunpack.c.l.b16 %v2083
        %v2633 = vunpack.c.h.b16 %v2083
        %v2634 = vunpack.c.l.b16 %v2084
        %v2635 = vunpack.c.h.b16 %v2084
        %v2636 = vunpack.c.l.b16 %v2085
        %v2637 = vunpack.c.h.b16 %v2085
        %v2638 = vunpack.c.l.b16 %v2086
        %v2639 = vunpack.c.h.b16 %v2086
        %v2640 = vunpack.c.l.b16 %v2087
        %v2641 = vunpack.c.h.b16 %v2087
        %v2642 = vunpack.c.l.b16 %v2088
        %v2643 = vunpack.c.h.b16 %v2088
        %v2644 = vunpack.c.l.b16 %v2089
        %v2645 = vunpack.c.h.b16 %v2089
        %v2646 = vunpack.c.l.b16 %v2090
        %v2647 = vunpack.c.h.b16 %v2090
        %v2648 = vunpack.c.l.b16 %v2091
        %v2649 = vunpack.c.h.b16 %v2091
        %v2650 = vunpack.c.l.b16 %v2092
        %v2651 = vunpack.c.h.b16 %v2092
        %v2652 = vunpack.c.l.b16 %v2093
        %v2653 = vunpack.c.h.b16 %v2093
        %v2654 = vunpack.c.l.b16 %v2094
        %v2655 = vunpack.c.h.b16 %v2094
        %v2656 = vunpack.c.l.b16 %v2095
        %v2657 = vunpack.c.h.b16 %v2095
        %v2658 = vunpack.c.l.b16 %v2096
        %v2659 = vunpack.c.h.b16 %v2096
        %v2660 = vunpack.c.l.b16 %v2097
        %v2661 = vunpack.c.h.b16 %v2097
        %v2662 = vunpack.c.l.b16 %v2098
        %v2663 = vunpack.c.h.b16 %v2098
        %v2664 = vunpack.c.l.b16 %v2099
        %v2665 = vunpack.c.h.b16 %v2099
        %v2666 = vunpack.c.l.b16 %v2100
        %v2667 = vunpack.c.h.b16 %v2100
        %v2668 = vunpack.c.l.b16 %v2101
        %v2669 = vunpack.c.h.b16 %v2101
        %v2670 = vunpack.c.l.b16 %v2102
        %v2671 = vunpack.c.h.b16 %v2102
        %v2672 = vunpack.c.l.b16 %v2103
        %v2673 = vunpack.c.h.b16 %v2103
        %v2674 = vunpack.c.l.b16 %v2104
        %v2675 = vunpack.c.h.b16 %v2104
        %v2676 = vunpack.c.l.b16 %v2105
        %v2677 = vunpack.c.h.b16 %v2105
        %v2678 = vunpack.c.l.b16 %v2106
        %v2679 = vunpack.c.h.b16 %v2106
        %v2680 = vunpack.c.l.b16 %v2107
        %v2681 = vunpack.c.h.b16 %v2107
        %v2682 = vunpack.c.l.b16 %v2108
        %v2683 = vunpack.c.h.b16 %v2108
        %v2684 = vunpack.c.l.b16 %v2109
        %v2685 = vunpack.c.h.b16 %v2109
        %v2686 = vunpack.c.l.b16 %v2110
        %v2687 = vunpack.c.h.b16 %v2110
        %v2688 = vunpack.c.l.b16 %v2111
        %v2689 = vunpack.c.h.b16 %v2111
        %v2690 = vunpack.c.l.b16 %v2112
        %v2691 = vunpack.c.h.b16 %v2112
        %v2692 = vunpack.c.l.b16 %v2113
        %v2693 = vunpack.c.h.b16 %v2113
        %v2694 = vunpack.c.l.b16 %v2114
        %v2695 = vunpack.c.h.b16 %v2114
        %v2696 = vunpack.c.l.b16 %v2115
        %v2697 = vunpack.c.h.b16 %v2115
        %v2698 = vunpack.c.l.b16 %v2116
        %v2699 = vunpack.c.h.b16 %v2116
        %v2700 = vunpack.c.l.b16 %v2117
        %v2701 = vunpack.c.h.b16 %v2117
        %v2702 = vunpack.c.l.b16 %v2118
        %v2703 = vunpack.c.h.b16 %v2118
        %v2704 = vunpack.c.l.b16 %v2119
        %v2705 = vunpack.c.h.b16 %v2119
        %v2706 = vunpack.c.l.b16 %v2120
        %v2707 = vunpack.c.h.b16 %v2120
        %v2708 = vunpack.c.l.b16 %v2121
        %v2709 = vunpack.c.h.b16 %v2121
        %v2710 = vunpack.c.l.b16 %v2122
        %v2711 = vunpack.c.h.b16 %v2122
        %v2712 = vunpack.c.l.b16 %v2123
        %v2713 = vunpack.c.h.b16 %v2123
        %v2714 = vunpack.c.l.b16 %v2124
        %v2715 = vunpack.c.h.b16 %v2124
        %v2716 = vunpack.c.l.b16 %v2125
        %v2717 = vunpack.c.h.b16 %v2125
        %v2718 = vunpack.c.l.b16 %v2126
        %v2719 = vunpack.c.h.b16 %v2126
        %v2720 = vunpack.c.l.b16 %v2127
        %v2721 = vunpack.c.h.b16 %v2127
        %v2722 = vunpack.c.l.b16 %v2128
        %v2723 = vunpack.c.h.b16 %v2128
        %v2724 = vunpack.c.l.b16 %v2129
        %v2725 = vunpack.c.h.b16 %v2129
        %v2726 = vunpack.c.l.b16 %v2130
        %v2727 = vunpack.c.h.b16 %v2130
        %v2728 = vunpack.c.l.b16 %v2131
        %v2729 = vunpack.c.h.b16 %v2131
        %v2730 = vunpack.c.l.b16 %v2132
        %v2731 = vunpack.c.h.b16 %v2132
        %v2732 = vunpack.c.l.b16 %v2133
        %v2733 = vunpack.c.h.b16 %v2133
        %v2734 = vunpack.c.l.b16 %v2134
        %v2735 = vunpack.c.h.b16 %v2134
        %v2736 = vunpack.c.l.b16 %v2135
        %v2737 = vunpack.c.h.b16 %v2135
        %v2738 = vunpack.c.l.b16 %v2136
        %v2739 = vunpack.c.h.b16 %v2136
        %v2740 = vunpack.c.l.b16 %v2137
        %v2741 = vunpack.c.h.b16 %v2137
        %v2742 = vunpack.c.l.b16 %v2138
        %v2743 = vunpack.c.h.b16 %v2138
        %v2744 = vunpack.c.l.b16 %v2139
        %v2745 = vunpack.c.h.b16 %v2139
        %v2746 = vpack.c.b16 %v2366, %v2362
        %v2747 = vpack.c.b16 %v2367, %v2363
        %v2748 = vpack.c.b16 %v2368, %v2364
        %v2749 = vpack.c.b16 %v2369, %v2365
        %v2750 = vpack.c.b16 %v2374, %v2370
        %v2751 = vpack.c.b16 %v2375, %v2371
        %v2752 = vpack.c.b16 %v2376, %v2372
        %v2753 = vpack.c.b16 %v2377, %v2373
        %v2754 = vpack.c.b16 %v2382, %v2378
        %v2755 = vpack.c.b16 %v2383, %v2379
        %v2756 = vpack.c.b16 %v2384, %v2380
        %v2757 = vpack.c.b16 %v2385, %v2381
        %v2758 = vpack.c.b16 %v2390, %v2386
        %v2759 = vpack.c.b16 %v2391, %v2387
        %v2760 = vpack.c.b16 %v2392, %v2388
        %v2761 = vpack.c.b16 %v2393, %v2389
        %v2762 = vpack.c.b16 %v2398, %v2394
        %v2763 = vpack.c.b16 %v2399, %v2395
        %v2764 = vpack.c.b16 %v2400, %v2396
        %v2765 = vpack.c.b16 %v2401, %v2397
        %v2766 = vpack.c.b16 %v2406, %v2402
        %v2767 = vpack.c.b16 %v2407, %v2403
        %v2768 = vpack.c.b16 %v2408, %v2404
        %v2769 = vpack.c.b16 %v2409, %v2405
        %v2770 = vpack.c.b16 %v2414, %v2410
        %v2771 = vpack.c.b16 %v2415, %v2411
        %v2772 = vpack.c.b16 %v2416, %v2412
        %v2773 = vpack.c.b16 %v2417, %v2413
        %v2774 = vpack.c.b16 %v2422, %v2418
        %v2775 = vpack.c.b16 %v2423, %v2419
        %v2776 = vpack.c.b16 %v2424, %v2420
        %v2777 = vpack.c.b16 %v2425, %v2421
        %v2778 = vpack.c.b16 %v2430, %v2426
        %v2779 = vpack.c.b16 %v2431, %v2427
        %v2780 = vpack.c.b16 %v2432, %v2428
        %v2781 = vpack.c.b16 %v2433, %v2429
        %v2782 = vpack.c.b16 %v2438, %v2434
        %v2783 = vpack.c.b16 %v2439, %v2435
        %v2784 = vpack.c.b16 %v2440, %v2436
        %v2785 = vpack.c.b16 %v2441, %v2437
        %v2786 = vpack.c.b16 %v2446, %v2442
        %v2787 = vpack.c.b16 %v2447, %v2443
        %v2788 = vpack.c.b16 %v2448, %v2444
        %v2789 = vpack.c.b16 %v2449, %v2445
        %v2790 = vpack.c.b16 %v2454, %v2450
        %v2791 = vpack.c.b16 %v2455, %v2451
        %v2792 = vpack.c.b16 %v2456, %v2452
        %v2793 = vpack.c.b16 %v2457, %v2453
        %v2794 = vpack.c.b16 %v2462, %v2458
        %v2795 = vpack.c.b16 %v2463, %v2459
        %v2796 = vpack.c.b16 %v2464, %v2460
        %v2797 = vpack.c.b16 %v2465, %v2461
        %v2798 = vpack.c.b16 %v2470, %v2466
        %v2799 = vpack.c.b16 %v2471, %v2467
        %v2800 = vpack.c.b16 %v2472, %v2468
        %v2801 = vpack.c.b16 %v2473, %v2469
        %v2802 = vpack.c.b16 %v2478, %v2474
        %v2803 = vpack.c.b16 %v2479, %v2475
        %v2804 = vpack.c.b16 %v2480, %v2476
        %v2805 = vpack.c.b16 %v2481, %v2477
        %v2806 = vpack.c.b16 %v2486, %v2482
        %v2807 = vpack.c.b16 %v2487, %v2483
        %v2808 = vpack.c.b16 %v2488, %v2484
        %v2809 = vpack.c.b16 %v2489, %v2485
        %v2810 = vpack.c.b16 %v2494, %v2490
        %v2811 = vpack.c.b16 %v2495, %v2491
        %v2812 = vpack.c.b16 %v2496, %v2492
        %v2813 = vpack.c.b16 %v2497, %v2493
        %v2814 = vpack.c.b16 %v2502, %v2498
        %v2815 = vpack.c.b16 %v2503, %v2499
        %v2816 = vpack.c.b16 %v2504, %v2500
        %v2817 = vpack.c.b16 %v2505, %v2501
        %v2818 = vpack.c.b16 %v2510, %v2506
        %v2819 = vpack.c.b16 %v2511, %v2507
        %v2820 = vpack.c.b16 %v2512, %v2508
        %v2821 = vpack.c.b16 %v2513, %v2509
        %v2822 = vpack.c.b16 %v2518, %v2514
        %v2823 = vpack.c.b16 %v2519, %v2515
        %v2824 = vpack.c.b16 %v2520, %v2516
        %v2825 = vpack.c.b16 %v2521, %v2517
        %v2826 = vpack.c.b16 %v2526, %v2522
        %v2827 = vpack.c.b16 %v2527, %v2523
        %v2828 = vpack.c.b16 %v2528, %v2524
        %v2829 = vpack.c.b16 %v2529, %v2525
        %v2830 = vpack.c.b16 %v2534, %v2530
        %v2831 = vpack.c.b16 %v2535, %v2531
        %v2832 = vpack.c.b16 %v2536, %v2532
        %v2833 = vpack.c.b16 %v2537, %v2533
        %v2834 = vpack.c.b16 %v2542, %v2538
        %v2835 = vpack.c.b16 %v2543, %v2539
        %v2836 = vpack.c.b16 %v2544, %v2540
        %v2837 = vpack.c.b16 %v2545, %v2541
        %v2838 = vpack.c.b16 %v2550, %v2546
        %v2839 = vpack.c.b16 %v2551, %v2547
        %v2840 = vpack.c.b16 %v2552, %v2548
        %v2841 = vpack.c.b16 %v2553, %v2549
        %v2842 = vpack.c.b16 %v2558, %v2554
        %v2843 = vpack.c.b16 %v2559, %v2555
        %v2844 = vpack.c.b16 %v2560, %v2556
        %v2845 = vpack.c.b16 %v2561, %v2557
        %v2846 = vpack.c.b16 %v2566, %v2562
        %v2847 = vpack.c.b16 %v2567, %v2563
        %v2848 = vpack.c.b16 %v2568, %v2564
        %v2849 = vpack.c.b16 %v2569, %v2565
        %v2850 = vpack.c.b16 %v2574, %v2570
        %v2851 = vpack.c.b16 %v2575, %v2571
        %v2852 = vpack.c.b16 %v2576, %v2572
        %v2853 = vpack.c.b16 %v2577, %v2573
        %v2854 = vpack.c.b16 %v2582, %v2578
        %v2855 = vpack.c.b16 %v2583, %v2579
        %v2856 = vpack.c.b16 %v2584, %v2580
        %v2857 = vpack.c.b16 %v2585, %v2581
        %v2858 = vpack.c.b16 %v2590, %v2586
        %v2859 = vpack.c.b16 %v2591, %v2587
        %v2860 = vpack.c.b16 %v2592, %v2588
        %v2861 = vpack.c.b16 %v2593, %v2589
        %v2862 = vpack.c.b16 %v2598, %v2594
        %v2863 = vpack.c.b16 %v2599, %v2595
        %v2864 = vpack.c.b16 %v2600, %v2596
        %v2865 = vpack.c.b16 %v2601, %v2597
        %v2866 = vpack.c.b16 %v2606, %v2602
        %v2867 = vpack.c.b16 %v2607, %v2603
        %v2868 = vpack.c.b16 %v2608, %v2604
        %v2869 = vpack.c.b16 %v2609, %v2605
        %v2870 = vpack.c.b16 %v2614, %v2610
        %v2871 = vpack.c.b16 %v2615, %v2611
        %v2872 = vpack.c.b16 %v2616, %v2612
        %v2873 = vpack.c.b16 %v2617, %v2613
        %v2874 = vpack.c.b16 %v2622, %v2618
        %v2875 = vpack.c.b16 %v2623, %v2619
        %v2876 = vpack.c.b16 %v2624, %v2620
        %v2877 = vpack.c.b16 %v2625, %v2621
        %v2878 = vpack.c.b16 %v2630, %v2626
        %v2879 = vpack.c.b16 %v2631, %v2627
        %v2880 = vpack.c.b16 %v2632, %v2628
        %v2881 = vpack.c.b16 %v2633, %v2629
        %v2882 = vpack.c.b16 %v2638, %v2634
        %v2883 = vpack.c.b16 %v2639, %v2635
        %v2884 = vpack.c.b16 %v2640, %v2636
        %v2885 = vpack.c.b16 %v2641, %v2637
        %v2886 = vpack.c.b16 %v2646, %v2642
        %v2887 = vpack.c.b16 %v2647, %v2643
        %v2888 = vpack.c.b16 %v2648, %v2644
        %v2889 = vpack.c.b16 %v2649, %v2645
        %v2890 = vpack.c.b16 %v2654, %v2650
        %v2891 = vpack.c.b16 %v2655, %v2651
        %v2892 = vpack.c.b16 %v2656, %v2652
        %v2893 = vpack.c.b16 %v2657, %v2653
        %v2894 = vpack.c.b16 %v2662, %v2658
        %v2895 = vpack.c.b16 %v2663, %v2659
        %v2896 = vpack.c.b16 %v2664, %v2660
        %v2897 = vpack.c.b16 %v2665, %v2661
        %v2898 = vpack.c.b16 %v2670, %v2666
        %v2899 = vpack.c.b16 %v2671, %v2667
        %v2900 = vpack.c.b16 %v2672, %v2668
        %v2901 = vpack.c.b16 %v2673, %v2669
        %v2902 = vpack.c.b16 %v2678, %v2674
        %v2903 = vpack.c.b16 %v2679, %v2675
        %v2904 = vpack.c.b16 %v2680, %v2676
        %v2905 = vpack.c.b16 %v2681, %v2677
        %v2906 = vpack.c.b16 %v2686, %v2682
        %v2907 = vpack.c.b16 %v2687, %v2683
        %v2908 = vpack.c.b16 %v2688, %v2684
        %v2909 = vpack.c.b16 %v2689, %v2685
        %v2910 = vpack.c.b16 %v2694, %v2690
        %v2911 = vpack.c.b16 %v2695, %v2691
        %v2912 = vpack.c.b16 %v2696, %v2692
        %v2913 = vpack.c.b16 %v2697, %v2693
        %v2914 = vpack.c.b16 %v2702, %v2698
        %v2915 = vpack.c.b16 %v2703, %v2699
        %v2916 = vpack.c.b16 %v2704, %v2700
        %v2917 = vpack.c.b16 %v2705, %v2701
        %v2918 = vpack.c.b16 %v2710, %v2706
        %v2919 = vpack.c.b16 %v2711, %v2707
        %v2920 = vpack.c.b16 %v2712, %v2708
        %v2921 = vpack.c.b16 %v2713, %v2709
        %v2922 = vpack.c.b16 %v2718, %v2714
        %v2923 = vpack.c.b16 %v2719, %v2715
        %v2924 = vpack.c.b16 %v2720, %v2716
        %v2925 = vpack.c.b16 %v2721, %v2717
        %v2926 = vpack.c.b16 %v2726, %v2722
        %v2927 = vpack.c.b16 %v2727, %v2723
        %v2928 = vpack.c.b16 %v2728, %v2724
        %v2929 = vpack.c.b16 %v2729, %v2725
        %v2930 = vpack.c.b16 %v2734, %v2730
        %v2931 = vpack.c.b16 %v2735, %v2731
        %v2932 = vpack.c.b16 %v2736, %v2732
        %v2933 = vpack.c.b16 %v2737, %v2733
        %v2934 = vpack.c.b16 %v2742, %v2738
        %v2935 = vpack.c.b16 %v2743, %v2739
        %v2936 = vpack.c.b16 %v2744, %v2740
        %v2937 = vpack.c.b16 %v2745, %v2741
        %3130 = vmatpush.bf16.msra.mxu0 %v2774
        %3131 = vmatpush.bf16.msra.mxu0 %v2770
        %3132 = vmatpush.bf16.msra.mxu0 %v2766
        %3133 = vmatpush.bf16.msra.mxu0 %v2762
        %3134 = vmatpush.bf16.msra.mxu0 %v2758
        %3135 = vmatpush.bf16.msra.mxu0 %v2754
        %3136 = vmatpush.bf16.msra.mxu0 %v2750
        %3137 = vmatpush.bf16.msra.mxu0 %v2746
        %3138 = vmatmul.bf16.gmra.mxu0 %v2158
        %v3139 = vpop.f32.mrf.mxu0
        %v3140 = vadd.f32 0.0, %v3139
        %v3141 = vpop.f32.mrf.mxu0
        %v3142 = vadd.f32 0.0, %v3141
        %3143 = vdwg.mxu0
        %3144 = vmatpush.bf16.msra.mxu0 %v2806
        %3145 = vmatpush.bf16.msra.mxu0 %v2802
        %3146 = vmatpush.bf16.msra.mxu0 %v2798
        %3147 = vmatpush.bf16.msra.mxu0 %v2794
        %3148 = vmatpush.bf16.msra.mxu0 %v2790
        %3149 = vmatpush.bf16.msra.mxu0 %v2786
        %3150 = vmatpush.bf16.msra.mxu0 %v2782
        %3151 = vmatpush.bf16.msra.mxu0 %v2778
        %3152 = vmatmul.bf16.gmra.mxu0 %v2159
        %v3153 = vpop.f32.mrf.mxu0
        %v3154 = vadd.f32 %v3140, %v3153
        %v3155 = vpop.f32.mrf.mxu0
        %v3156 = vadd.f32 %v3142, %v3155
        %3157 = vdwg.mxu0
        %3158 = vmatpush.bf16.msra.mxu0 %v2838
        %3159 = vmatpush.bf16.msra.mxu0 %v2834
        %3160 = vmatpush.bf16.msra.mxu0 %v2830
        %3161 = vmatpush.bf16.msra.mxu0 %v2826
        %3162 = vmatpush.bf16.msra.mxu0 %v2822
        %3163 = vmatpush.bf16.msra.mxu0 %v2818
        %3164 = vmatpush.bf16.msra.mxu0 %v2814
        %3165 = vmatpush.bf16.msra.mxu0 %v2810
        %3166 = vmatmul.bf16.gmra.mxu0 %v2160
        %v3167 = vpop.f32.mrf.mxu0
        %v3168 = vadd.f32 %v3154, %v3167
        %v3169 = vpop.f32.mrf.mxu0
        %v3170 = vadd.f32 %v3156, %v3169
        %3171 = vdwg.mxu0
        %3172 = vmatpush.bf16.msra.mxu0 %v2870
        %3173 = vmatpush.bf16.msra.mxu0 %v2866
        %3174 = vmatpush.bf16.msra.mxu0 %v2862
        %3175 = vmatpush.bf16.msra.mxu0 %v2858
        %3176 = vmatpush.bf16.msra.mxu0 %v2854
        %3177 = vmatpush.bf16.msra.mxu0 %v2850
        %3178 = vmatpush.bf16.msra.mxu0 %v2846
        %3179 = vmatpush.bf16.msra.mxu0 %v2842
        %3180 = vmatmul.bf16.gmra.mxu0 %v2161
        %v3181 = vpop.f32.mrf.mxu0
        %v3182 = vadd.f32 %v3168, %v3181
        %v3183 = vpop.f32.mrf.mxu0
        %v3184 = vadd.f32 %v3170, %v3183
        %3185 = vdwg.mxu0
        %3186 = vmatpush.bf16.msra.mxu0 %v2902
        %3187 = vmatpush.bf16.msra.mxu0 %v2898
        %3188 = vmatpush.bf16.msra.mxu0 %v2894
        %3189 = vmatpush.bf16.msra.mxu0 %v2890
        %3190 = vmatpush.bf16.msra.mxu0 %v2886
        %3191 = vmatpush.bf16.msra.mxu0 %v2882
        %3192 = vmatpush.bf16.msra.mxu0 %v2878
        %3193 = vmatpush.bf16.msra.mxu0 %v2874
        %3194 = vmatmul.bf16.gmra.mxu0 %v2162
        %v3195 = vpop.f32.mrf.mxu0
        %v3196 = vadd.f32 %v3182, %v3195
        %v3197 = vpop.f32.mrf.mxu0
        %v3198 = vadd.f32 %v3184, %v3197
        %3199 = vdwg.mxu0
        %3200 = vmatpush.bf16.msra.mxu0 %v2934
        %3201 = vmatpush.bf16.msra.mxu0 %v2930
        %3202 = vmatpush.bf16.msra.mxu0 %v2926
        %3203 = vmatpush.bf16.msra.mxu0 %v2922
        %3204 = vmatpush.bf16.msra.mxu0 %v2918
        %3205 = vmatpush.bf16.msra.mxu0 %v2914
        %3206 = vmatpush.bf16.msra.mxu0 %v2910
        %3207 = vmatpush.bf16.msra.mxu0 %v2906
        %3208 = vmatmul.bf16.gmra.mxu0 %v2163
        %v3209 = vpop.f32.mrf.mxu0
        %v3210 = vadd.f32 %v3196, %v3209
        %v3211 = vpop.f32.mrf.mxu0
        %v3212 = vadd.f32 %v3198, %v3211
        %3213 = vdwg.mxu0
        %3214 = vmatpush.bf16.msra.mxu0 %v2775
        %3215 = vmatpush.bf16.msra.mxu0 %v2771
        %3216 = vmatpush.bf16.msra.mxu0 %v2767
        %3217 = vmatpush.bf16.msra.mxu0 %v2763
        %3218 = vmatpush.bf16.msra.mxu0 %v2759
        %3219 = vmatpush.bf16.msra.mxu0 %v2755
        %3220 = vmatpush.bf16.msra.mxu0 %v2751
        %3221 = vmatpush.bf16.msra.mxu0 %v2747
        %3222 = vmatmul.bf16.gmra.mxu0 %v2158
        %v3223 = vpop.f32.mrf.mxu0
        %v3224 = vadd.f32 0.0, %v3223
        %v3225 = vpop.f32.mrf.mxu0
        %v3226 = vadd.f32 0.0, %v3225
        %3227 = vdwg.mxu0
        %3228 = vmatpush.bf16.msra.mxu0 %v2807
        %3229 = vmatpush.bf16.msra.mxu0 %v2803
        %3230 = vmatpush.bf16.msra.mxu0 %v2799
        %3231 = vmatpush.bf16.msra.mxu0 %v2795
        %3232 = vmatpush.bf16.msra.mxu0 %v2791
        %3233 = vmatpush.bf16.msra.mxu0 %v2787
        %3234 = vmatpush.bf16.msra.mxu0 %v2783
        %3235 = vmatpush.bf16.msra.mxu0 %v2779
        %3236 = vmatmul.bf16.gmra.mxu0 %v2159
        %v3237 = vpop.f32.mrf.mxu0
        %v3238 = vadd.f32 %v3224, %v3237
        %v3239 = vpop.f32.mrf.mxu0
        %v3240 = vadd.f32 %v3226, %v3239
        %3241 = vdwg.mxu0
        %3242 = vmatpush.bf16.msra.mxu0 %v2839
        %3243 = vmatpush.bf16.msra.mxu0 %v2835
        %3244 = vmatpush.bf16.msra.mxu0 %v2831
        %3245 = vmatpush.bf16.msra.mxu0 %v2827
        %3246 = vmatpush.bf16.msra.mxu0 %v2823
        %3247 = vmatpush.bf16.msra.mxu0 %v2819
        %3248 = vmatpush.bf16.msra.mxu0 %v2815
        %3249 = vmatpush.bf16.msra.mxu0 %v2811
        %3250 = vmatmul.bf16.gmra.mxu0 %v2160
        %v3251 = vpop.f32.mrf.mxu0
        %v3252 = vadd.f32 %v3238, %v3251
        %v3253 = vpop.f32.mrf.mxu0
        %v3254 = vadd.f32 %v3240, %v3253
        %3255 = vdwg.mxu0
        %3256 = vmatpush.bf16.msra.mxu0 %v2871
        %3257 = vmatpush.bf16.msra.mxu0 %v2867
        %3258 = vmatpush.bf16.msra.mxu0 %v2863
        %3259 = vmatpush.bf16.msra.mxu0 %v2859
        %3260 = vmatpush.bf16.msra.mxu0 %v2855
        %3261 = vmatpush.bf16.msra.mxu0 %v2851
        %3262 = vmatpush.bf16.msra.mxu0 %v2847
        %3263 = vmatpush.bf16.msra.mxu0 %v2843
        %3264 = vmatmul.bf16.gmra.mxu0 %v2161
        %v3265 = vpop.f32.mrf.mxu0
        %v3266 = vadd.f32 %v3252, %v3265
        %v3267 = vpop.f32.mrf.mxu0
        %v3268 = vadd.f32 %v3254, %v3267
        %3269 = vdwg.mxu0
        %3270 = vmatpush.bf16.msra.mxu0 %v2903
        %3271 = vmatpush.bf16.msra.mxu0 %v2899
        %3272 = vmatpush.bf16.msra.mxu0 %v2895
        %3273 = vmatpush.bf16.msra.mxu0 %v2891
        %3274 = vmatpush.bf16.msra.mxu0 %v2887
        %3275 = vmatpush.bf16.msra.mxu0 %v2883
        %3276 = vmatpush.bf16.msra.mxu0 %v2879
        %3277 = vmatpush.bf16.msra.mxu0 %v2875
        %3278 = vmatmul.bf16.gmra.mxu0 %v2162
        %v3279 = vpop.f32.mrf.mxu0
        %v3280 = vadd.f32 %v3266, %v3279
        %v3281 = vpop.f32.mrf.mxu0
        %v3282 = vadd.f32 %v3268, %v3281
        %3283 = vdwg.mxu0
        %3284 = vmatpush.bf16.msra.mxu0 %v2935
        %3285 = vmatpush.bf16.msra.mxu0 %v2931
        %3286 = vmatpush.bf16.msra.mxu0 %v2927
        %3287 = vmatpush.bf16.msra.mxu0 %v2923
        %3288 = vmatpush.bf16.msra.mxu0 %v2919
        %3289 = vmatpush.bf16.msra.mxu0 %v2915
        %3290 = vmatpush.bf16.msra.mxu0 %v2911
        %3291 = vmatpush.bf16.msra.mxu0 %v2907
        %3292 = vmatmul.bf16.gmra.mxu0 %v2163
        %v3293 = vpop.f32.mrf.mxu0
        %v3294 = vadd.f32 %v3280, %v3293
        %v3295 = vpop.f32.mrf.mxu0
        %v3296 = vadd.f32 %v3282, %v3295
        %3297 = vdwg.mxu0
        %3298 = vmatpush.bf16.msra.mxu0 %v2776
        %3299 = vmatpush.bf16.msra.mxu0 %v2772
        %3300 = vmatpush.bf16.msra.mxu0 %v2768
        %3301 = vmatpush.bf16.msra.mxu0 %v2764
        %3302 = vmatpush.bf16.msra.mxu0 %v2760
        %3303 = vmatpush.bf16.msra.mxu0 %v2756
        %3304 = vmatpush.bf16.msra.mxu0 %v2752
        %3305 = vmatpush.bf16.msra.mxu0 %v2748
        %3306 = vmatmul.bf16.gmra.mxu0 %v2158
        %v3307 = vpop.f32.mrf.mxu0
        %v3308 = vadd.f32 0.0, %v3307
        %v3309 = vpop.f32.mrf.mxu0
        %v3310 = vadd.f32 0.0, %v3309
        %3311 = vdwg.mxu0
        %3312 = vmatpush.bf16.msra.mxu0 %v2808
        %3313 = vmatpush.bf16.msra.mxu0 %v2804
        %3314 = vmatpush.bf16.msra.mxu0 %v2800
        %3315 = vmatpush.bf16.msra.mxu0 %v2796
        %3316 = vmatpush.bf16.msra.mxu0 %v2792
        %3317 = vmatpush.bf16.msra.mxu0 %v2788
        %3318 = vmatpush.bf16.msra.mxu0 %v2784
        %3319 = vmatpush.bf16.msra.mxu0 %v2780
        %3320 = vmatmul.bf16.gmra.mxu0 %v2159
        %v3321 = vpop.f32.mrf.mxu0
        %v3322 = vadd.f32 %v3308, %v3321
        %v3323 = vpop.f32.mrf.mxu0
        %v3324 = vadd.f32 %v3310, %v3323
        %3325 = vdwg.mxu0
        %3326 = vmatpush.bf16.msra.mxu0 %v2840
        %3327 = vmatpush.bf16.msra.mxu0 %v2836
        %3328 = vmatpush.bf16.msra.mxu0 %v2832
        %3329 = vmatpush.bf16.msra.mxu0 %v2828
        %3330 = vmatpush.bf16.msra.mxu0 %v2824
        %3331 = vmatpush.bf16.msra.mxu0 %v2820
        %3332 = vmatpush.bf16.msra.mxu0 %v2816
        %3333 = vmatpush.bf16.msra.mxu0 %v2812
        %3334 = vmatmul.bf16.gmra.mxu0 %v2160
        %v3335 = vpop.f32.mrf.mxu0
        %v3336 = vadd.f32 %v3322, %v3335
        %v3337 = vpop.f32.mrf.mxu0
        %v3338 = vadd.f32 %v3324, %v3337
        %3339 = vdwg.mxu0
        %3340 = vmatpush.bf16.msra.mxu0 %v2872
        %3341 = vmatpush.bf16.msra.mxu0 %v2868
        %3342 = vmatpush.bf16.msra.mxu0 %v2864
        %3343 = vmatpush.bf16.msra.mxu0 %v2860
        %3344 = vmatpush.bf16.msra.mxu0 %v2856
        %3345 = vmatpush.bf16.msra.mxu0 %v2852
        %3346 = vmatpush.bf16.msra.mxu0 %v2848
        %3347 = vmatpush.bf16.msra.mxu0 %v2844
        %3348 = vmatmul.bf16.gmra.mxu0 %v2161
        %v3349 = vpop.f32.mrf.mxu0
        %v3350 = vadd.f32 %v3336, %v3349
        %v3351 = vpop.f32.mrf.mxu0
        %v3352 = vadd.f32 %v3338, %v3351
        %3353 = vdwg.mxu0
        %3354 = vmatpush.bf16.msra.mxu0 %v2904
        %3355 = vmatpush.bf16.msra.mxu0 %v2900
        %3356 = vmatpush.bf16.msra.mxu0 %v2896
        %3357 = vmatpush.bf16.msra.mxu0 %v2892
        %3358 = vmatpush.bf16.msra.mxu0 %v2888
        %3359 = vmatpush.bf16.msra.mxu0 %v2884
        %3360 = vmatpush.bf16.msra.mxu0 %v2880
        %3361 = vmatpush.bf16.msra.mxu0 %v2876
        %3362 = vmatmul.bf16.gmra.mxu0 %v2162
        %v3363 = vpop.f32.mrf.mxu0
        %v3364 = vadd.f32 %v3350, %v3363
        %v3365 = vpop.f32.mrf.mxu0
        %v3366 = vadd.f32 %v3352, %v3365
        %3367 = vdwg.mxu0
        %3368 = vmatpush.bf16.msra.mxu0 %v2936
        %3369 = vmatpush.bf16.msra.mxu0 %v2932
        %3370 = vmatpush.bf16.msra.mxu0 %v2928
        %3371 = vmatpush.bf16.msra.mxu0 %v2924
        %3372 = vmatpush.bf16.msra.mxu0 %v2920
        %3373 = vmatpush.bf16.msra.mxu0 %v2916
        %3374 = vmatpush.bf16.msra.mxu0 %v2912
        %3375 = vmatpush.bf16.msra.mxu0 %v2908
        %3376 = vmatmul.bf16.gmra.mxu0 %v2163
        %v3377 = vpop.f32.mrf.mxu0
        %v3378 = vadd.f32 %v3364, %v3377
        %v3379 = vpop.f32.mrf.mxu0
        %v3380 = vadd.f32 %v3366, %v3379
        %3381 = vdwg.mxu0
        %3382 = vmatpush.bf16.msra.mxu0 %v2777
        %3383 = vmatpush.bf16.msra.mxu0 %v2773
        %3384 = vmatpush.bf16.msra.mxu0 %v2769
        %3385 = vmatpush.bf16.msra.mxu0 %v2765
        %3386 = vmatpush.bf16.msra.mxu0 %v2761
        %3387 = vmatpush.bf16.msra.mxu0 %v2757
        %3388 = vmatpush.bf16.msra.mxu0 %v2753
        %3389 = vmatpush.bf16.msra.mxu0 %v2749
        %3390 = vmatmul.bf16.gmra.mxu0 %v2158
        %v3391 = vpop.f32.mrf.mxu0
        %v3392 = vadd.f32 0.0, %v3391
        %v3393 = vpop.f32.mrf.mxu0
        %v3394 = vadd.f32 0.0, %v3393
        %3395 = vdwg.mxu0
        %3396 = vmatpush.bf16.msra.mxu0 %v2809
        %3397 = vmatpush.bf16.msra.mxu0 %v2805
        %3398 = vmatpush.bf16.msra.mxu0 %v2801
        %3399 = vmatpush.bf16.msra.mxu0 %v2797
        %3400 = vmatpush.bf16.msra.mxu0 %v2793
        %3401 = vmatpush.bf16.msra.mxu0 %v2789
        %3402 = vmatpush.bf16.msra.mxu0 %v2785
        %3403 = vmatpush.bf16.msra.mxu0 %v2781
        %3404 = vmatmul.bf16.gmra.mxu0 %v2159
        %v3405 = vpop.f32.mrf.mxu0
        %v3406 = vadd.f32 %v3392, %v3405
        %v3407 = vpop.f32.mrf.mxu0
        %v3408 = vadd.f32 %v3394, %v3407
        %3409 = vdwg.mxu0
        %3410 = vmatpush.bf16.msra.mxu0 %v2841
        %3411 = vmatpush.bf16.msra.mxu0 %v2837
        %3412 = vmatpush.bf16.msra.mxu0 %v2833
        %3413 = vmatpush.bf16.msra.mxu0 %v2829
        %3414 = vmatpush.bf16.msra.mxu0 %v2825
        %3415 = vmatpush.bf16.msra.mxu0 %v2821
        %3416 = vmatpush.bf16.msra.mxu0 %v2817
        %3417 = vmatpush.bf16.msra.mxu0 %v2813
        %3418 = vmatmul.bf16.gmra.mxu0 %v2160
        %v3419 = vpop.f32.mrf.mxu0
        %v3420 = vadd.f32 %v3406, %v3419
        %v3421 = vpop.f32.mrf.mxu0
        %v3422 = vadd.f32 %v3408, %v3421
        %3423 = vdwg.mxu0
        %3424 = vmatpush.bf16.msra.mxu0 %v2873
        %3425 = vmatpush.bf16.msra.mxu0 %v2869
        %3426 = vmatpush.bf16.msra.mxu0 %v2865
        %3427 = vmatpush.bf16.msra.mxu0 %v2861
        %3428 = vmatpush.bf16.msra.mxu0 %v2857
        %3429 = vmatpush.bf16.msra.mxu0 %v2853
        %3430 = vmatpush.bf16.msra.mxu0 %v2849
        %3431 = vmatpush.bf16.msra.mxu0 %v2845
        %3432 = vmatmul.bf16.gmra.mxu0 %v2161
        %v3433 = vpop.f32.mrf.mxu0
        %v3434 = vadd.f32 %v3420, %v3433
        %v3435 = vpop.f32.mrf.mxu0
        %v3436 = vadd.f32 %v3422, %v3435
        %3437 = vdwg.mxu0
        %3438 = vmatpush.bf16.msra.mxu0 %v2905
        %3439 = vmatpush.bf16.msra.mxu0 %v2901
        %3440 = vmatpush.bf16.msra.mxu0 %v2897
        %3441 = vmatpush.bf16.msra.mxu0 %v2893
        %3442 = vmatpush.bf16.msra.mxu0 %v2889
        %3443 = vmatpush.bf16.msra.mxu0 %v2885
        %3444 = vmatpush.bf16.msra.mxu0 %v2881
        %3445 = vmatpush.bf16.msra.mxu0 %v2877
        %3446 = vmatmul.bf16.gmra.mxu0 %v2162
        %v3447 = vpop.f32.mrf.mxu0
        %v3448 = vadd.f32 %v3434, %v3447
        %v3449 = vpop.f32.mrf.mxu0
        %v3450 = vadd.f32 %v3436, %v3449
        %3451 = vdwg.mxu0
        %3452 = vmatpush.bf16.msra.mxu0 %v2937
        %3453 = vmatpush.bf16.msra.mxu0 %v2933
        %3454 = vmatpush.bf16.msra.mxu0 %v2929
        %3455 = vmatpush.bf16.msra.mxu0 %v2925
        %3456 = vmatpush.bf16.msra.mxu0 %v2921
        %3457 = vmatpush.bf16.msra.mxu0 %v2917
        %3458 = vmatpush.bf16.msra.mxu0 %v2913
        %3459 = vmatpush.bf16.msra.mxu0 %v2909
        %3460 = vmatmul.bf16.gmra.mxu0 %v2163
        %v3461 = vpop.f32.mrf.mxu0
        %v3462 = vadd.f32 %v3448, %v3461
        %v3463 = vpop.f32.mrf.mxu0
        %v3464 = vadd.f32 %v3450, %v3463
        %3465 = vdwg.mxu0
        %v3466 = vld [vmem:[%s5] sm:$0xff]
        %v3467 = vld [vmem:[%s5 + $0x8] sm:$0xf]
        %s3468 = scalar_lea.vmem %s5, 16
        %v3469 = vld [vmem:[%s3468] sm:$0xff]
        %v3470 = vld [vmem:[%s3468 + $0x8] sm:$0xf]
        %vm3471 = vcmask 130048
        %v3473 = vsel %vm3471, %v3469, 0
        %v3476 = vsel %vm3471, %v3470, 0
        %3478 = vmatpush.msra.mxu0 0.0
        %3479 = vmatpush.msra.mxu0 0.0
        %3480 = vmatpush.msra.mxu0 0.0
        %3481 = vmatpush.msra.mxu0 0.0
        %3482 = vmatpush.msra.mxu0 0.0
        %3483 = vmatpush.msra.mxu0 0.0
        %3484 = vmatpush.msra.mxu0 0.0
        %3485 = vmatpush.msra.mxu0 0.0
        %3486 = vmatpush.msra.mxu0 0.0
        %3487 = vmatpush.msra.mxu0 0.0
        %3488 = vmatpush.msra.mxu0 0.0
        %3489 = vmatpush.msra.mxu0 0.0
        %3490 = vmatpush.msra.mxu0 0.0
        %3491 = vmatpush.msra.mxu0 0.0
        %3492 = vmatpush.msra.mxu0 %v3296
        %3493 = vmatpush.msra.mxu0 %v3294
        %3494 = vmatmul.f32.gmra.mxu0 %v3473
        %v3495 = vpop.f32.mrf.mxu0
        %v3496 = vadd.f32 0.0, %v3495
        %3497 = vmatmul.f32.gmra.mxu0 %v3476
        %v3498 = vpop.f32.mrf.mxu0
        %v3499 = vadd.f32 0.0, %v3498
        %3500 = vdwg.mxu0
        %v3502 = vsel %vm3471, %v3466, 0
        %v3505 = vsel %vm3471, %v3467, 0
        %3507 = vmatpush.msra.mxu0 0.0
        %3508 = vmatpush.msra.mxu0 0.0
        %3509 = vmatpush.msra.mxu0 0.0
        %3510 = vmatpush.msra.mxu0 0.0
        %3511 = vmatpush.msra.mxu0 0.0
        %3512 = vmatpush.msra.mxu0 0.0
        %3513 = vmatpush.msra.mxu0 0.0
        %3514 = vmatpush.msra.mxu0 0.0
        %3515 = vmatpush.msra.mxu0 0.0
        %3516 = vmatpush.msra.mxu0 0.0
        %3517 = vmatpush.msra.mxu0 0.0
        %3518 = vmatpush.msra.mxu0 0.0
        %3519 = vmatpush.msra.mxu0 0.0
        %3520 = vmatpush.msra.mxu0 0.0
        %3521 = vmatpush.msra.mxu0 %v3212
        %3522 = vmatpush.msra.mxu0 %v3210
        %3523 = vmatmul.f32.gmra.mxu0 %v3502
        %v3524 = vpop.f32.mrf.mxu0
        %v3525 = vadd.f32 %v3496, %v3524
        %3526 = vmatmul.f32.gmra.mxu0 %v3505
        %v3527 = vpop.f32.mrf.mxu0
        %v3528 = vadd.f32 %v3499, %v3527
        %3529 = vdwg.mxu0
        %s3530 = scalar_lea.vmem %s5, 32
        %v3531 = vld [vmem:[%s3530] sm:$0xff]
        %v3532 = vld [vmem:[%s3530 + $0x8] sm:$0xf]
        %v3534 = vsel %vm3471, %v3531, 0
        %v3537 = vsel %vm3471, %v3532, 0
        %3539 = vmatpush.msra.mxu0 0.0
        %3540 = vmatpush.msra.mxu0 0.0
        %3541 = vmatpush.msra.mxu0 0.0
        %3542 = vmatpush.msra.mxu0 0.0
        %3543 = vmatpush.msra.mxu0 0.0
        %3544 = vmatpush.msra.mxu0 0.0
        %3545 = vmatpush.msra.mxu0 0.0
        %3546 = vmatpush.msra.mxu0 0.0
        %3547 = vmatpush.msra.mxu0 0.0
        %3548 = vmatpush.msra.mxu0 0.0
        %3549 = vmatpush.msra.mxu0 0.0
        %3550 = vmatpush.msra.mxu0 0.0
        %3551 = vmatpush.msra.mxu0 0.0
        %3552 = vmatpush.msra.mxu0 0.0
        %3553 = vmatpush.msra.mxu0 %v3380
        %3554 = vmatpush.msra.mxu0 %v3378
        %3555 = vmatmul.f32.gmra.mxu0 %v3534
        %v3556 = vpop.f32.mrf.mxu0
        %v3557 = vadd.f32 0.0, %v3556
        %3558 = vmatmul.f32.gmra.mxu0 %v3537
        %v3559 = vpop.f32.mrf.mxu0
        %v3560 = vadd.f32 0.0, %v3559
        %3561 = vdwg.mxu0
        %v3562 = vadd.f32 %v3525, %v3557
        %v3563 = vadd.f32 %v3528, %v3560
        %s3564 = scalar_lea.vmem %s5, 48
        %v3565 = vld [vmem:[%s3564] sm:$0xff]
        %v3566 = vld [vmem:[%s3564 + $0x8] sm:$0xf]
        %v3568 = vsel %vm3471, %v3565, 0
        %v3571 = vsel %vm3471, %v3566, 0
        %3573 = vmatpush.msra.mxu0 0.0
        %3574 = vmatpush.msra.mxu0 0.0
        %3575 = vmatpush.msra.mxu0 0.0
        %3576 = vmatpush.msra.mxu0 0.0
        %3577 = vmatpush.msra.mxu0 0.0
        %3578 = vmatpush.msra.mxu0 0.0
        %3579 = vmatpush.msra.mxu0 0.0
        %3580 = vmatpush.msra.mxu0 0.0
        %3581 = vmatpush.msra.mxu0 0.0
        %3582 = vmatpush.msra.mxu0 0.0
        %3583 = vmatpush.msra.mxu0 0.0
        %3584 = vmatpush.msra.mxu0 0.0
        %3585 = vmatpush.msra.mxu0 0.0
        %3586 = vmatpush.msra.mxu0 0.0
        %3587 = vmatpush.msra.mxu0 %v3464
        %3588 = vmatpush.msra.mxu0 %v3462
        %3589 = vmatmul.f32.gmra.mxu0 %v3568
        %v3590 = vpop.f32.mrf.mxu0
        %v3591 = vadd.f32 0.0, %v3590
        %3592 = vmatmul.f32.gmra.mxu0 %v3571
        %v3593 = vpop.f32.mrf.mxu0
        %v3594 = vadd.f32 0.0, %v3593
        %3595 = vdwg.mxu0
        %v3596 = vadd.f32 %v3562, %v3591
        %v3597 = vadd.f32 %v3563, %v3594
        %v3598 = vld [vmem:[%s4] sm:$0xff]
        %v3599 = vld [vmem:[%s4 + $0x8] sm:$0xf]
        %v3600 = vmul.f32 %v3596, %v3598
        %v3601 = vmul.f32 %v3597, %v3599
        %3602 = vst [vmem:[%s285] sm:$0xff] %v3600
        %3603 = vst [vmem:[%s285 + $0x8] sm:$0xf] %v3601
        %p3604 = scmp.lt.s32.totalorder %s19, 1
        %s3605 = scalar_select %p3604, %s19, 1
        %s3606 = smul.addr %s3605, 2
        %s3607 = smul.addr %s3606, 8
        %s3608 = scalar_lea.vmem %s6, %s3607
        // Predicated region
        $region53: #{tpu_custom_call.1} parent=43 // pred_check
          %p3609 = pneg %p168
        $region54: #{tpu_custom_call.1} parent=43 // pred_check_branch
          %3611 = sbr.rel (%p3609) target = $region56
        $region55: #{tpu_custom_call.1} parent=43 // pred_region
          _
        $region56: #{tpu_custom_call.1} parent=43 // pred_fallthru
          _
      $region44: #{tpu_custom_call.1} parent=5 // pred_fallthru
        _
      %p3612 = scmp.le.s32.totalorder 2, %s14
      // Predicated region
      $region57: #{tpu_custom_call.1} parent=5 // pred_check
        %p3613 = pneg %p3612
      $region58: #{tpu_custom_call.1} parent=5 // pred_check_branch
        %3615 = sbr.rel (%p3613) target = $region60
      $region59: #{tpu_custom_call.1} parent=5 // pred_region
        %s3616 = ssub.s32 %s14, 2
        // Predicated region
        $region61: #{tpu_custom_call.1} parent=59 // pred_check
          %p3617 = pneg %p174
        $region62: #{tpu_custom_call.1} parent=59 // pred_check_branch
          %3619 = sbr.rel (%p3617) target = $region64
        $region63: #{tpu_custom_call.1} parent=59 // pred_region
          %p3620 = scmp.lt.s32.totalorder %s20, 1
          %s3621 = scalar_select %p3620, %s20, 1
          %s3622 = smul.addr %s3621, 2
          %s3623 = smul.addr %s3622, 8
          %s3624 = scalar_lea.vmem %s6, %s3623
        $region64: #{tpu_custom_call.1} parent=59 // pred_fallthru
          _
      $region60: #{tpu_custom_call.1} parent=5 // pred_fallthru
        _
    $region6: #{tpu_custom_call.1} parent=1 // loop_footer
      %s18 = sadd.s32 1, %s14
    $region7: #{tpu_custom_call.1} parent=1 // loop_footer_branch
      %13 = sbr.rel target = $region3
    $region8: #{tpu_custom_call.1} parent=1 // loop_exit
      _
    %3625 = vsyncpa [#allocation4], 1
    %s3626 = scalar_lea.sflag [#allocation4], 1
    %3627 = vsyncpa %s3626, 1
    %3628 = vsyncpa [#allocation6], 1

</llo_original>
